<compile_context>
chip_gen: v5e
topology: v5e:2x2
jax: 0.10.0
libtpu: 0.0.40
codegen_flags: <defaults>
</compile_context>

<pallas_src>
import functools

import jax
import jax.numpy as jnp
from jax.experimental import pallas as pl
from jax.experimental.pallas import tpu as pltpu

LANE = 128
MAX_TILE_N = 128


def _round_up(x, m):
    return (x + m - 1) // m * m


def _choose_tiling(n):
    """tile_n % 8 == 0, tile_n <= MAX_TILE_N, and the grid has >= 2 steps (v7x: 2 TensorCores)."""
    tile = min(MAX_TILE_N, max(8, _round_up((n + 1) // 2, 8)))
    n_pad = _round_up(n, tile)
    if n_pad // tile < 2:
        n_pad = 2 * tile
    return tile, n_pad


# ------------------------------ fused kernel --------------------------------

def _simple_net_kernel(x_ref, wc_ref, cb_ref, whp_ref, hb_ref, wo_ref, ob_ref,
                       *out_refs, H, KH, want_feature):
    """Fused SimpleNet forward for one batch tile.

    x_ref   : [TN, H+KH-1, (W+KW-1)*C_in_pad] bf16  zero-padded, channel-folded input tile
    wc_ref  : [KH, (W+KW-1)*C_in_pad, W*C_out] bf16 banded conv weights (one slab per kernel row)
    cb_ref  : [1, W*C_out]   f32                    conv bias, tiled along x
    whp_ref : [W*C_out, F_PAD] bf16                 head weight with 1/(H*W) pool scale folded in
    hb_ref  : [1, F_PAD]     f32                    head bias (zero-padded)
    wo_ref  : [F_PAD, F_PAD] bf16                   classifier weight (zero-padded rows/cols)
    ob_ref  : [1, F_PAD]     f32                    classifier bias (zero-padded)
    out_refs: y [TN, F_PAD] f32  (+ optional f [TN, F_PAD] f32 when want_feature)
    """
    tn = x_ref.shape[0]
    kc = x_ref.shape[2]            # (W+KW-1) * C_in_pad
    f_pad = whp_ref.shape[1]
    m = tn * H

    # --- conv: KH row-shifted full-depth matmuls against banded weights.  MXU f32 accumulation,
    #     no VMEM read-modify-write accumulator.  Output layout [(n,y), (x,o)] is lane-dense. ---
    acc = None
    for i in range(KH):                                         # static, unrolled
        r = x_ref[:, i:i + H, :].reshape(m, kc)                 # [TN*H, 144] bf16
        d = jnp.dot(r, wc_ref[i], preferred_element_type=jnp.float32)
        acc = d if acc is None else acc + d                     # [TN*H, W*C_out] f32

    act = jnp.maximum(acc + cb_ref[...], 0.0)                   # bias + ReLU, lane-dense f32

    # --- head fused with global average pool: 1/(H*W) is folded into whp, so the matmul sums
    #     over (x, o) and the small reduction below sums over the H rows of each sample. ---
    part = jnp.dot(act.astype(jnp.bfloat16), whp_ref[...],
                   preferred_element_type=jnp.float32)          # [TN*H, F_PAD]
    f = part.reshape(tn, H, f_pad).sum(axis=1) + hb_ref[...]    # [TN, F_PAD]
    f = jnp.maximum(f, 0.0)

    # --- classifier (lane-padded to 128 columns; padded rows/cols are zero) ---
    out_refs[0][...] = jnp.dot(f.astype(jnp.bfloat16), wo_ref[...],
                               preferred_element_type=jnp.float32) + ob_ref[...]
    if want_feature:
        out_refs[1][...] = f


def _fused_forward(xp, wc, cb, whp, hb, wo, ob, *, tile_n, H, KH, want_feature):
    n_pad, hp, kc = xp.shape
    kh, _, nxo = wc.shape
    f_pad = whp.shape[1]
    grid = (n_pad // tile_n,)

    kernel = functools.partial(_simple_net_kernel, H=H, KH=KH, want_feature=want_feature)

    n_out = 2 if want_feature else 1
    out_shape = tuple(jax.ShapeDtypeStruct((n_pad, f_pad), jnp.float32) for _ in range(n_out))
    out_specs = tuple(pl.BlockSpec((tile_n, f_pad), lambda n: (n, 0)) for _ in range(n_out))

    flops = int(n_pad * (2 * H * kc * nxo * KH + 2 * H * nxo * f_pad + 2 * f_pad * f_pad))
    bytes_accessed = int(xp.size * 2 + (wc.size + whp.size + wo.size) * 2
                         + (cb.size + hb.size + ob.size) * 4 + n_out * n_pad * f_pad * 4)

    return pl.pallas_call(
        kernel,
        out_shape=out_shape,
        grid_spec=pltpu.PrefetchScalarGridSpec(
            num_scalar_prefetch=0,
            grid=grid,
            in_specs=[
                pl.BlockSpec((tile_n, hp, kc), lambda n: (n, 0, 0)),
                # weights / biases: constant index maps -> VMEM-resident across the grid
                pl.BlockSpec((kh, kc, nxo), lambda n: (0, 0, 0)),
                pl.BlockSpec((1, nxo), lambda n: (0, 0)),
                pl.BlockSpec((nxo, f_pad), lambda n: (0, 0)),
                pl.BlockSpec((1, f_pad), lambda n: (0, 0)),
                pl.BlockSpec((f_pad, f_pad), lambda n: (0, 0)),
                pl.BlockSpec((1, f_pad), lambda n: (0, 0)),
            ],
            out_specs=out_specs,
        ),
        compiler_params=pltpu.CompilerParams(
            dimension_semantics=("parallel",),        # shard batch tiles across v7x's 2 TCs
            vmem_limit_bytes=40 * 1024 * 1024,
        ),
        cost_estimate=pl.CostEstimate(flops=flops, transcendentals=0,
                                      bytes_accessed=bytes_accessed),
    )(xp, wc, cb, whp, hb, wo, ob)


# ------------------------------- JAX wrapper ---------------------------------

def _prep_params(params, H, W):
    """PyTorch-layout params -> kernel layout (banded bf16 conv weights, lane-padded heads)."""
    conv_w = params["conv_w"]                       # [C_out, C_in, KH, KW]
    c_out, c_in, kh, kw = conv_w.shape
    head_w = params["head_w"]                       # [hidden, C_out]
    cls_w = params["cls_w"]                         # [num_classes, hidden]
    hidden = head_w.shape[0]
    num_classes = cls_w.shape[0]
    c_in_pad = _round_up(c_in, 8)
    f_pad = _round_up(max(hidden, num_classes, LANE), LANE)
    wf = W + kw - 1
    nxo = W * c_out

    # Banded conv weights: wc[i, (x+j)*c_in_pad + c, x*c_out + o] = conv_w[o, c, i, j]
    eye = jnp.eye(W, dtype=jnp.float32)
    wc_rows = []
    for i in range(kh):
        wi = jnp.zeros((wf * c_in_pad, nxo), jnp.float32)
        for j in range(kw):
            blk = jnp.pad(conv_w[:, :, i, j].T, ((0, c_in_pad - c_in), (0, 0)))  # [c_in_pad, c_out]
            band = jnp.kron(eye, blk)                                            # [W*c_in_pad, W*c_out]
            wi = wi + jnp.pad(band, ((j * c_in_pad, (kw - 1 - j) * c_in_pad), (0, 0)))
        wc_rows.append(wi)
    wc = jnp.stack(wc_rows).astype(jnp.bfloat16)    # [KH, wf*c_in_pad, W*c_out]

    cb = jnp.tile(params["conv_b"], W).reshape(1, nxo).astype(jnp.float32)

    # Head weight, x-tiled, with the 1/(H*W) global-average-pool scale folded in.
    whp = jnp.tile(head_w.T / float(H * W), (W, 1))                     # [W*c_out, hidden]
    whp = jnp.pad(whp, ((0, 0), (0, f_pad - hidden))).astype(jnp.bfloat16)
    hb = jnp.pad(params["head_b"], (0, f_pad - hidden)).reshape(1, f_pad).astype(jnp.float32)

    wo = jnp.pad(cls_w.T, ((0, f_pad - hidden), (0, f_pad - num_classes))).astype(jnp.bfloat16)
    ob = jnp.pad(params["cls_b"], (0, f_pad - num_classes)).reshape(1, f_pad).astype(jnp.float32)
    return (wc, cb, whp, hb, wo, ob), (kh, kw, c_in_pad, hidden, num_classes)


@functools.partial(jax.jit, static_argnames=("return_feature",))
def simple_net_forward(x_nchw, params, return_feature=False):
    """Forward pass matching SimpleNet.forward(x, return_feature)."""
    x = jnp.transpose(x_nchw, (0, 2, 3, 1))         # NCHW -> NHWC
    n, h, w, c = x.shape
    (wc, cb, whp, hb, wo, ob), (kh, kw, c_in_pad, hidden, num_classes) = _prep_params(params, h, w)

    tile_n, n_pad = _choose_tiling(n)

    # 'same' spatial zero-pad + channel pad (zeros) + batch pad; fold channel into the minor dim
    # so the VMEM input block is lane-dense: [N, H+KH-1, (W+KW-1)*C_in_pad] bf16.
    xp = jnp.pad(x, ((0, n_pad - n), (kh // 2, kh // 2), (kw // 2, kw // 2), (0, c_in_pad - c)))
    xp = xp.reshape(n_pad, h + kh - 1, (w + kw - 1) * c_in_pad).astype(jnp.bfloat16)

    out = _fused_forward(xp, wc, cb, whp, hb, wo, ob,
                         tile_n=tile_n, H=h, KH=kh, want_feature=return_feature)
    y = out[0][:n, :num_classes]
    if return_feature:
        return y, out[1][:n, :hidden]
    return y


# --------------------------- deterministic params ---------------------------

def init_params(c_in=4, c_backbone=32, hidden=64, num_classes=10, kh=3, kw=3):
    key = jax.random.PRNGKey(0)
    k1, k2, k3 = jax.random.split(key, 3)
    fan_conv = c_in * kh * kw
    conv_w = jax.random.normal(k1, (c_backbone, c_in, kh, kw), jnp.float32) * (2.0 / fan_conv) ** 0.5
    conv_b = jnp.zeros((c_backbone,), jnp.float32)
    head_w = jax.random.normal(k2, (hidden, c_backbone), jnp.float32) * (2.0 / c_backbone) ** 0.5
    head_b = jnp.zeros((hidden,), jnp.float32)
    cls_w = jax.random.normal(k3, (num_classes, hidden), jnp.float32) * (1.0 / hidden) ** 0.5
    cls_b = jnp.zeros((num_classes,), jnp.float32)
    return dict(conv_w=conv_w, conv_b=conv_b, head_w=head_w, head_b=head_b,
                cls_w=cls_w, cls_b=cls_b)


# ----------------------------- pure-JAX reference ----------------------------

def _reference_forward(x_nchw, params):
    y = jax.lax.conv_general_dilated(
        x_nchw, params["conv_w"], window_strides=(1, 1), padding="SAME",
        dimension_numbers=("NCHW", "OIHW", "NCHW"))
    y = jax.nn.relu(y + params["conv_b"][None, :, None, None])
    f0 = jnp.mean(y, axis=(2, 3))                                   # global avg pool
    f = jax.nn.relu(f0 @ params["head_w"].T + params["head_b"])     # head
    logits = f @ params["cls_w"].T + params["cls_b"]                # classifier
    return logits, f


# ---------------------------------- main -------------------------------------

if __name__ == "__main__":
    params = init_params()
    x = jax.random.normal(jax.random.PRNGKey(0), (2, 4, 16, 16), jnp.float32)   # NCHW

    y, f = simple_net_forward(x, params, return_feature=True)
    jax.block_until_ready((y, f))
    assert y.shape == (2, 10) and f.shape == (2, 64)

    y_only = simple_net_forward(x, params, return_feature=False)    # inference path (no f writeback)
    jax.block_until_ready(y_only)
    assert y_only.shape == (2, 10)

    # correctness check vs f32 reference (kernel uses bf16 MXU feed -> loose tolerance)
    y_exp, f_exp = _reference_forward(x, params)
    assert jnp.allclose(y, y_exp, atol=5e-2, rtol=5e-2), float(jnp.max(jnp.abs(y - y_exp)))
    assert jnp.allclose(f, f_exp, atol=5e-2, rtol=5e-2), float(jnp.max(jnp.abs(f - f_exp)))
    assert jnp.allclose(y_only, y_exp, atol=5e-2, rtol=5e-2)

    print("KERNEL_OK")
</pallas_src>

<mosaic_0001>
module attributes {stable_mosaic.version = 11 : i64} {
  func.func @_simple_net_kernel(%arg0: i32, %arg1: memref<8x18x144xbf16, #tpu.memory_space<vmem>>, %arg2: memref<3x144x512xbf16, #tpu.memory_space<vmem>>, %arg3: memref<1x512xf32, #tpu.memory_space<vmem>>, %arg4: memref<512x128xbf16, #tpu.memory_space<vmem>>, %arg5: memref<1x128xf32, #tpu.memory_space<vmem>>, %arg6: memref<128x128xbf16, #tpu.memory_space<vmem>>, %arg7: memref<1x128xf32, #tpu.memory_space<vmem>>, %arg8: memref<8x128xf32, #tpu.memory_space<vmem>>, %arg9: memref<8x128xf32, #tpu.memory_space<vmem>>) attributes {dimension_semantics = [#tpu.dimension_semantics<parallel>], iteration_bounds = array<i64: 2>, scalar_prefetch = 0 : i64, scratch_operands = 0 : i64, tpu.core_type = #tpu.core_type<tc>, window_params = [{transform_indices = @transform_0, window_bounds = array<i64: 8, 18, 144>}, {pipeline_mode = #tpu.pipeline_mode<synchronous>, transform_indices = @transform_1, window_bounds = array<i64: 3, 144, 512>}, {pipeline_mode = #tpu.pipeline_mode<synchronous>, transform_indices = @transform_2, window_bounds = array<i64: 1, 512>}, {pipeline_mode = #tpu.pipeline_mode<synchronous>, transform_indices = @transform_3, window_bounds = array<i64: 512, 128>}, {pipeline_mode = #tpu.pipeline_mode<synchronous>, transform_indices = @transform_4, window_bounds = array<i64: 1, 128>}, {pipeline_mode = #tpu.pipeline_mode<synchronous>, transform_indices = @transform_5, window_bounds = array<i64: 128, 128>}, {pipeline_mode = #tpu.pipeline_mode<synchronous>, transform_indices = @transform_6, window_bounds = array<i64: 1, 128>}, {transform_indices = @transform_7, window_bounds = array<i64: 8, 128>}, {transform_indices = @transform_8, window_bounds = array<i64: 8, 128>}]} {
    %c0 = arith.constant 0 : index
    %c0_0 = arith.constant 0 : index
    %c0_1 = arith.constant 0 : index
    %0 = vector.load %arg1[%c0, %c0_0, %c0_1] : memref<8x18x144xbf16, #tpu.memory_space<vmem>>, vector<8x16x144xbf16>
    %1 = vector.shape_cast %0 : vector<8x16x144xbf16> to vector<128x144xbf16>
    %c0_2 = arith.constant 0 : index
    %c0_3 = arith.constant 0 : index
    %c0_4 = arith.constant 0 : index
    %2 = vector.load %arg2[%c0_2, %c0_3, %c0_4] : memref<3x144x512xbf16, #tpu.memory_space<vmem>>, vector<1x144x512xbf16>
    %3 = vector.shape_cast %2 : vector<1x144x512xbf16> to vector<144x512xbf16>
    %cst = arith.constant dense<0.000000e+00> : vector<128x512xf32>
    %4 = tpu.matmul %1, %3, %cst {dimension_numbers = #tpu.dot_dimension_numbers<[1], [0], [0], [1], [0, 0, 1, 1], [], []>} : vector<128x144xbf16>, vector<144x512xbf16>, vector<128x512xf32> -> vector<128x512xf32>
    %c0_5 = arith.constant 0 : index
    %c1 = arith.constant 1 : index
    %c0_6 = arith.constant 0 : index
    %5 = vector.load %arg1[%c0_5, %c1, %c0_6] : memref<8x18x144xbf16, #tpu.memory_space<vmem>>, vector<8x16x144xbf16>
    %6 = vector.shape_cast %5 : vector<8x16x144xbf16> to vector<128x144xbf16>
    %c1_7 = arith.constant 1 : index
    %c0_8 = arith.constant 0 : index
    %c0_9 = arith.constant 0 : index
    %7 = vector.load %arg2[%c1_7, %c0_8, %c0_9] : memref<3x144x512xbf16, #tpu.memory_space<vmem>>, vector<1x144x512xbf16>
    %8 = vector.shape_cast %7 : vector<1x144x512xbf16> to vector<144x512xbf16>
    %cst_10 = arith.constant dense<0.000000e+00> : vector<128x512xf32>
    %9 = tpu.matmul %6, %8, %cst_10 {dimension_numbers = #tpu.dot_dimension_numbers<[1], [0], [0], [1], [0, 0, 1, 1], [], []>} : vector<128x144xbf16>, vector<144x512xbf16>, vector<128x512xf32> -> vector<128x512xf32>
    %10 = arith.addf %4, %9 : vector<128x512xf32>
    %c0_11 = arith.constant 0 : index
    %c2 = arith.constant 2 : index
    %c0_12 = arith.constant 0 : index
    %11 = vector.load %arg1[%c0_11, %c2, %c0_12] : memref<8x18x144xbf16, #tpu.memory_space<vmem>>, vector<8x16x144xbf16>
    %12 = vector.shape_cast %11 : vector<8x16x144xbf16> to vector<128x144xbf16>
    %c2_13 = arith.constant 2 : index
    %c0_14 = arith.constant 0 : index
    %c0_15 = arith.constant 0 : index
    %13 = vector.load %arg2[%c2_13, %c0_14, %c0_15] : memref<3x144x512xbf16, #tpu.memory_space<vmem>>, vector<1x144x512xbf16>
    %14 = vector.shape_cast %13 : vector<1x144x512xbf16> to vector<144x512xbf16>
    %cst_16 = arith.constant dense<0.000000e+00> : vector<128x512xf32>
    %15 = tpu.matmul %12, %14, %cst_16 {dimension_numbers = #tpu.dot_dimension_numbers<[1], [0], [0], [1], [0, 0, 1, 1], [], []>} : vector<128x144xbf16>, vector<144x512xbf16>, vector<128x512xf32> -> vector<128x512xf32>
    %16 = arith.addf %10, %15 : vector<128x512xf32>
    %c0_17 = arith.constant 0 : index
    %c0_18 = arith.constant 0 : index
    %17 = vector.load %arg3[%c0_17, %c0_18] : memref<1x512xf32, #tpu.memory_space<vmem>>, vector<1x512xf32>
    %18 = vector.broadcast %17 : vector<1x512xf32> to vector<128x512xf32>
    %19 = arith.addf %16, %18 : vector<128x512xf32>
    %cst_19 = arith.constant 0.000000e+00 : f32
    %20 = vector.broadcast %cst_19 : f32 to vector<128x512xf32>
    %21 = arith.maximumf %19, %20 : vector<128x512xf32>
    %22 = arith.truncf %21 : vector<128x512xf32> to vector<128x512xbf16>
    %c0_20 = arith.constant 0 : index
    %c0_21 = arith.constant 0 : index
    %23 = vector.load %arg4[%c0_20, %c0_21] : memref<512x128xbf16, #tpu.memory_space<vmem>>, vector<512x128xbf16>
    %cst_22 = arith.constant dense<0.000000e+00> : vector<128x128xf32>
    %24 = tpu.matmul %22, %23, %cst_22 {dimension_numbers = #tpu.dot_dimension_numbers<[1], [0], [0], [1], [0, 0, 1, 1], [], []>} : vector<128x512xbf16>, vector<512x128xbf16>, vector<128x128xf32> -> vector<128x128xf32>
    %25 = vector.shape_cast %24 : vector<128x128xf32> to vector<8x16x128xf32>
    %cst_23 = arith.constant dense<0.000000e+00> : vector<8x128xf32>
    %26 = vector.multi_reduction <add>, %25, %cst_23 [1] : vector<8x16x128xf32> to vector<8x128xf32>
    %c0_24 = arith.constant 0 : index
    %c0_25 = arith.constant 0 : index
    %27 = vector.load %arg5[%c0_24, %c0_25] : memref<1x128xf32, #tpu.memory_space<vmem>>, vector<1x128xf32>
    %28 = vector.broadcast %27 : vector<1x128xf32> to vector<8x128xf32>
    %29 = arith.addf %26, %28 : vector<8x128xf32>
    %cst_26 = arith.constant 0.000000e+00 : f32
    %30 = vector.broadcast %cst_26 : f32 to vector<8x128xf32>
    %31 = arith.maximumf %29, %30 : vector<8x128xf32>
    %32 = arith.truncf %31 : vector<8x128xf32> to vector<8x128xbf16>
    %c0_27 = arith.constant 0 : index
    %c0_28 = arith.constant 0 : index
    %33 = vector.load %arg6[%c0_27, %c0_28] : memref<128x128xbf16, #tpu.memory_space<vmem>>, vector<128x128xbf16>
    %cst_29 = arith.constant dense<0.000000e+00> : vector<8x128xf32>
    %34 = tpu.matmul %32, %33, %cst_29 {dimension_numbers = #tpu.dot_dimension_numbers<[1], [0], [0], [1], [0, 0, 1, 1], [], []>} : vector<8x128xbf16>, vector<128x128xbf16>, vector<8x128xf32> -> vector<8x128xf32>
    %c0_30 = arith.constant 0 : index
    %c0_31 = arith.constant 0 : index
    %35 = vector.load %arg7[%c0_30, %c0_31] : memref<1x128xf32, #tpu.memory_space<vmem>>, vector<1x128xf32>
    %36 = vector.broadcast %35 : vector<1x128xf32> to vector<8x128xf32>
    %37 = arith.addf %34, %36 : vector<8x128xf32>
    %c0_32 = arith.constant 0 : index
    %c0_33 = arith.constant 0 : index
    %38 = vector.load %arg8[%c0_32, %c0_33] : memref<8x128xf32, #tpu.memory_space<vmem>>, vector<8x128xf32>
    tpu.vector_store %arg8[%c0_32, %c0_33], %37 {strides = array<i32>} : memref<8x128xf32, #tpu.memory_space<vmem>>, vector<8x128xf32>,
    %c0_34 = arith.constant 0 : index
    %c0_35 = arith.constant 0 : index
    %39 = vector.load %arg9[%c0_34, %c0_35] : memref<8x128xf32, #tpu.memory_space<vmem>>, vector<8x128xf32>
    tpu.vector_store %arg9[%c0_34, %c0_35], %31 {strides = array<i32>} : memref<8x128xf32, #tpu.memory_space<vmem>>, vector<8x128xf32>,
    return
  }
  func.func @transform_0(%arg0: i32) -> (i32, i32, i32) {
    %c0_i32 = arith.constant 0 : i32
    %c0_i32_0 = arith.constant 0 : i32
    %c0_i32_1 = arith.constant 0 : i32
    return %arg0, %c0_i32, %c0_i32_0 : i32, i32, i32
  }
  func.func @transform_1(%arg0: i32) -> (i32, i32, i32) {
    %c0_i32 = arith.constant 0 : i32
    %c0_i32_0 = arith.constant 0 : i32
    %c0_i32_1 = arith.constant 0 : i32
    %c0_i32_2 = arith.constant 0 : i32
    return %c0_i32, %c0_i32_0, %c0_i32_1 : i32, i32, i32
  }
  func.func @transform_2(%arg0: i32) -> (i32, i32) {
    %c0_i32 = arith.constant 0 : i32
    %c0_i32_0 = arith.constant 0 : i32
    %c0_i32_1 = arith.constant 0 : i32
    return %c0_i32, %c0_i32_0 : i32, i32
  }
  func.func @transform_3(%arg0: i32) -> (i32, i32) {
    %c0_i32 = arith.constant 0 : i32
    %c0_i32_0 = arith.constant 0 : i32
    %c0_i32_1 = arith.constant 0 : i32
    return %c0_i32, %c0_i32_0 : i32, i32
  }
  func.func @transform_4(%arg0: i32) -> (i32, i32) {
    %c0_i32 = arith.constant 0 : i32
    %c0_i32_0 = arith.constant 0 : i32
    %c0_i32_1 = arith.constant 0 : i32
    return %c0_i32, %c0_i32_0 : i32, i32
  }
  func.func @transform_5(%arg0: i32) -> (i32, i32) {
    %c0_i32 = arith.constant 0 : i32
    %c0_i32_0 = arith.constant 0 : i32
    %c0_i32_1 = arith.constant 0 : i32
    return %c0_i32, %c0_i32_0 : i32, i32
  }
  func.func @transform_6(%arg0: i32) -> (i32, i32) {
    %c0_i32 = arith.constant 0 : i32
    %c0_i32_0 = arith.constant 0 : i32
    %c0_i32_1 = arith.constant 0 : i32
    return %c0_i32, %c0_i32_0 : i32, i32
  }
  func.func @transform_7(%arg0: i32) -> (i32, i32) {
    %c0_i32 = arith.constant 0 : i32
    %c0_i32_0 = arith.constant 0 : i32
    return %arg0, %c0_i32 : i32, i32
  }
  func.func @transform_8(%arg0: i32) -> (i32, i32) {
    %c0_i32 = arith.constant 0 : i32
    %c0_i32_0 = arith.constant 0 : i32
    return %arg0, %c0_i32 : i32, i32
  }
}

</mosaic_0001>

<llo_original>
// kernel: tile.13
$region0: #{tile.13}
  #allocation0 [shape = 's32[1]{0}', space=sflag, size = 0x4, scoped, tag = 'scoped memory for tile.13']
  %s0 = inlined_call_operand.vmem [shape: f32[32], index: 0, kind: input, shape index: {}]
  %s1 = inlined_call_operand.vmem [shape: f32[16,32], index: 1, kind: output, shape index: {}]
  // Predicated region
  $region2: #{tile.13} parent=0 // pred_check
    _
  $region3: #{tile.13} parent=0 // pred_check_branch
    %3 = sbr.rel (0) target = $region5
  $region4: #{tile.13} parent=0 // pred_region
    _
  $region5: #{tile.13} parent=0 // pred_fallthru
    _
  %v4 = vld [vmem:[%s0] ss:$0 sm:$0xff]
  %5 = vst [vmem:[%s1] sm:$0xff] %v4
  %s6 = scalar_lea.vmem %s1, 8
  %7 = vst [vmem:[%s6] sm:$0xff] %v4

// kernel: tile.14
$region0: #{tile.14}
  %s0 = inlined_call_operand.vmem [shape: f32[16,32], index: 0, kind: input, shape index: {}]
  %s1 = inlined_call_operand.vmem [shape: f32[1,512], index: 1, kind: output, shape index: {}]
  $region1: #{tile.14} parent=0
    #allocation0 [shape = 'u8[16384]{0}', space=vmem, size = 0x4000, scoped, tag = 'scoped mem for output reshape']
    %v2 = vld [vmem:[%s0] ss:$4 sm:$0xf]
    %vm3 = vcmask 261120
    %4 = vst.msk [vmem:[#allocation0] ss:$8 sm:$0xf] %vm3, %v2
    %s5 = scalar_lea.vmem %s0, 3
    %v6 = vld [vmem:[%s5] ss:$4 sm:$0xf]
    %7 = vrot.lane.b32.xlu0 %v6, 96
    %v8 = vpop.permute.xlu0 %7
    %vm9 = vcmask 1048320
    %10 = vst.msk [vmem:[#allocation0] ss:$8 sm:$0xf] %vm9, %v8
    %s11 = scalar_lea.vmem %s0, 2
    %v12 = vld [vmem:[%s11] ss:$4 sm:$0xf]
    %13 = vrot.lane.b32.xlu0 %v12, 64
    %v14 = vpop.permute.xlu0 %13
    %vm15 = vcmask 785920
    %16 = vst.msk [vmem:[#allocation0] ss:$8 sm:$0xf] %vm15, %v14
    %s17 = scalar_lea.vmem %s0, 1
    %v18 = vld [vmem:[%s17] ss:$4 sm:$0xf]
    %19 = vrot.lane.b32.xlu0 %v18, 32
    %v20 = vpop.permute.xlu0 %19
    %vm21 = vcmask 523520
    %22 = vst.msk [vmem:[#allocation0] ss:$8 sm:$0xf] %vm21, %v20
    %s24 = ssub.s32 2, 1
    %v25 = vld [vmem:[#allocation0] sm:%s24]
    %s27 = ssub.s32 2, 1
    %28 = vst [vmem:[%s1] sm:%s27] %v25
    %s29 = scalar_lea.vmem [#allocation0], 8
    %v30 = vld [vmem:[%s29] sm:%s24]
    %s32 = ssub.s32 2, 1
    %s33 = scalar_lea.vmem %s1, 1
    %34 = vst [vmem:[%s33] sm:%s32] %v30
    %s35 = scalar_lea.vmem [#allocation0], 16
    %v36 = vld [vmem:[%s35] sm:%s24]
    %s38 = ssub.s32 2, 1
    %s39 = scalar_lea.vmem %s1, 2
    %40 = vst [vmem:[%s39] sm:%s38] %v36
    %s41 = scalar_lea.vmem [#allocation0], 24
    %v42 = vld [vmem:[%s41] sm:%s24]
    %s44 = ssub.s32 2, 1
    %s45 = scalar_lea.vmem %s1, 3
    %46 = vst [vmem:[%s45] sm:%s44] %v42

// kernel: simple_net_forward.1
$region0: #{simple_net_forward.1}
  #allocation0 [shape = 'u32[]', space=smem, size = 0x4, offset = 0x4, fixed_abs, tag = 'smem constant byte address 0x4 - core index']
  #allocation1 [shape = 'u32[72,128]{1,0:T(1,128)}', space=vmem, size = 0x9000, scoped, tag = 'internal scratch']
  %s0 = inlined_call_operand.vmem [shape: bf16[16,18,144], index: 0, kind: input, shape index: {}]
  %s1 = inlined_call_operand.vmem [shape: bf16[3,144,512], index: 1, kind: input, shape index: {}]
  %s2 = inlined_call_operand.vmem [shape: f32[1,512], index: 2, kind: input, shape index: {}]
  %s3 = inlined_call_operand.vmem [shape: bf16[512,128], index: 3, kind: input, shape index: {}]
  %s4 = inlined_call_operand.vmem [shape: f32[1,128], index: 4, kind: input, shape index: {}]
  %s5 = inlined_call_operand.vmem [shape: bf16[128,128], index: 5, kind: input, shape index: {}]
  %s6 = inlined_call_operand.vmem [shape: f32[1,128], index: 6, kind: input, shape index: {}]
  %s7 = inlined_call_operand.vmem [shape: f32[16,128], index: 7, kind: output, shape index: {0}]
  %s8 = inlined_call_operand.vmem [shape: f32[16,128], index: 8, kind: output, shape index: {1}]
  %9 = xla_tuple %s7, %s8
  %s10 = sld [smem:[#allocation0]]
  $region69: #{simple_net_forward.1} parent=0
    _
  %s12 = ssub.s32 1, %s10
  %s13 = scalar_select 0, %s12, %s10
  loop: start=0, step=1, limit=4
  $region2: #{simple_net_forward.1} parent=0 // loop_pre_header
    _
  $region3: #{simple_net_forward.1} parent=0 // loop_header
    %s15 = sphi 0, %s19
    %p16 = scmp.ge.s32.totalorder %s15, 4
    %s25 = sphi 0, %s27
    %s28 = sphi 0, %s25
    %s29 = sphi 0, %s28
    %s45 = sphi 0, %s29
    %s49 = sphi 0, %s49
    %s51 = sphi 0, %s49
    %s52 = sphi 0, %s51
    %s66 = sphi 0, %s52
    %s70 = sphi 0, %s70
    %s72 = sphi 0, %s70
    %s73 = sphi 0, %s72
    %s87 = sphi 0, %s73
    %s91 = sphi 0, %s91
    %s93 = sphi 0, %s91
    %s94 = sphi 0, %s93
    %s108 = sphi 0, %s94
    %s112 = sphi 0, %s112
    %s114 = sphi 0, %s112
    %s115 = sphi 0, %s114
    %s129 = sphi 0, %s115
    %s133 = sphi 0, %s133
    %s135 = sphi 0, %s133
    %s136 = sphi 0, %s135
    %s150 = sphi 0, %s136
    %s154 = sphi 0, %s154
    %s156 = sphi 0, %s154
    %s157 = sphi 0, %s156
    %s171 = sphi 0, %s157
    %s177 = sphi 0, %s179
    %s180 = sphi 0, %s177
    %s181 = sphi 0, %s180
    %s197 = sphi 0, %s181
    %s203 = sphi 0, %s205
    %s206 = sphi 0, %s203
    %s207 = sphi 0, %s206
    %s223 = sphi 0, %s207
  $region4: #{simple_net_forward.1} parent=0 // loop_header_branch
    %18 = sbr.rel (%p16) target = $region8
  $region5: #{simple_net_forward.1} parent=0 // loop_body
    %s20 = ssub.s32 %s15, 1
    %s21 = ssub.s32 %s15, 2
    %s22 = sadd.s32 %s15, 1
    %s23 = ssub.s32 %s15, %s22
    %p24 = scmp.eq.s32.totalorder %s23, 0
    %s26 = sadd.s32 %s25, 1
    %s27 = scalar_select %p24, %s25, %s26
    %p30 = pneg %p24
    %p31 = scmp.eq.s32.totalorder %s15, 1
    %p32 = por %p30, %p31
    %p33 = scmp.ne.s32.totalorder %s25, %s28
    %p34 = scmp.eq.s32.totalorder %s15, 0
    %p35 = por %p33, %p34
    %p36 = scmp.ne.s32.totalorder %s25, %s28
    %p37 = scmp.eq.s32.totalorder %s20, 1
    %p38 = por %p36, %p37
    %p39 = scmp.ne.s32.totalorder %s28, %s29
    %p40 = scmp.eq.s32.totalorder %s20, 0
    %p41 = por %p39, %p40
    %p42 = scmp.ne.s32.totalorder %s28, %s29
    %p43 = scmp.eq.s32.totalorder %s21, 1
    %p44 = por %p42, %p43
    %p46 = scmp.ne.s32.totalorder %s29, %s45
    %p47 = scmp.eq.s32.totalorder %s21, 0
    %p48 = por %p46, %p47
    %s50 = sadd.s32 %s49, 1
    %p53 = scmp.eq.s32.totalorder %s15, 1
    %p54 = scmp.ne.s32.totalorder %s49, %s51
    %p55 = scmp.eq.s32.totalorder %s15, 0
    %p56 = por %p54, %p55
    %p57 = scmp.ne.s32.totalorder %s49, %s51
    %p58 = scmp.eq.s32.totalorder %s20, 1
    %p59 = por %p57, %p58
    %p60 = scmp.ne.s32.totalorder %s51, %s52
    %p61 = scmp.eq.s32.totalorder %s20, 0
    %p62 = por %p60, %p61
    %p63 = scmp.ne.s32.totalorder %s51, %s52
    %p64 = scmp.eq.s32.totalorder %s21, 1
    %p65 = por %p63, %p64
    %p67 = scmp.ne.s32.totalorder %s52, %s66
    %p68 = scmp.eq.s32.totalorder %s21, 0
    %p69 = por %p67, %p68
    %s71 = sadd.s32 %s70, 1
    %p74 = scmp.eq.s32.totalorder %s15, 1
    %p75 = scmp.ne.s32.totalorder %s70, %s72
    %p76 = scmp.eq.s32.totalorder %s15, 0
    %p77 = por %p75, %p76
    %p78 = scmp.ne.s32.totalorder %s70, %s72
    %p79 = scmp.eq.s32.totalorder %s20, 1
    %p80 = por %p78, %p79
    %p81 = scmp.ne.s32.totalorder %s72, %s73
    %p82 = scmp.eq.s32.totalorder %s20, 0
    %p83 = por %p81, %p82
    %p84 = scmp.ne.s32.totalorder %s72, %s73
    %p85 = scmp.eq.s32.totalorder %s21, 1
    %p86 = por %p84, %p85
    %p88 = scmp.ne.s32.totalorder %s73, %s87
    %p89 = scmp.eq.s32.totalorder %s21, 0
    %p90 = por %p88, %p89
    %s92 = sadd.s32 %s91, 1
    %p95 = scmp.eq.s32.totalorder %s15, 1
    %p96 = scmp.ne.s32.totalorder %s91, %s93
    %p97 = scmp.eq.s32.totalorder %s15, 0
    %p98 = por %p96, %p97
    %p99 = scmp.ne.s32.totalorder %s91, %s93
    %p100 = scmp.eq.s32.totalorder %s20, 1
    %p101 = por %p99, %p100
    %p102 = scmp.ne.s32.totalorder %s93, %s94
    %p103 = scmp.eq.s32.totalorder %s20, 0
    %p104 = por %p102, %p103
    %p105 = scmp.ne.s32.totalorder %s93, %s94
    %p106 = scmp.eq.s32.totalorder %s21, 1
    %p107 = por %p105, %p106
    %p109 = scmp.ne.s32.totalorder %s94, %s108
    %p110 = scmp.eq.s32.totalorder %s21, 0
    %p111 = por %p109, %p110
    %s113 = sadd.s32 %s112, 1
    %p116 = scmp.eq.s32.totalorder %s15, 1
    %p117 = scmp.ne.s32.totalorder %s112, %s114
    %p118 = scmp.eq.s32.totalorder %s15, 0
    %p119 = por %p117, %p118
    %p120 = scmp.ne.s32.totalorder %s112, %s114
    %p121 = scmp.eq.s32.totalorder %s20, 1
    %p122 = por %p120, %p121
    %p123 = scmp.ne.s32.totalorder %s114, %s115
    %p124 = scmp.eq.s32.totalorder %s20, 0
    %p125 = por %p123, %p124
    %p126 = scmp.ne.s32.totalorder %s114, %s115
    %p127 = scmp.eq.s32.totalorder %s21, 1
    %p128 = por %p126, %p127
    %p130 = scmp.ne.s32.totalorder %s115, %s129
    %p131 = scmp.eq.s32.totalorder %s21, 0
    %p132 = por %p130, %p131
    %s134 = sadd.s32 %s133, 1
    %p137 = scmp.eq.s32.totalorder %s15, 1
    %p138 = scmp.ne.s32.totalorder %s133, %s135
    %p139 = scmp.eq.s32.totalorder %s15, 0
    %p140 = por %p138, %p139
    %p141 = scmp.ne.s32.totalorder %s133, %s135
    %p142 = scmp.eq.s32.totalorder %s20, 1
    %p143 = por %p141, %p142
    %p144 = scmp.ne.s32.totalorder %s135, %s136
    %p145 = scmp.eq.s32.totalorder %s20, 0
    %p146 = por %p144, %p145
    %p147 = scmp.ne.s32.totalorder %s135, %s136
    %p148 = scmp.eq.s32.totalorder %s21, 1
    %p149 = por %p147, %p148
    %p151 = scmp.ne.s32.totalorder %s136, %s150
    %p152 = scmp.eq.s32.totalorder %s21, 0
    %p153 = por %p151, %p152
    %s155 = sadd.s32 %s154, 1
    %p158 = scmp.eq.s32.totalorder %s15, 1
    %p159 = scmp.ne.s32.totalorder %s154, %s156
    %p160 = scmp.eq.s32.totalorder %s15, 0
    %p161 = por %p159, %p160
    %p162 = scmp.ne.s32.totalorder %s154, %s156
    %p163 = scmp.eq.s32.totalorder %s20, 1
    %p164 = por %p162, %p163
    %p165 = scmp.ne.s32.totalorder %s156, %s157
    %p166 = scmp.eq.s32.totalorder %s20, 0
    %p167 = por %p165, %p166
    %p168 = scmp.ne.s32.totalorder %s156, %s157
    %p169 = scmp.eq.s32.totalorder %s21, 1
    %p170 = por %p168, %p169
    %p172 = scmp.ne.s32.totalorder %s157, %s171
    %p173 = scmp.eq.s32.totalorder %s21, 0
    %p174 = por %p172, %p173
    %s175 = ssub.s32 %s15, %s22
    %p176 = scmp.eq.s32.totalorder %s175, 0
    %s178 = sadd.s32 %s177, 1
    %s179 = scalar_select %p176, %s177, %s178
    %p182 = pneg %p176
    %p183 = scmp.eq.s32.totalorder %s15, 1
    %p184 = por %p182, %p183
    %p185 = scmp.ne.s32.totalorder %s177, %s180
    %p186 = scmp.eq.s32.totalorder %s15, 0
    %p187 = por %p185, %p186
    %p188 = scmp.ne.s32.totalorder %s177, %s180
    %p189 = scmp.eq.s32.totalorder %s20, 1
    %p190 = por %p188, %p189
    %p191 = scmp.ne.s32.totalorder %s180, %s181
    %p192 = scmp.eq.s32.totalorder %s20, 0
    %p193 = por %p191, %p192
    %p194 = scmp.ne.s32.totalorder %s180, %s181
    %p195 = scmp.eq.s32.totalorder %s21, 1
    %p196 = por %p194, %p195
    %p198 = scmp.ne.s32.totalorder %s181, %s197
    %p199 = scmp.eq.s32.totalorder %s21, 0
    %p200 = por %p198, %p199
    %s201 = ssub.s32 %s15, %s22
    %p202 = scmp.eq.s32.totalorder %s201, 0
    %s204 = sadd.s32 %s203, 1
    %s205 = scalar_select %p202, %s203, %s204
    %p208 = pneg %p202
    %p209 = scmp.eq.s32.totalorder %s15, 1
    %p210 = por %p208, %p209
    %p211 = scmp.ne.s32.totalorder %s203, %s206
    %p212 = scmp.eq.s32.totalorder %s15, 0
    %p213 = por %p211, %p212
    %p214 = scmp.ne.s32.totalorder %s203, %s206
    %p215 = scmp.eq.s32.totalorder %s20, 1
    %p216 = por %p214, %p215
    %p217 = scmp.ne.s32.totalorder %s206, %s207
    %p218 = scmp.eq.s32.totalorder %s20, 0
    %p219 = por %p217, %p218
    %p220 = scmp.ne.s32.totalorder %s206, %s207
    %p221 = scmp.eq.s32.totalorder %s21, 1
    %p222 = por %p220, %p221
    %p224 = scmp.ne.s32.totalorder %s207, %s223
    %p225 = scmp.eq.s32.totalorder %s21, 0
    %p226 = por %p224, %p225
    %p227 = scmp.le.s32.totalorder 1, %s15
    %p228 = scmp.lt.s32.totalorder %s15, 3
    %p229 = pnand %p227, %p228
    %p230 = pneg %p229
    // Predicated region
    $region9: #{simple_net_forward.1} parent=5 // pred_check
      _
    $region10: #{simple_net_forward.1} parent=5 // pred_check_branch
      %232 = sbr.rel (%p229) target = $region12
    $region11: #{simple_net_forward.1} parent=5 // pred_region
      %s233 = ssub.s32 %s15, 1
      // Predicated region
      $region13: #{simple_net_forward.1} parent=11 // pred_check
        %p234 = pneg %p62
      $region14: #{simple_net_forward.1} parent=11 // pred_check_branch
        %236 = sbr.rel (%p234) target = $region16
      $region15: #{simple_net_forward.1} parent=11 // pred_region
        _
      $region16: #{simple_net_forward.1} parent=11 // pred_fallthru
        _
      // Predicated region
      $region17: #{simple_net_forward.1} parent=11 // pred_check
        %p237 = pneg %p83
      $region18: #{simple_net_forward.1} parent=11 // pred_check_branch
        %239 = sbr.rel (%p237) target = $region20
      $region19: #{simple_net_forward.1} parent=11 // pred_region
        _
      $region20: #{simple_net_forward.1} parent=11 // pred_fallthru
        _
      // Predicated region
      $region21: #{simple_net_forward.1} parent=11 // pred_check
        %p240 = pneg %p104
      $region22: #{simple_net_forward.1} parent=11 // pred_check_branch
        %242 = sbr.rel (%p240) target = $region24
      $region23: #{simple_net_forward.1} parent=11 // pred_region
        _
      $region24: #{simple_net_forward.1} parent=11 // pred_fallthru
        _
      // Predicated region
      $region25: #{simple_net_forward.1} parent=11 // pred_check
        %p243 = pneg %p125
      $region26: #{simple_net_forward.1} parent=11 // pred_check_branch
        %245 = sbr.rel (%p243) target = $region28
      $region27: #{simple_net_forward.1} parent=11 // pred_region
        _
      $region28: #{simple_net_forward.1} parent=11 // pred_fallthru
        _
      // Predicated region
      $region29: #{simple_net_forward.1} parent=11 // pred_check
        %p246 = pneg %p146
      $region30: #{simple_net_forward.1} parent=11 // pred_check_branch
        %248 = sbr.rel (%p246) target = $region32
      $region31: #{simple_net_forward.1} parent=11 // pred_region
        _
      $region32: #{simple_net_forward.1} parent=11 // pred_fallthru
        _
      // Predicated region
      $region33: #{simple_net_forward.1} parent=11 // pred_check
        %p249 = pneg %p167
      $region34: #{simple_net_forward.1} parent=11 // pred_check_branch
        %251 = sbr.rel (%p249) target = $region36
      $region35: #{simple_net_forward.1} parent=11 // pred_region
        _
      $region36: #{simple_net_forward.1} parent=11 // pred_fallthru
        _
    $region12: #{simple_net_forward.1} parent=5 // pred_fallthru
      _
    %p252 = scmp.lt.s32.totalorder %s15, 2
    // Predicated region
    $region37: #{simple_net_forward.1} parent=5 // pred_check
      %p253 = pneg %p252
    $region38: #{simple_net_forward.1} parent=5 // pred_check_branch
      %255 = sbr.rel (%p253) target = $region40
    $region39: #{simple_net_forward.1} parent=5 // pred_region
      // Predicated region
      $region41: #{simple_net_forward.1} parent=39 // pred_check
        %p256 = pneg %p35
      $region42: #{simple_net_forward.1} parent=39 // pred_check_branch
        %258 = sbr.rel (%p256) target = $region44
      $region43: #{simple_net_forward.1} parent=39 // pred_region
        %s259 = smul.u32 8, %s15
        %p260 = scmp.lt.s32.totalorder %s259, 15
        %s261 = scalar_select %p260, %s259, 15
        %s262 = smul.addr %s261, 6
        %s263 = smul.addr %s262, 4
        %s264 = scalar_lea.vmem %s0, %s263
        %s265 = smul.u32 8, %s15
      $region44: #{simple_net_forward.1} parent=39 // pred_fallthru
        _
    $region40: #{simple_net_forward.1} parent=5 // pred_fallthru
      _
    %p266 = scmp.le.s32.totalorder 1, %s15
    %p267 = scmp.lt.s32.totalorder %s15, 3
    %p268 = pnand %p266, %p267
    %p269 = pneg %p268
    // Predicated region
    $region45: #{simple_net_forward.1} parent=5 // pred_check
      _
    $region46: #{simple_net_forward.1} parent=5 // pred_check_branch
      %271 = sbr.rel (%p268) target = $region48
    $region47: #{simple_net_forward.1} parent=5 // pred_region
      %s272 = ssub.s32 %s15, 1
      %s273 = smul.u32 8, %s20
      %p274 = scmp.lt.s32.totalorder %s273, 15
      %s275 = scalar_select %p274, %s273, 15
      %s276 = smul.addr %s275, 6
      %s277 = smul.addr %s276, 4
      %s278 = scalar_lea.vmem %s0, %s277
      %p279 = pneg %p41
      %p280 = pneg %p38
      %p281 = pneg %p62
      %p282 = pneg %p59
      %p283 = pneg %p83
      %p284 = pneg %p80
      %p285 = pneg %p104
      %p286 = pneg %p101
      %p287 = pneg %p125
      %p288 = pneg %p122
      %p289 = pneg %p146
      %p290 = pneg %p143
      %p291 = pneg %p167
      %p292 = pneg %p164
      %p293 = pneg %p193
      %p294 = pneg %p190
      %p295 = scmp.lt.s32.totalorder %s20, 1
      %s296 = scalar_select %p295, %s20, 1
      %s297 = smul.addr %s296, 8
      %s298 = scalar_lea.vmem %s7, %s297
      %p299 = pneg %p219
      %p300 = pneg %p216
      %p301 = scmp.lt.s32.totalorder %s20, 1
      %s302 = scalar_select %p301, %s20, 1
      %s303 = smul.addr %s302, 8
      %s304 = scalar_lea.vmem %s8, %s303
      %s305 = smul.u32 8, %s20
      %p306 = scmp.lt.s32.totalorder %s305, 15
      %s307 = scalar_select %p306, %s305, 15
      %s308 = smul.addr %s307, 6
      %s309 = smul.addr %s308, 4
      %s310 = scalar_lea.vmem %s0, %s309
      %s311 = smul.u32 8, %s20
      %p312 = scmp.lt.s32.totalorder %s20, 1
      %s313 = scalar_select %p312, %s20, 1
      %s314 = smul.addr %s313, 8
      %s315 = scalar_lea.vmem %s7, %s314
      %p316 = scmp.lt.s32.totalorder %s20, 1
      %s317 = scalar_select %p316, %s20, 1
      %s318 = smul.addr %s317, 8
      %s319 = scalar_lea.vmem %s8, %s318
      %v321 = vld [vmem:[%s310] sm:$0xff]
      %v322 = vld [vmem:[%s310 + $0x8] sm:$0xff]
      %v323 = vld [vmem:[%s310 + $0x18] sm:$0xff]
      %v324 = vld [vmem:[%s310 + $0x20] sm:$0xff]
      %v325 = vld [vmem:[%s310 + $0x30] sm:$0xff]
      %v326 = vld [vmem:[%s310 + $0x38] sm:$0xff]
      %v327 = vld [vmem:[%s310 + $0x48] sm:$0xff]
      %v328 = vld [vmem:[%s310 + $0x50] sm:$0xff]
      %v329 = vld [vmem:[%s310 + $0x60] sm:$0xff]
      %v330 = vld [vmem:[%s310 + $0x68] sm:$0xff]
      %v331 = vld [vmem:[%s310 + $0x78] sm:$0xff]
      %v332 = vld [vmem:[%s310 + $0x80] sm:$0xff]
      %v333 = vld [vmem:[%s310 + $0x90] sm:$0xff]
      %v334 = vld [vmem:[%s310 + $0x98] sm:$0xff]
      %v335 = vld [vmem:[%s310 + $0xa8] sm:$0xff]
      %v336 = vld [vmem:[%s310 + $0xb0] sm:$0xff]
      %v337 = vld [vmem:[%s1] sm:$0xff]
      %v338 = vld [vmem:[%s1 + $0x8] sm:$0xff]
      %v339 = vld [vmem:[%s1 + $0x10] sm:$0xff]
      %v340 = vld [vmem:[%s1 + $0x18] sm:$0xff]
      %v341 = vld [vmem:[%s1 + $0x20] sm:$0xff]
      %v342 = vld [vmem:[%s1 + $0x28] sm:$0xff]
      %v343 = vld [vmem:[%s1 + $0x30] sm:$0xff]
      %v344 = vld [vmem:[%s1 + $0x38] sm:$0xff]
      %v345 = vld [vmem:[%s1 + $0x40] sm:$0xff]
      %v346 = vld [vmem:[%s1 + $0x48] sm:$0xff]
      %v347 = vld [vmem:[%s1 + $0x50] sm:$0xff]
      %v348 = vld [vmem:[%s1 + $0x58] sm:$0xff]
      %v349 = vld [vmem:[%s1 + $0x60] sm:$0xff]
      %v350 = vld [vmem:[%s1 + $0x68] sm:$0xff]
      %v351 = vld [vmem:[%s1 + $0x70] sm:$0xff]
      %v352 = vld [vmem:[%s1 + $0x78] sm:$0xff]
      %v353 = vld [vmem:[%s1 + $0x80] sm:$0xff]
      %v354 = vld [vmem:[%s1 + $0x88] sm:$0xff]
      %v355 = vld [vmem:[%s1 + $0x90] sm:$0xff]
      %v356 = vld [vmem:[%s1 + $0x98] sm:$0xff]
      %v357 = vld [vmem:[%s1 + $0xa0] sm:$0xff]
      %v358 = vld [vmem:[%s1 + $0xa8] sm:$0xff]
      %v359 = vld [vmem:[%s1 + $0xb0] sm:$0xff]
      %v360 = vld [vmem:[%s1 + $0xb8] sm:$0xff]
      %v361 = vld [vmem:[%s1 + $0xc0] sm:$0xff]
      %v362 = vld [vmem:[%s1 + $0xc8] sm:$0xff]
      %v363 = vld [vmem:[%s1 + $0xd0] sm:$0xff]
      %v364 = vld [vmem:[%s1 + $0xd8] sm:$0xff]
      %v365 = vld [vmem:[%s1 + $0xe0] sm:$0xff]
      %v366 = vld [vmem:[%s1 + $0xe8] sm:$0xff]
      %v367 = vld [vmem:[%s1 + $0xf0] sm:$0xff]
      %v368 = vld [vmem:[%s1 + $0xf8] sm:$0xff]
      %v369 = vld [vmem:[%s1 + $0x100] sm:$0xff]
      %v370 = vld [vmem:[%s1 + $0x108] sm:$0xff]
      %v371 = vld [vmem:[%s1 + $0x110] sm:$0xff]
      %v372 = vld [vmem:[%s1 + $0x118] sm:$0xff]
      %v373 = vld [vmem:[%s310 + $0x10] sm:$0x11]
      %v374 = vld [vmem:[%s310 + $0x28] sm:$0x11]
      %v375 = vld [vmem:[%s310 + $0x40] sm:$0x11]
      %v376 = vld [vmem:[%s310 + $0x58] sm:$0x11]
      %v377 = vld [vmem:[%s310 + $0x70] sm:$0x11]
      %v378 = vld [vmem:[%s310 + $0x88] sm:$0x11]
      %v379 = vld [vmem:[%s310 + $0xa0] sm:$0x11]
      %v380 = vld [vmem:[%s310 + $0xb8] sm:$0x11]
      %vm381 = vsmask.f32 3328
      %vm382 = vsmask.f32 7440
      %vm383 = vmor %vm381, %vm382
      %v385 = vshrl.u32 %v321, 16
      %v387 = vrot.slane %v385, 4
      %v388 = vshll.u32 %v321, 16
      %v390 = vrot.slane %v388, 5
      %v391 = vor.u32 %v387, %v390
      %v392 = vrot.slane %v391, 4
      %v394 = vshll.u32 %v322, 16
      %v396 = vrot.slane %v394, 5
      %v397 = vsel %vm383, %v392, %v396
      %v398 = vshrl.u32 %v322, 16
      %v400 = vrot.slane %v398, 4
      %v401 = vor.u32 %v400, %v396
      %v402 = vrot.slane %v401, 4
      %v404 = vshll.u32 %v373, 16
      %v406 = vrot.slane %v404, 5
      %v407 = vsel %vm383, %v402, %v406
      %v409 = vshrl.u32 %v323, 16
      %v411 = vrot.slane %v409, 4
      %v412 = vshll.u32 %v323, 16
      %v414 = vrot.slane %v412, 5
      %v415 = vor.u32 %v411, %v414
      %v416 = vrot.slane %v415, 4
      %v418 = vshll.u32 %v324, 16
      %v420 = vrot.slane %v418, 5
      %v421 = vsel %vm383, %v416, %v420
      %v422 = vshrl.u32 %v324, 16
      %v424 = vrot.slane %v422, 4
      %v425 = vor.u32 %v424, %v420
      %v426 = vrot.slane %v425, 4
      %v428 = vshll.u32 %v374, 16
      %v430 = vrot.slane %v428, 5
      %v431 = vsel %vm383, %v426, %v430
      %v433 = vshrl.u32 %v325, 16
      %v435 = vrot.slane %v433, 4
      %v436 = vshll.u32 %v325, 16
      %v438 = vrot.slane %v436, 5
      %v439 = vor.u32 %v435, %v438
      %v440 = vrot.slane %v439, 4
      %v442 = vshll.u32 %v326, 16
      %v444 = vrot.slane %v442, 5
      %v445 = vsel %vm383, %v440, %v444
      %v446 = vshrl.u32 %v326, 16
      %v448 = vrot.slane %v446, 4
      %v449 = vor.u32 %v448, %v444
      %v450 = vrot.slane %v449, 4
      %v452 = vshll.u32 %v375, 16
      %v454 = vrot.slane %v452, 5
      %v455 = vsel %vm383, %v450, %v454
      %v457 = vshrl.u32 %v327, 16
      %v459 = vrot.slane %v457, 4
      %v460 = vshll.u32 %v327, 16
      %v462 = vrot.slane %v460, 5
      %v463 = vor.u32 %v459, %v462
      %v464 = vrot.slane %v463, 4
      %v466 = vshll.u32 %v328, 16
      %v468 = vrot.slane %v466, 5
      %v469 = vsel %vm383, %v464, %v468
      %v470 = vshrl.u32 %v328, 16
      %v472 = vrot.slane %v470, 4
      %v473 = vor.u32 %v472, %v468
      %v474 = vrot.slane %v473, 4
      %v476 = vshll.u32 %v376, 16
      %v478 = vrot.slane %v476, 5
      %v479 = vsel %vm383, %v474, %v478
      %v481 = vshrl.u32 %v329, 16
      %v483 = vrot.slane %v481, 4
      %v484 = vshll.u32 %v329, 16
      %v486 = vrot.slane %v484, 5
      %v487 = vor.u32 %v483, %v486
      %v488 = vrot.slane %v487, 4
      %v490 = vshll.u32 %v330, 16
      %v492 = vrot.slane %v490, 5
      %v493 = vsel %vm383, %v488, %v492
      %v494 = vshrl.u32 %v330, 16
      %v496 = vrot.slane %v494, 4
      %v497 = vor.u32 %v496, %v492
      %v498 = vrot.slane %v497, 4
      %v500 = vshll.u32 %v377, 16
      %v502 = vrot.slane %v500, 5
      %v503 = vsel %vm383, %v498, %v502
      %v505 = vshrl.u32 %v331, 16
      %v507 = vrot.slane %v505, 4
      %v508 = vshll.u32 %v331, 16
      %v510 = vrot.slane %v508, 5
      %v511 = vor.u32 %v507, %v510
      %v512 = vrot.slane %v511, 4
      %v514 = vshll.u32 %v332, 16
      %v516 = vrot.slane %v514, 5
      %v517 = vsel %vm383, %v512, %v516
      %v518 = vshrl.u32 %v332, 16
      %v520 = vrot.slane %v518, 4
      %v521 = vor.u32 %v520, %v516
      %v522 = vrot.slane %v521, 4
      %v524 = vshll.u32 %v378, 16
      %v526 = vrot.slane %v524, 5
      %v527 = vsel %vm383, %v522, %v526
      %v529 = vshrl.u32 %v333, 16
      %v531 = vrot.slane %v529, 4
      %v532 = vshll.u32 %v333, 16
      %v534 = vrot.slane %v532, 5
      %v535 = vor.u32 %v531, %v534
      %v536 = vrot.slane %v535, 4
      %v538 = vshll.u32 %v334, 16
      %v540 = vrot.slane %v538, 5
      %v541 = vsel %vm383, %v536, %v540
      %v542 = vshrl.u32 %v334, 16
      %v544 = vrot.slane %v542, 4
      %v545 = vor.u32 %v544, %v540
      %v546 = vrot.slane %v545, 4
      %v548 = vshll.u32 %v379, 16
      %v550 = vrot.slane %v548, 5
      %v551 = vsel %vm383, %v546, %v550
      %v553 = vshrl.u32 %v335, 16
      %v555 = vrot.slane %v553, 4
      %v556 = vshll.u32 %v335, 16
      %v558 = vrot.slane %v556, 5
      %v559 = vor.u32 %v555, %v558
      %v560 = vrot.slane %v559, 4
      %v562 = vshll.u32 %v336, 16
      %v564 = vrot.slane %v562, 5
      %v565 = vsel %vm383, %v560, %v564
      %v566 = vshrl.u32 %v336, 16
      %v568 = vrot.slane %v566, 4
      %v569 = vor.u32 %v568, %v564
      %v570 = vrot.slane %v569, 4
      %v572 = vshll.u32 %v380, 16
      %v574 = vrot.slane %v572, 5
      %v575 = vsel %vm383, %v570, %v574
      %s576 = scalar_lea.vmem %s1, 288
      %v577 = vld [vmem:[%s576] sm:$0xff]
      %v578 = vld [vmem:[%s576 + $0x8] sm:$0xff]
      %v579 = vld [vmem:[%s576 + $0x10] sm:$0xff]
      %v580 = vld [vmem:[%s576 + $0x18] sm:$0xff]
      %v581 = vld [vmem:[%s576 + $0x20] sm:$0xff]
      %v582 = vld [vmem:[%s576 + $0x28] sm:$0xff]
      %v583 = vld [vmem:[%s576 + $0x30] sm:$0xff]
      %v584 = vld [vmem:[%s576 + $0x38] sm:$0xff]
      %v585 = vld [vmem:[%s576 + $0x40] sm:$0xff]
      %v586 = vld [vmem:[%s576 + $0x48] sm:$0xff]
      %v587 = vld [vmem:[%s576 + $0x50] sm:$0xff]
      %v588 = vld [vmem:[%s576 + $0x58] sm:$0xff]
      %v589 = vld [vmem:[%s576 + $0x60] sm:$0xff]
      %v590 = vld [vmem:[%s576 + $0x68] sm:$0xff]
      %v591 = vld [vmem:[%s576 + $0x70] sm:$0xff]
      %v592 = vld [vmem:[%s576 + $0x78] sm:$0xff]
      %v593 = vld [vmem:[%s576 + $0x80] sm:$0xff]
      %v594 = vld [vmem:[%s576 + $0x88] sm:$0xff]
      %v595 = vld [vmem:[%s576 + $0x90] sm:$0xff]
      %v596 = vld [vmem:[%s576 + $0x98] sm:$0xff]
      %v597 = vld [vmem:[%s576 + $0xa0] sm:$0xff]
      %v598 = vld [vmem:[%s576 + $0xa8] sm:$0xff]
      %v599 = vld [vmem:[%s576 + $0xb0] sm:$0xff]
      %v600 = vld [vmem:[%s576 + $0xb8] sm:$0xff]
      %v601 = vld [vmem:[%s576 + $0xc0] sm:$0xff]
      %v602 = vld [vmem:[%s576 + $0xc8] sm:$0xff]
      %v603 = vld [vmem:[%s576 + $0xd0] sm:$0xff]
      %v604 = vld [vmem:[%s576 + $0xd8] sm:$0xff]
      %v605 = vld [vmem:[%s576 + $0xe0] sm:$0xff]
      %v606 = vld [vmem:[%s576 + $0xe8] sm:$0xff]
      %v607 = vld [vmem:[%s576 + $0xf0] sm:$0xff]
      %v608 = vld [vmem:[%s576 + $0xf8] sm:$0xff]
      %v609 = vld [vmem:[%s576 + $0x100] sm:$0xff]
      %v610 = vld [vmem:[%s576 + $0x108] sm:$0xff]
      %v611 = vld [vmem:[%s576 + $0x110] sm:$0xff]
      %v612 = vld [vmem:[%s576 + $0x118] sm:$0xff]
      %v613 = vunpack.c.l.b16 %v397
      %v614 = vunpack.c.h.b16 %v397
      %v615 = vunpack.c.l.b16 %v407
      %v616 = vunpack.c.h.b16 %v407
      %v617 = vunpack.c.l.b16 %v421
      %v618 = vunpack.c.h.b16 %v421
      %v619 = vunpack.c.l.b16 %v431
      %v620 = vunpack.c.h.b16 %v431
      %v621 = vunpack.c.l.b16 %v445
      %v622 = vunpack.c.h.b16 %v445
      %v623 = vunpack.c.l.b16 %v455
      %v624 = vunpack.c.h.b16 %v455
      %v625 = vunpack.c.l.b16 %v469
      %v626 = vunpack.c.h.b16 %v469
      %v627 = vunpack.c.l.b16 %v479
      %v628 = vunpack.c.h.b16 %v479
      %v629 = vunpack.c.l.b16 %v493
      %v630 = vunpack.c.h.b16 %v493
      %v631 = vunpack.c.l.b16 %v503
      %v632 = vunpack.c.h.b16 %v503
      %v633 = vunpack.c.l.b16 %v517
      %v634 = vunpack.c.h.b16 %v517
      %v635 = vunpack.c.l.b16 %v527
      %v636 = vunpack.c.h.b16 %v527
      %v637 = vunpack.c.l.b16 %v541
      %v638 = vunpack.c.h.b16 %v541
      %v639 = vunpack.c.l.b16 %v551
      %v640 = vunpack.c.h.b16 %v551
      %v641 = vunpack.c.l.b16 %v565
      %v642 = vunpack.c.h.b16 %v565
      %v643 = vunpack.c.l.b16 %v575
      %v644 = vunpack.c.h.b16 %v575
      %v645 = vpack.c.b16 %v615, %v613
      %v646 = vpack.c.b16 %v616, %v614
      %v647 = vpack.c.b16 %v619, %v617
      %v648 = vpack.c.b16 %v620, %v618
      %v649 = vpack.c.b16 %v623, %v621
      %v650 = vpack.c.b16 %v624, %v622
      %v651 = vpack.c.b16 %v627, %v625
      %v652 = vpack.c.b16 %v628, %v626
      %v653 = vpack.c.b16 %v631, %v629
      %v654 = vpack.c.b16 %v632, %v630
      %v655 = vpack.c.b16 %v635, %v633
      %v656 = vpack.c.b16 %v636, %v634
      %v657 = vpack.c.b16 %v639, %v637
      %v658 = vpack.c.b16 %v640, %v638
      %v659 = vpack.c.b16 %v643, %v641
      %v660 = vpack.c.b16 %v644, %v642
      %v705 = vunpack.c.l.b16 %v577
      %v706 = vunpack.c.h.b16 %v577
      %v707 = vunpack.c.l.b16 %v578
      %v708 = vunpack.c.h.b16 %v578
      %v709 = vunpack.c.l.b16 %v579
      %v710 = vunpack.c.h.b16 %v579
      %v711 = vunpack.c.l.b16 %v580
      %v712 = vunpack.c.h.b16 %v580
      %v713 = vunpack.c.l.b16 %v581
      %v714 = vunpack.c.h.b16 %v581
      %v715 = vunpack.c.l.b16 %v582
      %v716 = vunpack.c.h.b16 %v582
      %v717 = vunpack.c.l.b16 %v583
      %v718 = vunpack.c.h.b16 %v583
      %v719 = vunpack.c.l.b16 %v584
      %v720 = vunpack.c.h.b16 %v584
      %v721 = vunpack.c.l.b16 %v585
      %v722 = vunpack.c.h.b16 %v585
      %v723 = vunpack.c.l.b16 %v586
      %v724 = vunpack.c.h.b16 %v586
      %v725 = vunpack.c.l.b16 %v587
      %v726 = vunpack.c.h.b16 %v587
      %v727 = vunpack.c.l.b16 %v588
      %v728 = vunpack.c.h.b16 %v588
      %v729 = vunpack.c.l.b16 %v589
      %v730 = vunpack.c.h.b16 %v589
      %v731 = vunpack.c.l.b16 %v590
      %v732 = vunpack.c.h.b16 %v590
      %v733 = vunpack.c.l.b16 %v591
      %v734 = vunpack.c.h.b16 %v591
      %v735 = vunpack.c.l.b16 %v592
      %v736 = vunpack.c.h.b16 %v592
      %v737 = vunpack.c.l.b16 %v593
      %v738 = vunpack.c.h.b16 %v593
      %v739 = vunpack.c.l.b16 %v594
      %v740 = vunpack.c.h.b16 %v594
      %v741 = vunpack.c.l.b16 %v595
      %v742 = vunpack.c.h.b16 %v595
      %v743 = vunpack.c.l.b16 %v596
      %v744 = vunpack.c.h.b16 %v596
      %v745 = vunpack.c.l.b16 %v597
      %v746 = vunpack.c.h.b16 %v597
      %v747 = vunpack.c.l.b16 %v598
      %v748 = vunpack.c.h.b16 %v598
      %v749 = vunpack.c.l.b16 %v599
      %v750 = vunpack.c.h.b16 %v599
      %v751 = vunpack.c.l.b16 %v600
      %v752 = vunpack.c.h.b16 %v600
      %v753 = vunpack.c.l.b16 %v601
      %v754 = vunpack.c.h.b16 %v601
      %v755 = vunpack.c.l.b16 %v602
      %v756 = vunpack.c.h.b16 %v602
      %v757 = vunpack.c.l.b16 %v603
      %v758 = vunpack.c.h.b16 %v603
      %v759 = vunpack.c.l.b16 %v604
      %v760 = vunpack.c.h.b16 %v604
      %v761 = vunpack.c.l.b16 %v605
      %v762 = vunpack.c.h.b16 %v605
      %v763 = vunpack.c.l.b16 %v606
      %v764 = vunpack.c.h.b16 %v606
      %v765 = vunpack.c.l.b16 %v607
      %v766 = vunpack.c.h.b16 %v607
      %v767 = vunpack.c.l.b16 %v608
      %v768 = vunpack.c.h.b16 %v608
      %v769 = vunpack.c.l.b16 %v609
      %v770 = vunpack.c.h.b16 %v609
      %v771 = vunpack.c.l.b16 %v610
      %v772 = vunpack.c.h.b16 %v610
      %v773 = vunpack.c.l.b16 %v611
      %v774 = vunpack.c.h.b16 %v611
      %v775 = vunpack.c.l.b16 %v612
      %v776 = vunpack.c.h.b16 %v612
      %v777 = vpack.c.b16 %v709, %v705
      %v778 = vpack.c.b16 %v710, %v706
      %v779 = vpack.c.b16 %v711, %v707
      %v780 = vpack.c.b16 %v712, %v708
      %v781 = vpack.c.b16 %v717, %v713
      %v782 = vpack.c.b16 %v718, %v714
      %v783 = vpack.c.b16 %v719, %v715
      %v784 = vpack.c.b16 %v720, %v716
      %v785 = vpack.c.b16 %v725, %v721
      %v786 = vpack.c.b16 %v726, %v722
      %v787 = vpack.c.b16 %v727, %v723
      %v788 = vpack.c.b16 %v728, %v724
      %v789 = vpack.c.b16 %v733, %v729
      %v790 = vpack.c.b16 %v734, %v730
      %v791 = vpack.c.b16 %v735, %v731
      %v792 = vpack.c.b16 %v736, %v732
      %v793 = vpack.c.b16 %v741, %v737
      %v794 = vpack.c.b16 %v742, %v738
      %v795 = vpack.c.b16 %v743, %v739
      %v796 = vpack.c.b16 %v744, %v740
      %v797 = vpack.c.b16 %v749, %v745
      %v798 = vpack.c.b16 %v750, %v746
      %v799 = vpack.c.b16 %v751, %v747
      %v800 = vpack.c.b16 %v752, %v748
      %v801 = vpack.c.b16 %v757, %v753
      %v802 = vpack.c.b16 %v758, %v754
      %v803 = vpack.c.b16 %v759, %v755
      %v804 = vpack.c.b16 %v760, %v756
      %v805 = vpack.c.b16 %v765, %v761
      %v806 = vpack.c.b16 %v766, %v762
      %v807 = vpack.c.b16 %v767, %v763
      %v808 = vpack.c.b16 %v768, %v764
      %v809 = vpack.c.b16 %v773, %v769
      %v810 = vpack.c.b16 %v774, %v770
      %v811 = vpack.c.b16 %v775, %v771
      %v812 = vpack.c.b16 %v776, %v772
      %vm849 = vcmask 130048
      %v851 = vsel %vm849, %v646, 0
      %v854 = vsel %vm849, %v648, 0
      %v857 = vsel %vm849, %v650, 0
      %v860 = vsel %vm849, %v652, 0
      %v863 = vsel %vm849, %v654, 0
      %v866 = vsel %vm849, %v656, 0
      %v869 = vsel %vm849, %v658, 0
      %v872 = vsel %vm849, %v660, 0
      %874 = vmatpush.bf16.msra.mxu0 %v805
      %875 = vmatpush.bf16.msra.mxu0 %v801
      %876 = vmatpush.bf16.msra.mxu0 %v797
      %877 = vmatpush.bf16.msra.mxu0 %v793
      %878 = vmatpush.bf16.msra.mxu0 %v789
      %879 = vmatpush.bf16.msra.mxu0 %v785
      %880 = vmatpush.bf16.msra.mxu0 %v781
      %881 = vmatpush.bf16.msra.mxu0 %v777
      %882 = vmatmul.bf16.gmra.mxu0 %v645
      %v883 = vpop.f32.mrf.mxu0
      %v884 = vadd.f32 0.0, %v883
      %v885 = vpop.f32.mrf.mxu0
      %v886 = vadd.f32 0.0, %v885
      %887 = vmatmul.bf16.gmra.mxu0 %v647
      %v888 = vpop.f32.mrf.mxu0
      %v889 = vadd.f32 0.0, %v888
      %v890 = vpop.f32.mrf.mxu0
      %v891 = vadd.f32 0.0, %v890
      %892 = vmatmul.bf16.gmra.mxu0 %v649
      %v893 = vpop.f32.mrf.mxu0
      %v894 = vadd.f32 0.0, %v893
      %v895 = vpop.f32.mrf.mxu0
      %v896 = vadd.f32 0.0, %v895
      %897 = vmatmul.bf16.gmra.mxu0 %v651
      %v898 = vpop.f32.mrf.mxu0
      %v899 = vadd.f32 0.0, %v898
      %v900 = vpop.f32.mrf.mxu0
      %v901 = vadd.f32 0.0, %v900
      %902 = vmatmul.bf16.gmra.mxu0 %v653
      %v903 = vpop.f32.mrf.mxu0
      %v904 = vadd.f32 0.0, %v903
      %v905 = vpop.f32.mrf.mxu0
      %v906 = vadd.f32 0.0, %v905
      %907 = vmatmul.bf16.gmra.mxu0 %v655
      %v908 = vpop.f32.mrf.mxu0
      %v909 = vadd.f32 0.0, %v908
      %v910 = vpop.f32.mrf.mxu0
      %v911 = vadd.f32 0.0, %v910
      %912 = vmatmul.bf16.gmra.mxu0 %v657
      %v913 = vpop.f32.mrf.mxu0
      %v914 = vadd.f32 0.0, %v913
      %v915 = vpop.f32.mrf.mxu0
      %v916 = vadd.f32 0.0, %v915
      %917 = vmatmul.bf16.gmra.mxu0 %v659
      %v918 = vpop.f32.mrf.mxu0
      %v919 = vadd.f32 0.0, %v918
      %v920 = vpop.f32.mrf.mxu0
      %v921 = vadd.f32 0.0, %v920
      %922 = vdwg.mxu0
      %923 = vmatpush.bf16.msra.mxu0 0
      %924 = vmatpush.bf16.msra.mxu0 0
      %925 = vmatpush.bf16.msra.mxu0 0
      %926 = vmatpush.bf16.msra.mxu0 0
      %927 = vmatpush.bf16.msra.mxu0 0
      %928 = vmatpush.bf16.msra.mxu0 0
      %929 = vmatpush.bf16.msra.mxu0 0
      %930 = vmatpush.bf16.msra.mxu0 %v809
      %931 = vmatmul.bf16.gmra.mxu0 %v851
      %v932 = vpop.f32.mrf.mxu0
      %v933 = vadd.f32 %v884, %v932
      %v934 = vpop.f32.mrf.mxu0
      %v935 = vadd.f32 %v886, %v934
      %936 = vmatmul.bf16.gmra.mxu0 %v854
      %v937 = vpop.f32.mrf.mxu0
      %v938 = vadd.f32 %v889, %v937
      %v939 = vpop.f32.mrf.mxu0
      %v940 = vadd.f32 %v891, %v939
      %941 = vmatmul.bf16.gmra.mxu0 %v857
      %v942 = vpop.f32.mrf.mxu0
      %v943 = vadd.f32 %v894, %v942
      %v944 = vpop.f32.mrf.mxu0
      %v945 = vadd.f32 %v896, %v944
      %946 = vmatmul.bf16.gmra.mxu0 %v860
      %v947 = vpop.f32.mrf.mxu0
      %v948 = vadd.f32 %v899, %v947
      %v949 = vpop.f32.mrf.mxu0
      %v950 = vadd.f32 %v901, %v949
      %951 = vmatmul.bf16.gmra.mxu0 %v863
      %v952 = vpop.f32.mrf.mxu0
      %v953 = vadd.f32 %v904, %v952
      %v954 = vpop.f32.mrf.mxu0
      %v955 = vadd.f32 %v906, %v954
      %956 = vmatmul.bf16.gmra.mxu0 %v866
      %v957 = vpop.f32.mrf.mxu0
      %v958 = vadd.f32 %v909, %v957
      %v959 = vpop.f32.mrf.mxu0
      %v960 = vadd.f32 %v911, %v959
      %961 = vmatmul.bf16.gmra.mxu0 %v869
      %v962 = vpop.f32.mrf.mxu0
      %v963 = vadd.f32 %v914, %v962
      %v964 = vpop.f32.mrf.mxu0
      %v965 = vadd.f32 %v916, %v964
      %966 = vmatmul.bf16.gmra.mxu0 %v872
      %v967 = vpop.f32.mrf.mxu0
      %v968 = vadd.f32 %v919, %v967
      %v969 = vpop.f32.mrf.mxu0
      %v970 = vadd.f32 %v921, %v969
      %971 = vdwg.mxu0
      %972 = vmatpush.bf16.msra.mxu0 %v806
      %973 = vmatpush.bf16.msra.mxu0 %v802
      %974 = vmatpush.bf16.msra.mxu0 %v798
      %975 = vmatpush.bf16.msra.mxu0 %v794
      %976 = vmatpush.bf16.msra.mxu0 %v790
      %977 = vmatpush.bf16.msra.mxu0 %v786
      %978 = vmatpush.bf16.msra.mxu0 %v782
      %979 = vmatpush.bf16.msra.mxu0 %v778
      %980 = vmatmul.bf16.gmra.mxu0 %v645
      %v981 = vpop.f32.mrf.mxu0
      %v982 = vadd.f32 0.0, %v981
      %v983 = vpop.f32.mrf.mxu0
      %v984 = vadd.f32 0.0, %v983
      %985 = vmatmul.bf16.gmra.mxu0 %v647
      %v986 = vpop.f32.mrf.mxu0
      %v987 = vadd.f32 0.0, %v986
      %v988 = vpop.f32.mrf.mxu0
      %v989 = vadd.f32 0.0, %v988
      %990 = vmatmul.bf16.gmra.mxu0 %v649
      %v991 = vpop.f32.mrf.mxu0
      %v992 = vadd.f32 0.0, %v991
      %v993 = vpop.f32.mrf.mxu0
      %v994 = vadd.f32 0.0, %v993
      %995 = vmatmul.bf16.gmra.mxu0 %v651
      %v996 = vpop.f32.mrf.mxu0
      %v997 = vadd.f32 0.0, %v996
      %v998 = vpop.f32.mrf.mxu0
      %v999 = vadd.f32 0.0, %v998
      %1000 = vmatmul.bf16.gmra.mxu0 %v653
      %v1001 = vpop.f32.mrf.mxu0
      %v1002 = vadd.f32 0.0, %v1001
      %v1003 = vpop.f32.mrf.mxu0
      %v1004 = vadd.f32 0.0, %v1003
      %1005 = vmatmul.bf16.gmra.mxu0 %v655
      %v1006 = vpop.f32.mrf.mxu0
      %v1007 = vadd.f32 0.0, %v1006
      %v1008 = vpop.f32.mrf.mxu0
      %v1009 = vadd.f32 0.0, %v1008
      %1010 = vmatmul.bf16.gmra.mxu0 %v657
      %v1011 = vpop.f32.mrf.mxu0
      %v1012 = vadd.f32 0.0, %v1011
      %v1013 = vpop.f32.mrf.mxu0
      %v1014 = vadd.f32 0.0, %v1013
      %1015 = vmatmul.bf16.gmra.mxu0 %v659
      %v1016 = vpop.f32.mrf.mxu0
      %v1017 = vadd.f32 0.0, %v1016
      %v1018 = vpop.f32.mrf.mxu0
      %v1019 = vadd.f32 0.0, %v1018
      %1020 = vdwg.mxu0
      %1021 = vmatpush.bf16.msra.mxu0 0
      %1022 = vmatpush.bf16.msra.mxu0 0
      %1023 = vmatpush.bf16.msra.mxu0 0
      %1024 = vmatpush.bf16.msra.mxu0 0
      %1025 = vmatpush.bf16.msra.mxu0 0
      %1026 = vmatpush.bf16.msra.mxu0 0
      %1027 = vmatpush.bf16.msra.mxu0 0
      %1028 = vmatpush.bf16.msra.mxu0 %v810
      %1029 = vmatmul.bf16.gmra.mxu0 %v851
      %v1030 = vpop.f32.mrf.mxu0
      %v1031 = vadd.f32 %v982, %v1030
      %v1032 = vpop.f32.mrf.mxu0
      %v1033 = vadd.f32 %v984, %v1032
      %1034 = vmatmul.bf16.gmra.mxu0 %v854
      %v1035 = vpop.f32.mrf.mxu0
      %v1036 = vadd.f32 %v987, %v1035
      %v1037 = vpop.f32.mrf.mxu0
      %v1038 = vadd.f32 %v989, %v1037
      %1039 = vmatmul.bf16.gmra.mxu0 %v857
      %v1040 = vpop.f32.mrf.mxu0
      %v1041 = vadd.f32 %v992, %v1040
      %v1042 = vpop.f32.mrf.mxu0
      %v1043 = vadd.f32 %v994, %v1042
      %1044 = vmatmul.bf16.gmra.mxu0 %v860
      %v1045 = vpop.f32.mrf.mxu0
      %v1046 = vadd.f32 %v997, %v1045
      %v1047 = vpop.f32.mrf.mxu0
      %v1048 = vadd.f32 %v999, %v1047
      %1049 = vmatmul.bf16.gmra.mxu0 %v863
      %v1050 = vpop.f32.mrf.mxu0
      %v1051 = vadd.f32 %v1002, %v1050
      %v1052 = vpop.f32.mrf.mxu0
      %v1053 = vadd.f32 %v1004, %v1052
      %1054 = vmatmul.bf16.gmra.mxu0 %v866
      %v1055 = vpop.f32.mrf.mxu0
      %v1056 = vadd.f32 %v1007, %v1055
      %v1057 = vpop.f32.mrf.mxu0
      %v1058 = vadd.f32 %v1009, %v1057
      %1059 = vmatmul.bf16.gmra.mxu0 %v869
      %v1060 = vpop.f32.mrf.mxu0
      %v1061 = vadd.f32 %v1012, %v1060
      %v1062 = vpop.f32.mrf.mxu0
      %v1063 = vadd.f32 %v1014, %v1062
      %1064 = vmatmul.bf16.gmra.mxu0 %v872
      %v1065 = vpop.f32.mrf.mxu0
      %v1066 = vadd.f32 %v1017, %v1065
      %v1067 = vpop.f32.mrf.mxu0
      %v1068 = vadd.f32 %v1019, %v1067
      %1069 = vdwg.mxu0
      %1070 = vmatpush.bf16.msra.mxu0 %v807
      %1071 = vmatpush.bf16.msra.mxu0 %v803
      %1072 = vmatpush.bf16.msra.mxu0 %v799
      %1073 = vmatpush.bf16.msra.mxu0 %v795
      %1074 = vmatpush.bf16.msra.mxu0 %v791
      %1075 = vmatpush.bf16.msra.mxu0 %v787
      %1076 = vmatpush.bf16.msra.mxu0 %v783
      %1077 = vmatpush.bf16.msra.mxu0 %v779
      %1078 = vmatmul.bf16.gmra.mxu0 %v645
      %v1079 = vpop.f32.mrf.mxu0
      %v1080 = vadd.f32 0.0, %v1079
      %v1081 = vpop.f32.mrf.mxu0
      %v1082 = vadd.f32 0.0, %v1081
      %1083 = vmatmul.bf16.gmra.mxu0 %v647
      %v1084 = vpop.f32.mrf.mxu0
      %v1085 = vadd.f32 0.0, %v1084
      %v1086 = vpop.f32.mrf.mxu0
      %v1087 = vadd.f32 0.0, %v1086
      %1088 = vmatmul.bf16.gmra.mxu0 %v649
      %v1089 = vpop.f32.mrf.mxu0
      %v1090 = vadd.f32 0.0, %v1089
      %v1091 = vpop.f32.mrf.mxu0
      %v1092 = vadd.f32 0.0, %v1091
      %1093 = vmatmul.bf16.gmra.mxu0 %v651
      %v1094 = vpop.f32.mrf.mxu0
      %v1095 = vadd.f32 0.0, %v1094
      %v1096 = vpop.f32.mrf.mxu0
      %v1097 = vadd.f32 0.0, %v1096
      %1098 = vmatmul.bf16.gmra.mxu0 %v653
      %v1099 = vpop.f32.mrf.mxu0
      %v1100 = vadd.f32 0.0, %v1099
      %v1101 = vpop.f32.mrf.mxu0
      %v1102 = vadd.f32 0.0, %v1101
      %1103 = vmatmul.bf16.gmra.mxu0 %v655
      %v1104 = vpop.f32.mrf.mxu0
      %v1105 = vadd.f32 0.0, %v1104
      %v1106 = vpop.f32.mrf.mxu0
      %v1107 = vadd.f32 0.0, %v1106
      %1108 = vmatmul.bf16.gmra.mxu0 %v657
      %v1109 = vpop.f32.mrf.mxu0
      %v1110 = vadd.f32 0.0, %v1109
      %v1111 = vpop.f32.mrf.mxu0
      %v1112 = vadd.f32 0.0, %v1111
      %1113 = vmatmul.bf16.gmra.mxu0 %v659
      %v1114 = vpop.f32.mrf.mxu0
      %v1115 = vadd.f32 0.0, %v1114
      %v1116 = vpop.f32.mrf.mxu0
      %v1117 = vadd.f32 0.0, %v1116
      %1118 = vdwg.mxu0
      %1119 = vmatpush.bf16.msra.mxu0 0
      %1120 = vmatpush.bf16.msra.mxu0 0
      %1121 = vmatpush.bf16.msra.mxu0 0
      %1122 = vmatpush.bf16.msra.mxu0 0
      %1123 = vmatpush.bf16.msra.mxu0 0
      %1124 = vmatpush.bf16.msra.mxu0 0
      %1125 = vmatpush.bf16.msra.mxu0 0
      %1126 = vmatpush.bf16.msra.mxu0 %v811
      %1127 = vmatmul.bf16.gmra.mxu0 %v851
      %v1128 = vpop.f32.mrf.mxu0
      %v1129 = vadd.f32 %v1080, %v1128
      %v1130 = vpop.f32.mrf.mxu0
      %v1131 = vadd.f32 %v1082, %v1130
      %1132 = vmatmul.bf16.gmra.mxu0 %v854
      %v1133 = vpop.f32.mrf.mxu0
      %v1134 = vadd.f32 %v1085, %v1133
      %v1135 = vpop.f32.mrf.mxu0
      %v1136 = vadd.f32 %v1087, %v1135
      %1137 = vmatmul.bf16.gmra.mxu0 %v857
      %v1138 = vpop.f32.mrf.mxu0
      %v1139 = vadd.f32 %v1090, %v1138
      %v1140 = vpop.f32.mrf.mxu0
      %v1141 = vadd.f32 %v1092, %v1140
      %1142 = vmatmul.bf16.gmra.mxu0 %v860
      %v1143 = vpop.f32.mrf.mxu0
      %v1144 = vadd.f32 %v1095, %v1143
      %v1145 = vpop.f32.mrf.mxu0
      %v1146 = vadd.f32 %v1097, %v1145
      %1147 = vmatmul.bf16.gmra.mxu0 %v863
      %v1148 = vpop.f32.mrf.mxu0
      %v1149 = vadd.f32 %v1100, %v1148
      %v1150 = vpop.f32.mrf.mxu0
      %v1151 = vadd.f32 %v1102, %v1150
      %1152 = vmatmul.bf16.gmra.mxu0 %v866
      %v1153 = vpop.f32.mrf.mxu0
      %v1154 = vadd.f32 %v1105, %v1153
      %v1155 = vpop.f32.mrf.mxu0
      %v1156 = vadd.f32 %v1107, %v1155
      %1157 = vmatmul.bf16.gmra.mxu0 %v869
      %v1158 = vpop.f32.mrf.mxu0
      %v1159 = vadd.f32 %v1110, %v1158
      %v1160 = vpop.f32.mrf.mxu0
      %v1161 = vadd.f32 %v1112, %v1160
      %1162 = vmatmul.bf16.gmra.mxu0 %v872
      %v1163 = vpop.f32.mrf.mxu0
      %v1164 = vadd.f32 %v1115, %v1163
      %v1165 = vpop.f32.mrf.mxu0
      %v1166 = vadd.f32 %v1117, %v1165
      %1167 = vdwg.mxu0
      %1168 = vmatpush.bf16.msra.mxu0 %v808
      %1169 = vmatpush.bf16.msra.mxu0 %v804
      %1170 = vmatpush.bf16.msra.mxu0 %v800
      %1171 = vmatpush.bf16.msra.mxu0 %v796
      %1172 = vmatpush.bf16.msra.mxu0 %v792
      %1173 = vmatpush.bf16.msra.mxu0 %v788
      %1174 = vmatpush.bf16.msra.mxu0 %v784
      %1175 = vmatpush.bf16.msra.mxu0 %v780
      %1176 = vmatmul.bf16.gmra.mxu0 %v645
      %v1177 = vpop.f32.mrf.mxu0
      %v1178 = vadd.f32 0.0, %v1177
      %v1179 = vpop.f32.mrf.mxu0
      %v1180 = vadd.f32 0.0, %v1179
      %1181 = vmatmul.bf16.gmra.mxu0 %v647
      %v1182 = vpop.f32.mrf.mxu0
      %v1183 = vadd.f32 0.0, %v1182
      %v1184 = vpop.f32.mrf.mxu0
      %v1185 = vadd.f32 0.0, %v1184
      %1186 = vmatmul.bf16.gmra.mxu0 %v649
      %v1187 = vpop.f32.mrf.mxu0
      %v1188 = vadd.f32 0.0, %v1187
      %v1189 = vpop.f32.mrf.mxu0
      %v1190 = vadd.f32 0.0, %v1189
      %1191 = vmatmul.bf16.gmra.mxu0 %v651
      %v1192 = vpop.f32.mrf.mxu0
      %v1193 = vadd.f32 0.0, %v1192
      %v1194 = vpop.f32.mrf.mxu0
      %v1195 = vadd.f32 0.0, %v1194
      %1196 = vmatmul.bf16.gmra.mxu0 %v653
      %v1197 = vpop.f32.mrf.mxu0
      %v1198 = vadd.f32 0.0, %v1197
      %v1199 = vpop.f32.mrf.mxu0
      %v1200 = vadd.f32 0.0, %v1199
      %1201 = vmatmul.bf16.gmra.mxu0 %v655
      %v1202 = vpop.f32.mrf.mxu0
      %v1203 = vadd.f32 0.0, %v1202
      %v1204 = vpop.f32.mrf.mxu0
      %v1205 = vadd.f32 0.0, %v1204
      %1206 = vmatmul.bf16.gmra.mxu0 %v657
      %v1207 = vpop.f32.mrf.mxu0
      %v1208 = vadd.f32 0.0, %v1207
      %v1209 = vpop.f32.mrf.mxu0
      %v1210 = vadd.f32 0.0, %v1209
      %1211 = vmatmul.bf16.gmra.mxu0 %v659
      %v1212 = vpop.f32.mrf.mxu0
      %v1213 = vadd.f32 0.0, %v1212
      %v1214 = vpop.f32.mrf.mxu0
      %v1215 = vadd.f32 0.0, %v1214
      %1216 = vdwg.mxu0
      %1217 = vmatpush.bf16.msra.mxu0 0
      %1218 = vmatpush.bf16.msra.mxu0 0
      %1219 = vmatpush.bf16.msra.mxu0 0
      %1220 = vmatpush.bf16.msra.mxu0 0
      %1221 = vmatpush.bf16.msra.mxu0 0
      %1222 = vmatpush.bf16.msra.mxu0 0
      %1223 = vmatpush.bf16.msra.mxu0 0
      %1224 = vmatpush.bf16.msra.mxu0 %v812
      %1225 = vmatmul.bf16.gmra.mxu0 %v851
      %v1226 = vpop.f32.mrf.mxu0
      %v1227 = vadd.f32 %v1178, %v1226
      %v1228 = vpop.f32.mrf.mxu0
      %v1229 = vadd.f32 %v1180, %v1228
      %1230 = vmatmul.bf16.gmra.mxu0 %v854
      %v1231 = vpop.f32.mrf.mxu0
      %v1232 = vadd.f32 %v1183, %v1231
      %v1233 = vpop.f32.mrf.mxu0
      %v1234 = vadd.f32 %v1185, %v1233
      %1235 = vmatmul.bf16.gmra.mxu0 %v857
      %v1236 = vpop.f32.mrf.mxu0
      %v1237 = vadd.f32 %v1188, %v1236
      %v1238 = vpop.f32.mrf.mxu0
      %v1239 = vadd.f32 %v1190, %v1238
      %1240 = vmatmul.bf16.gmra.mxu0 %v860
      %v1241 = vpop.f32.mrf.mxu0
      %v1242 = vadd.f32 %v1193, %v1241
      %v1243 = vpop.f32.mrf.mxu0
      %v1244 = vadd.f32 %v1195, %v1243
      %1245 = vmatmul.bf16.gmra.mxu0 %v863
      %v1246 = vpop.f32.mrf.mxu0
      %v1247 = vadd.f32 %v1198, %v1246
      %v1248 = vpop.f32.mrf.mxu0
      %v1249 = vadd.f32 %v1200, %v1248
      %1250 = vmatmul.bf16.gmra.mxu0 %v866
      %v1251 = vpop.f32.mrf.mxu0
      %v1252 = vadd.f32 %v1203, %v1251
      %v1253 = vpop.f32.mrf.mxu0
      %v1254 = vadd.f32 %v1205, %v1253
      %1255 = vmatmul.bf16.gmra.mxu0 %v869
      %v1256 = vpop.f32.mrf.mxu0
      %v1257 = vadd.f32 %v1208, %v1256
      %v1258 = vpop.f32.mrf.mxu0
      %v1259 = vadd.f32 %v1210, %v1258
      %1260 = vmatmul.bf16.gmra.mxu0 %v872
      %v1261 = vpop.f32.mrf.mxu0
      %v1262 = vadd.f32 %v1213, %v1261
      %v1263 = vpop.f32.mrf.mxu0
      %v1264 = vadd.f32 %v1215, %v1263
      %1265 = vdwg.mxu0
      %v1282 = vunpack.c.l.b16 %v321
      %v1283 = vunpack.c.h.b16 %v321
      %v1284 = vunpack.c.l.b16 %v322
      %v1285 = vunpack.c.h.b16 %v322
      %v1286 = vunpack.c.l.b16 %v323
      %v1287 = vunpack.c.h.b16 %v323
      %v1288 = vunpack.c.l.b16 %v324
      %v1289 = vunpack.c.h.b16 %v324
      %v1290 = vunpack.c.l.b16 %v325
      %v1291 = vunpack.c.h.b16 %v325
      %v1292 = vunpack.c.l.b16 %v326
      %v1293 = vunpack.c.h.b16 %v326
      %v1294 = vunpack.c.l.b16 %v327
      %v1295 = vunpack.c.h.b16 %v327
      %v1296 = vunpack.c.l.b16 %v328
      %v1297 = vunpack.c.h.b16 %v328
      %v1298 = vunpack.c.l.b16 %v329
      %v1299 = vunpack.c.h.b16 %v329
      %v1300 = vunpack.c.l.b16 %v330
      %v1301 = vunpack.c.h.b16 %v330
      %v1302 = vunpack.c.l.b16 %v331
      %v1303 = vunpack.c.h.b16 %v331
      %v1304 = vunpack.c.l.b16 %v332
      %v1305 = vunpack.c.h.b16 %v332
      %v1306 = vunpack.c.l.b16 %v333
      %v1307 = vunpack.c.h.b16 %v333
      %v1308 = vunpack.c.l.b16 %v334
      %v1309 = vunpack.c.h.b16 %v334
      %v1310 = vunpack.c.l.b16 %v335
      %v1311 = vunpack.c.h.b16 %v335
      %v1312 = vunpack.c.l.b16 %v336
      %v1313 = vunpack.c.h.b16 %v336
      %v1314 = vpack.c.b16 %v1284, %v1282
      %v1315 = vpack.c.b16 %v1285, %v1283
      %v1316 = vpack.c.b16 %v1288, %v1286
      %v1317 = vpack.c.b16 %v1289, %v1287
      %v1318 = vpack.c.b16 %v1292, %v1290
      %v1319 = vpack.c.b16 %v1293, %v1291
      %v1320 = vpack.c.b16 %v1296, %v1294
      %v1321 = vpack.c.b16 %v1297, %v1295
      %v1322 = vpack.c.b16 %v1300, %v1298
      %v1323 = vpack.c.b16 %v1301, %v1299
      %v1324 = vpack.c.b16 %v1304, %v1302
      %v1325 = vpack.c.b16 %v1305, %v1303
      %v1326 = vpack.c.b16 %v1308, %v1306
      %v1327 = vpack.c.b16 %v1309, %v1307
      %v1328 = vpack.c.b16 %v1312, %v1310
      %v1329 = vpack.c.b16 %v1313, %v1311
      %v1374 = vunpack.c.l.b16 %v337
      %v1375 = vunpack.c.h.b16 %v337
      %v1376 = vunpack.c.l.b16 %v338
      %v1377 = vunpack.c.h.b16 %v338
      %v1378 = vunpack.c.l.b16 %v339
      %v1379 = vunpack.c.h.b16 %v339
      %v1380 = vunpack.c.l.b16 %v340
      %v1381 = vunpack.c.h.b16 %v340
      %v1382 = vunpack.c.l.b16 %v341
      %v1383 = vunpack.c.h.b16 %v341
      %v1384 = vunpack.c.l.b16 %v342
      %v1385 = vunpack.c.h.b16 %v342
      %v1386 = vunpack.c.l.b16 %v343
      %v1387 = vunpack.c.h.b16 %v343
      %v1388 = vunpack.c.l.b16 %v344
      %v1389 = vunpack.c.h.b16 %v344
      %v1390 = vunpack.c.l.b16 %v345
      %v1391 = vunpack.c.h.b16 %v345
      %v1392 = vunpack.c.l.b16 %v346
      %v1393 = vunpack.c.h.b16 %v346
      %v1394 = vunpack.c.l.b16 %v347
      %v1395 = vunpack.c.h.b16 %v347
      %v1396 = vunpack.c.l.b16 %v348
      %v1397 = vunpack.c.h.b16 %v348
      %v1398 = vunpack.c.l.b16 %v349
      %v1399 = vunpack.c.h.b16 %v349
      %v1400 = vunpack.c.l.b16 %v350
      %v1401 = vunpack.c.h.b16 %v350
      %v1402 = vunpack.c.l.b16 %v351
      %v1403 = vunpack.c.h.b16 %v351
      %v1404 = vunpack.c.l.b16 %v352
      %v1405 = vunpack.c.h.b16 %v352
      %v1406 = vunpack.c.l.b16 %v353
      %v1407 = vunpack.c.h.b16 %v353
      %v1408 = vunpack.c.l.b16 %v354
      %v1409 = vunpack.c.h.b16 %v354
      %v1410 = vunpack.c.l.b16 %v355
      %v1411 = vunpack.c.h.b16 %v355
      %v1412 = vunpack.c.l.b16 %v356
      %v1413 = vunpack.c.h.b16 %v356
      %v1414 = vunpack.c.l.b16 %v357
      %v1415 = vunpack.c.h.b16 %v357
      %v1416 = vunpack.c.l.b16 %v358
      %v1417 = vunpack.c.h.b16 %v358
      %v1418 = vunpack.c.l.b16 %v359
      %v1419 = vunpack.c.h.b16 %v359
      %v1420 = vunpack.c.l.b16 %v360
      %v1421 = vunpack.c.h.b16 %v360
      %v1422 = vunpack.c.l.b16 %v361
      %v1423 = vunpack.c.h.b16 %v361
      %v1424 = vunpack.c.l.b16 %v362
      %v1425 = vunpack.c.h.b16 %v362
      %v1426 = vunpack.c.l.b16 %v363
      %v1427 = vunpack.c.h.b16 %v363
      %v1428 = vunpack.c.l.b16 %v364
      %v1429 = vunpack.c.h.b16 %v364
      %v1430 = vunpack.c.l.b16 %v365
      %v1431 = vunpack.c.h.b16 %v365
      %v1432 = vunpack.c.l.b16 %v366
      %v1433 = vunpack.c.h.b16 %v366
      %v1434 = vunpack.c.l.b16 %v367
      %v1435 = vunpack.c.h.b16 %v367
      %v1436 = vunpack.c.l.b16 %v368
      %v1437 = vunpack.c.h.b16 %v368
      %v1438 = vunpack.c.l.b16 %v369
      %v1439 = vunpack.c.h.b16 %v369
      %v1440 = vunpack.c.l.b16 %v370
      %v1441 = vunpack.c.h.b16 %v370
      %v1442 = vunpack.c.l.b16 %v371
      %v1443 = vunpack.c.h.b16 %v371
      %v1444 = vunpack.c.l.b16 %v372
      %v1445 = vunpack.c.h.b16 %v372
      %v1446 = vpack.c.b16 %v1378, %v1374
      %v1447 = vpack.c.b16 %v1379, %v1375
      %v1448 = vpack.c.b16 %v1380, %v1376
      %v1449 = vpack.c.b16 %v1381, %v1377
      %v1450 = vpack.c.b16 %v1386, %v1382
      %v1451 = vpack.c.b16 %v1387, %v1383
      %v1452 = vpack.c.b16 %v1388, %v1384
      %v1453 = vpack.c.b16 %v1389, %v1385
      %v1454 = vpack.c.b16 %v1394, %v1390
      %v1455 = vpack.c.b16 %v1395, %v1391
      %v1456 = vpack.c.b16 %v1396, %v1392
      %v1457 = vpack.c.b16 %v1397, %v1393
      %v1458 = vpack.c.b16 %v1402, %v1398
      %v1459 = vpack.c.b16 %v1403, %v1399
      %v1460 = vpack.c.b16 %v1404, %v1400
      %v1461 = vpack.c.b16 %v1405, %v1401
      %v1462 = vpack.c.b16 %v1410, %v1406
      %v1463 = vpack.c.b16 %v1411, %v1407
      %v1464 = vpack.c.b16 %v1412, %v1408
      %v1465 = vpack.c.b16 %v1413, %v1409
      %v1466 = vpack.c.b16 %v1418, %v1414
      %v1467 = vpack.c.b16 %v1419, %v1415
      %v1468 = vpack.c.b16 %v1420, %v1416
      %v1469 = vpack.c.b16 %v1421, %v1417
      %v1470 = vpack.c.b16 %v1426, %v1422
      %v1471 = vpack.c.b16 %v1427, %v1423
      %v1472 = vpack.c.b16 %v1428, %v1424
      %v1473 = vpack.c.b16 %v1429, %v1425
      %v1474 = vpack.c.b16 %v1434, %v1430
      %v1475 = vpack.c.b16 %v1435, %v1431
      %v1476 = vpack.c.b16 %v1436, %v1432
      %v1477 = vpack.c.b16 %v1437, %v1433
      %v1478 = vpack.c.b16 %v1442, %v1438
      %v1479 = vpack.c.b16 %v1443, %v1439
      %v1480 = vpack.c.b16 %v1444, %v1440
      %v1481 = vpack.c.b16 %v1445, %v1441
      %v1519 = vsel %vm849, %v1315, 0
      %v1522 = vsel %vm849, %v1317, 0
      %v1525 = vsel %vm849, %v1319, 0
      %v1528 = vsel %vm849, %v1321, 0
      %v1531 = vsel %vm849, %v1323, 0
      %v1534 = vsel %vm849, %v1325, 0
      %v1537 = vsel %vm849, %v1327, 0
      %v1540 = vsel %vm849, %v1329, 0
      %1542 = vmatpush.bf16.msra.mxu0 %v1474
      %1543 = vmatpush.bf16.msra.mxu0 %v1470
      %1544 = vmatpush.bf16.msra.mxu0 %v1466
      %1545 = vmatpush.bf16.msra.mxu0 %v1462
      %1546 = vmatpush.bf16.msra.mxu0 %v1458
      %1547 = vmatpush.bf16.msra.mxu0 %v1454
      %1548 = vmatpush.bf16.msra.mxu0 %v1450
      %1549 = vmatpush.bf16.msra.mxu0 %v1446
      %1550 = vmatmul.bf16.gmra.mxu0 %v1314
      %v1551 = vpop.f32.mrf.mxu0
      %v1552 = vadd.f32 %v933, %v1551
      %v1553 = vpop.f32.mrf.mxu0
      %v1554 = vadd.f32 %v935, %v1553
      %1555 = vmatmul.bf16.gmra.mxu0 %v1316
      %v1556 = vpop.f32.mrf.mxu0
      %v1557 = vadd.f32 %v938, %v1556
      %v1558 = vpop.f32.mrf.mxu0
      %v1559 = vadd.f32 %v940, %v1558
      %1560 = vmatmul.bf16.gmra.mxu0 %v1318
      %v1561 = vpop.f32.mrf.mxu0
      %v1562 = vadd.f32 %v943, %v1561
      %v1563 = vpop.f32.mrf.mxu0
      %v1564 = vadd.f32 %v945, %v1563
      %1565 = vmatmul.bf16.gmra.mxu0 %v1320
      %v1566 = vpop.f32.mrf.mxu0
      %v1567 = vadd.f32 %v948, %v1566
      %v1568 = vpop.f32.mrf.mxu0
      %v1569 = vadd.f32 %v950, %v1568
      %1570 = vmatmul.bf16.gmra.mxu0 %v1322
      %v1571 = vpop.f32.mrf.mxu0
      %v1572 = vadd.f32 %v953, %v1571
      %v1573 = vpop.f32.mrf.mxu0
      %v1574 = vadd.f32 %v955, %v1573
      %1575 = vmatmul.bf16.gmra.mxu0 %v1324
      %v1576 = vpop.f32.mrf.mxu0
      %v1577 = vadd.f32 %v958, %v1576
      %v1578 = vpop.f32.mrf.mxu0
      %v1579 = vadd.f32 %v960, %v1578
      %1580 = vmatmul.bf16.gmra.mxu0 %v1326
      %v1581 = vpop.f32.mrf.mxu0
      %v1582 = vadd.f32 %v963, %v1581
      %v1583 = vpop.f32.mrf.mxu0
      %v1584 = vadd.f32 %v965, %v1583
      %1585 = vmatmul.bf16.gmra.mxu0 %v1328
      %v1586 = vpop.f32.mrf.mxu0
      %v1587 = vadd.f32 %v968, %v1586
      %v1588 = vpop.f32.mrf.mxu0
      %v1589 = vadd.f32 %v970, %v1588
      %1590 = vdwg.mxu0
      %1591 = vmatpush.bf16.msra.mxu0 0
      %1592 = vmatpush.bf16.msra.mxu0 0
      %1593 = vmatpush.bf16.msra.mxu0 0
      %1594 = vmatpush.bf16.msra.mxu0 0
      %1595 = vmatpush.bf16.msra.mxu0 0
      %1596 = vmatpush.bf16.msra.mxu0 0
      %1597 = vmatpush.bf16.msra.mxu0 0
      %1598 = vmatpush.bf16.msra.mxu0 %v1478
      %1599 = vmatmul.bf16.gmra.mxu0 %v1519
      %v1600 = vpop.f32.mrf.mxu0
      %v1601 = vadd.f32 %v1552, %v1600
      %v1602 = vpop.f32.mrf.mxu0
      %v1603 = vadd.f32 %v1554, %v1602
      %1604 = vmatmul.bf16.gmra.mxu0 %v1522
      %v1605 = vpop.f32.mrf.mxu0
      %v1606 = vadd.f32 %v1557, %v1605
      %v1607 = vpop.f32.mrf.mxu0
      %v1608 = vadd.f32 %v1559, %v1607
      %1609 = vmatmul.bf16.gmra.mxu0 %v1525
      %v1610 = vpop.f32.mrf.mxu0
      %v1611 = vadd.f32 %v1562, %v1610
      %v1612 = vpop.f32.mrf.mxu0
      %v1613 = vadd.f32 %v1564, %v1612
      %1614 = vmatmul.bf16.gmra.mxu0 %v1528
      %v1615 = vpop.f32.mrf.mxu0
      %v1616 = vadd.f32 %v1567, %v1615
      %v1617 = vpop.f32.mrf.mxu0
      %v1618 = vadd.f32 %v1569, %v1617
      %1619 = vmatmul.bf16.gmra.mxu0 %v1531
      %v1620 = vpop.f32.mrf.mxu0
      %v1621 = vadd.f32 %v1572, %v1620
      %v1622 = vpop.f32.mrf.mxu0
      %v1623 = vadd.f32 %v1574, %v1622
      %1624 = vmatmul.bf16.gmra.mxu0 %v1534
      %v1625 = vpop.f32.mrf.mxu0
      %v1626 = vadd.f32 %v1577, %v1625
      %v1627 = vpop.f32.mrf.mxu0
      %v1628 = vadd.f32 %v1579, %v1627
      %1629 = vmatmul.bf16.gmra.mxu0 %v1537
      %v1630 = vpop.f32.mrf.mxu0
      %v1631 = vadd.f32 %v1582, %v1630
      %v1632 = vpop.f32.mrf.mxu0
      %v1633 = vadd.f32 %v1584, %v1632
      %1634 = vmatmul.bf16.gmra.mxu0 %v1540
      %v1635 = vpop.f32.mrf.mxu0
      %v1636 = vadd.f32 %v1587, %v1635
      %v1637 = vpop.f32.mrf.mxu0
      %v1638 = vadd.f32 %v1589, %v1637
      %1639 = vdwg.mxu0
      %1640 = vmatpush.bf16.msra.mxu0 %v1475
      %1641 = vmatpush.bf16.msra.mxu0 %v1471
      %1642 = vmatpush.bf16.msra.mxu0 %v1467
      %1643 = vmatpush.bf16.msra.mxu0 %v1463
      %1644 = vmatpush.bf16.msra.mxu0 %v1459
      %1645 = vmatpush.bf16.msra.mxu0 %v1455
      %1646 = vmatpush.bf16.msra.mxu0 %v1451
      %1647 = vmatpush.bf16.msra.mxu0 %v1447
      %1648 = vmatmul.bf16.gmra.mxu0 %v1314
      %v1649 = vpop.f32.mrf.mxu0
      %v1650 = vadd.f32 %v1031, %v1649
      %v1651 = vpop.f32.mrf.mxu0
      %v1652 = vadd.f32 %v1033, %v1651
      %1653 = vmatmul.bf16.gmra.mxu0 %v1316
      %v1654 = vpop.f32.mrf.mxu0
      %v1655 = vadd.f32 %v1036, %v1654
      %v1656 = vpop.f32.mrf.mxu0
      %v1657 = vadd.f32 %v1038, %v1656
      %1658 = vmatmul.bf16.gmra.mxu0 %v1318
      %v1659 = vpop.f32.mrf.mxu0
      %v1660 = vadd.f32 %v1041, %v1659
      %v1661 = vpop.f32.mrf.mxu0
      %v1662 = vadd.f32 %v1043, %v1661
      %1663 = vmatmul.bf16.gmra.mxu0 %v1320
      %v1664 = vpop.f32.mrf.mxu0
      %v1665 = vadd.f32 %v1046, %v1664
      %v1666 = vpop.f32.mrf.mxu0
      %v1667 = vadd.f32 %v1048, %v1666
      %1668 = vmatmul.bf16.gmra.mxu0 %v1322
      %v1669 = vpop.f32.mrf.mxu0
      %v1670 = vadd.f32 %v1051, %v1669
      %v1671 = vpop.f32.mrf.mxu0
      %v1672 = vadd.f32 %v1053, %v1671
      %1673 = vmatmul.bf16.gmra.mxu0 %v1324
      %v1674 = vpop.f32.mrf.mxu0
      %v1675 = vadd.f32 %v1056, %v1674
      %v1676 = vpop.f32.mrf.mxu0
      %v1677 = vadd.f32 %v1058, %v1676
      %1678 = vmatmul.bf16.gmra.mxu0 %v1326
      %v1679 = vpop.f32.mrf.mxu0
      %v1680 = vadd.f32 %v1061, %v1679
      %v1681 = vpop.f32.mrf.mxu0
      %v1682 = vadd.f32 %v1063, %v1681
      %1683 = vmatmul.bf16.gmra.mxu0 %v1328
      %v1684 = vpop.f32.mrf.mxu0
      %v1685 = vadd.f32 %v1066, %v1684
      %v1686 = vpop.f32.mrf.mxu0
      %v1687 = vadd.f32 %v1068, %v1686
      %1688 = vdwg.mxu0
      %1689 = vmatpush.bf16.msra.mxu0 0
      %1690 = vmatpush.bf16.msra.mxu0 0
      %1691 = vmatpush.bf16.msra.mxu0 0
      %1692 = vmatpush.bf16.msra.mxu0 0
      %1693 = vmatpush.bf16.msra.mxu0 0
      %1694 = vmatpush.bf16.msra.mxu0 0
      %1695 = vmatpush.bf16.msra.mxu0 0
      %1696 = vmatpush.bf16.msra.mxu0 %v1479
      %1697 = vmatmul.bf16.gmra.mxu0 %v1519
      %v1698 = vpop.f32.mrf.mxu0
      %v1699 = vadd.f32 %v1650, %v1698
      %v1700 = vpop.f32.mrf.mxu0
      %v1701 = vadd.f32 %v1652, %v1700
      %1702 = vmatmul.bf16.gmra.mxu0 %v1522
      %v1703 = vpop.f32.mrf.mxu0
      %v1704 = vadd.f32 %v1655, %v1703
      %v1705 = vpop.f32.mrf.mxu0
      %v1706 = vadd.f32 %v1657, %v1705
      %1707 = vmatmul.bf16.gmra.mxu0 %v1525
      %v1708 = vpop.f32.mrf.mxu0
      %v1709 = vadd.f32 %v1660, %v1708
      %v1710 = vpop.f32.mrf.mxu0
      %v1711 = vadd.f32 %v1662, %v1710
      %1712 = vmatmul.bf16.gmra.mxu0 %v1528
      %v1713 = vpop.f32.mrf.mxu0
      %v1714 = vadd.f32 %v1665, %v1713
      %v1715 = vpop.f32.mrf.mxu0
      %v1716 = vadd.f32 %v1667, %v1715
      %1717 = vmatmul.bf16.gmra.mxu0 %v1531
      %v1718 = vpop.f32.mrf.mxu0
      %v1719 = vadd.f32 %v1670, %v1718
      %v1720 = vpop.f32.mrf.mxu0
      %v1721 = vadd.f32 %v1672, %v1720
      %1722 = vmatmul.bf16.gmra.mxu0 %v1534
      %v1723 = vpop.f32.mrf.mxu0
      %v1724 = vadd.f32 %v1675, %v1723
      %v1725 = vpop.f32.mrf.mxu0
      %v1726 = vadd.f32 %v1677, %v1725
      %1727 = vmatmul.bf16.gmra.mxu0 %v1537
      %v1728 = vpop.f32.mrf.mxu0
      %v1729 = vadd.f32 %v1680, %v1728
      %v1730 = vpop.f32.mrf.mxu0
      %v1731 = vadd.f32 %v1682, %v1730
      %1732 = vmatmul.bf16.gmra.mxu0 %v1540
      %v1733 = vpop.f32.mrf.mxu0
      %v1734 = vadd.f32 %v1685, %v1733
      %v1735 = vpop.f32.mrf.mxu0
      %v1736 = vadd.f32 %v1687, %v1735
      %1737 = vdwg.mxu0
      %1738 = vmatpush.bf16.msra.mxu0 %v1476
      %1739 = vmatpush.bf16.msra.mxu0 %v1472
      %1740 = vmatpush.bf16.msra.mxu0 %v1468
      %1741 = vmatpush.bf16.msra.mxu0 %v1464
      %1742 = vmatpush.bf16.msra.mxu0 %v1460
      %1743 = vmatpush.bf16.msra.mxu0 %v1456
      %1744 = vmatpush.bf16.msra.mxu0 %v1452
      %1745 = vmatpush.bf16.msra.mxu0 %v1448
      %1746 = vmatmul.bf16.gmra.mxu0 %v1314
      %v1747 = vpop.f32.mrf.mxu0
      %v1748 = vadd.f32 %v1129, %v1747
      %v1749 = vpop.f32.mrf.mxu0
      %v1750 = vadd.f32 %v1131, %v1749
      %1751 = vmatmul.bf16.gmra.mxu0 %v1316
      %v1752 = vpop.f32.mrf.mxu0
      %v1753 = vadd.f32 %v1134, %v1752
      %v1754 = vpop.f32.mrf.mxu0
      %v1755 = vadd.f32 %v1136, %v1754
      %1756 = vmatmul.bf16.gmra.mxu0 %v1318
      %v1757 = vpop.f32.mrf.mxu0
      %v1758 = vadd.f32 %v1139, %v1757
      %v1759 = vpop.f32.mrf.mxu0
      %v1760 = vadd.f32 %v1141, %v1759
      %1761 = vmatmul.bf16.gmra.mxu0 %v1320
      %v1762 = vpop.f32.mrf.mxu0
      %v1763 = vadd.f32 %v1144, %v1762
      %v1764 = vpop.f32.mrf.mxu0
      %v1765 = vadd.f32 %v1146, %v1764
      %1766 = vmatmul.bf16.gmra.mxu0 %v1322
      %v1767 = vpop.f32.mrf.mxu0
      %v1768 = vadd.f32 %v1149, %v1767
      %v1769 = vpop.f32.mrf.mxu0
      %v1770 = vadd.f32 %v1151, %v1769
      %1771 = vmatmul.bf16.gmra.mxu0 %v1324
      %v1772 = vpop.f32.mrf.mxu0
      %v1773 = vadd.f32 %v1154, %v1772
      %v1774 = vpop.f32.mrf.mxu0
      %v1775 = vadd.f32 %v1156, %v1774
      %1776 = vmatmul.bf16.gmra.mxu0 %v1326
      %v1777 = vpop.f32.mrf.mxu0
      %v1778 = vadd.f32 %v1159, %v1777
      %v1779 = vpop.f32.mrf.mxu0
      %v1780 = vadd.f32 %v1161, %v1779
      %1781 = vmatmul.bf16.gmra.mxu0 %v1328
      %v1782 = vpop.f32.mrf.mxu0
      %v1783 = vadd.f32 %v1164, %v1782
      %v1784 = vpop.f32.mrf.mxu0
      %v1785 = vadd.f32 %v1166, %v1784
      %1786 = vdwg.mxu0
      %1787 = vmatpush.bf16.msra.mxu0 0
      %1788 = vmatpush.bf16.msra.mxu0 0
      %1789 = vmatpush.bf16.msra.mxu0 0
      %1790 = vmatpush.bf16.msra.mxu0 0
      %1791 = vmatpush.bf16.msra.mxu0 0
      %1792 = vmatpush.bf16.msra.mxu0 0
      %1793 = vmatpush.bf16.msra.mxu0 0
      %1794 = vmatpush.bf16.msra.mxu0 %v1480
      %1795 = vmatmul.bf16.gmra.mxu0 %v1519
      %v1796 = vpop.f32.mrf.mxu0
      %v1797 = vadd.f32 %v1748, %v1796
      %v1798 = vpop.f32.mrf.mxu0
      %v1799 = vadd.f32 %v1750, %v1798
      %1800 = vmatmul.bf16.gmra.mxu0 %v1522
      %v1801 = vpop.f32.mrf.mxu0
      %v1802 = vadd.f32 %v1753, %v1801
      %v1803 = vpop.f32.mrf.mxu0
      %v1804 = vadd.f32 %v1755, %v1803
      %1805 = vmatmul.bf16.gmra.mxu0 %v1525
      %v1806 = vpop.f32.mrf.mxu0
      %v1807 = vadd.f32 %v1758, %v1806
      %v1808 = vpop.f32.mrf.mxu0
      %v1809 = vadd.f32 %v1760, %v1808
      %1810 = vmatmul.bf16.gmra.mxu0 %v1528
      %v1811 = vpop.f32.mrf.mxu0
      %v1812 = vadd.f32 %v1763, %v1811
      %v1813 = vpop.f32.mrf.mxu0
      %v1814 = vadd.f32 %v1765, %v1813
      %1815 = vmatmul.bf16.gmra.mxu0 %v1531
      %v1816 = vpop.f32.mrf.mxu0
      %v1817 = vadd.f32 %v1768, %v1816
      %v1818 = vpop.f32.mrf.mxu0
      %v1819 = vadd.f32 %v1770, %v1818
      %1820 = vmatmul.bf16.gmra.mxu0 %v1534
      %v1821 = vpop.f32.mrf.mxu0
      %v1822 = vadd.f32 %v1773, %v1821
      %v1823 = vpop.f32.mrf.mxu0
      %v1824 = vadd.f32 %v1775, %v1823
      %1825 = vmatmul.bf16.gmra.mxu0 %v1537
      %v1826 = vpop.f32.mrf.mxu0
      %v1827 = vadd.f32 %v1778, %v1826
      %v1828 = vpop.f32.mrf.mxu0
      %v1829 = vadd.f32 %v1780, %v1828
      %1830 = vmatmul.bf16.gmra.mxu0 %v1540
      %v1831 = vpop.f32.mrf.mxu0
      %v1832 = vadd.f32 %v1783, %v1831
      %v1833 = vpop.f32.mrf.mxu0
      %v1834 = vadd.f32 %v1785, %v1833
      %1835 = vdwg.mxu0
      %1836 = vmatpush.bf16.msra.mxu0 %v1477
      %1837 = vmatpush.bf16.msra.mxu0 %v1473
      %1838 = vmatpush.bf16.msra.mxu0 %v1469
      %1839 = vmatpush.bf16.msra.mxu0 %v1465
      %1840 = vmatpush.bf16.msra.mxu0 %v1461
      %1841 = vmatpush.bf16.msra.mxu0 %v1457
      %1842 = vmatpush.bf16.msra.mxu0 %v1453
      %1843 = vmatpush.bf16.msra.mxu0 %v1449
      %1844 = vmatmul.bf16.gmra.mxu0 %v1314
      %v1845 = vpop.f32.mrf.mxu0
      %v1846 = vadd.f32 %v1227, %v1845
      %v1847 = vpop.f32.mrf.mxu0
      %v1848 = vadd.f32 %v1229, %v1847
      %1849 = vmatmul.bf16.gmra.mxu0 %v1316
      %v1850 = vpop.f32.mrf.mxu0
      %v1851 = vadd.f32 %v1232, %v1850
      %v1852 = vpop.f32.mrf.mxu0
      %v1853 = vadd.f32 %v1234, %v1852
      %1854 = vmatmul.bf16.gmra.mxu0 %v1318
      %v1855 = vpop.f32.mrf.mxu0
      %v1856 = vadd.f32 %v1237, %v1855
      %v1857 = vpop.f32.mrf.mxu0
      %v1858 = vadd.f32 %v1239, %v1857
      %1859 = vmatmul.bf16.gmra.mxu0 %v1320
      %v1860 = vpop.f32.mrf.mxu0
      %v1861 = vadd.f32 %v1242, %v1860
      %v1862 = vpop.f32.mrf.mxu0
      %v1863 = vadd.f32 %v1244, %v1862
      %1864 = vmatmul.bf16.gmra.mxu0 %v1322
      %v1865 = vpop.f32.mrf.mxu0
      %v1866 = vadd.f32 %v1247, %v1865
      %v1867 = vpop.f32.mrf.mxu0
      %v1868 = vadd.f32 %v1249, %v1867
      %1869 = vmatmul.bf16.gmra.mxu0 %v1324
      %v1870 = vpop.f32.mrf.mxu0
      %v1871 = vadd.f32 %v1252, %v1870
      %v1872 = vpop.f32.mrf.mxu0
      %v1873 = vadd.f32 %v1254, %v1872
      %1874 = vmatmul.bf16.gmra.mxu0 %v1326
      %v1875 = vpop.f32.mrf.mxu0
      %v1876 = vadd.f32 %v1257, %v1875
      %v1877 = vpop.f32.mrf.mxu0
      %v1878 = vadd.f32 %v1259, %v1877
      %1879 = vmatmul.bf16.gmra.mxu0 %v1328
      %v1880 = vpop.f32.mrf.mxu0
      %v1881 = vadd.f32 %v1262, %v1880
      %v1882 = vpop.f32.mrf.mxu0
      %v1883 = vadd.f32 %v1264, %v1882
      %1884 = vdwg.mxu0
      %1885 = vmatpush.bf16.msra.mxu0 0
      %1886 = vmatpush.bf16.msra.mxu0 0
      %1887 = vmatpush.bf16.msra.mxu0 0
      %1888 = vmatpush.bf16.msra.mxu0 0
      %1889 = vmatpush.bf16.msra.mxu0 0
      %1890 = vmatpush.bf16.msra.mxu0 0
      %1891 = vmatpush.bf16.msra.mxu0 0
      %1892 = vmatpush.bf16.msra.mxu0 %v1481
      %1893 = vmatmul.bf16.gmra.mxu0 %v1519
      %v1894 = vpop.f32.mrf.mxu0
      %v1895 = vadd.f32 %v1846, %v1894
      %v1896 = vpop.f32.mrf.mxu0
      %v1897 = vadd.f32 %v1848, %v1896
      %1898 = vmatmul.bf16.gmra.mxu0 %v1522
      %v1899 = vpop.f32.mrf.mxu0
      %v1900 = vadd.f32 %v1851, %v1899
      %v1901 = vpop.f32.mrf.mxu0
      %v1902 = vadd.f32 %v1853, %v1901
      %1903 = vmatmul.bf16.gmra.mxu0 %v1525
      %v1904 = vpop.f32.mrf.mxu0
      %v1905 = vadd.f32 %v1856, %v1904
      %v1906 = vpop.f32.mrf.mxu0
      %v1907 = vadd.f32 %v1858, %v1906
      %1908 = vmatmul.bf16.gmra.mxu0 %v1528
      %v1909 = vpop.f32.mrf.mxu0
      %v1910 = vadd.f32 %v1861, %v1909
      %v1911 = vpop.f32.mrf.mxu0
      %v1912 = vadd.f32 %v1863, %v1911
      %1913 = vmatmul.bf16.gmra.mxu0 %v1531
      %v1914 = vpop.f32.mrf.mxu0
      %v1915 = vadd.f32 %v1866, %v1914
      %v1916 = vpop.f32.mrf.mxu0
      %v1917 = vadd.f32 %v1868, %v1916
      %1918 = vmatmul.bf16.gmra.mxu0 %v1534
      %v1919 = vpop.f32.mrf.mxu0
      %v1920 = vadd.f32 %v1871, %v1919
      %v1921 = vpop.f32.mrf.mxu0
      %v1922 = vadd.f32 %v1873, %v1921
      %1923 = vmatmul.bf16.gmra.mxu0 %v1537
      %v1924 = vpop.f32.mrf.mxu0
      %v1925 = vadd.f32 %v1876, %v1924
      %v1926 = vpop.f32.mrf.mxu0
      %v1927 = vadd.f32 %v1878, %v1926
      %1928 = vmatmul.bf16.gmra.mxu0 %v1540
      %v1929 = vpop.f32.mrf.mxu0
      %v1930 = vadd.f32 %v1881, %v1929
      %v1931 = vpop.f32.mrf.mxu0
      %v1932 = vadd.f32 %v1883, %v1931
      %1933 = vdwg.mxu0
      %v1934 = vld [vmem:[%s310] sm:$0xee]
      %v1935 = vld [vmem:[%s310 + $0x18] sm:$0xee]
      %v1936 = vld [vmem:[%s310 + $0x30] sm:$0xee]
      %v1937 = vld [vmem:[%s310 + $0x48] sm:$0xee]
      %v1938 = vld [vmem:[%s310 + $0x60] sm:$0xee]
      %v1939 = vld [vmem:[%s310 + $0x78] sm:$0xee]
      %v1940 = vld [vmem:[%s310 + $0x90] sm:$0xee]
      %v1941 = vld [vmem:[%s310 + $0xa8] sm:$0xee]
      %vm1958 = vcmask 1042432
      %vm1959 = vcmask 1046532
      %vm1960 = vmor %vm1958, %vm1959
      %v1961 = vrot.slane %v1934, 5
      %v1962 = vrot.slane %v1961, 4
      %v1963 = vrot.slane %v322, 5
      %v1964 = vsel %vm1960, %v1962, %v1963
      %v1965 = vrot.slane %v1963, 4
      %v1966 = vrot.slane %v373, 5
      %v1967 = vsel %vm1960, %v1965, %v1966
      %v1968 = vrot.slane %v1935, 5
      %v1969 = vrot.slane %v1968, 4
      %v1970 = vrot.slane %v324, 5
      %v1971 = vsel %vm1960, %v1969, %v1970
      %v1972 = vrot.slane %v1970, 4
      %v1973 = vrot.slane %v374, 5
      %v1974 = vsel %vm1960, %v1972, %v1973
      %v1975 = vrot.slane %v1936, 5
      %v1976 = vrot.slane %v1975, 4
      %v1977 = vrot.slane %v326, 5
      %v1978 = vsel %vm1960, %v1976, %v1977
      %v1979 = vrot.slane %v1977, 4
      %v1980 = vrot.slane %v375, 5
      %v1981 = vsel %vm1960, %v1979, %v1980
      %v1982 = vrot.slane %v1937, 5
      %v1983 = vrot.slane %v1982, 4
      %v1984 = vrot.slane %v328, 5
      %v1985 = vsel %vm1960, %v1983, %v1984
      %v1986 = vrot.slane %v1984, 4
      %v1987 = vrot.slane %v376, 5
      %v1988 = vsel %vm1960, %v1986, %v1987
      %v1989 = vrot.slane %v1938, 5
      %v1990 = vrot.slane %v1989, 4
      %v1991 = vrot.slane %v330, 5
      %v1992 = vsel %vm1960, %v1990, %v1991
      %v1993 = vrot.slane %v1991, 4
      %v1994 = vrot.slane %v377, 5
      %v1995 = vsel %vm1960, %v1993, %v1994
      %v1996 = vrot.slane %v1939, 5
      %v1997 = vrot.slane %v1996, 4
      %v1998 = vrot.slane %v332, 5
      %v1999 = vsel %vm1960, %v1997, %v1998
      %v2000 = vrot.slane %v1998, 4
      %v2001 = vrot.slane %v378, 5
      %v2002 = vsel %vm1960, %v2000, %v2001
      %v2003 = vrot.slane %v1940, 5
      %v2004 = vrot.slane %v2003, 4
      %v2005 = vrot.slane %v334, 5
      %v2006 = vsel %vm1960, %v2004, %v2005
      %v2007 = vrot.slane %v2005, 4
      %v2008 = vrot.slane %v379, 5
      %v2009 = vsel %vm1960, %v2007, %v2008
      %v2010 = vrot.slane %v1941, 5
      %v2011 = vrot.slane %v2010, 4
      %v2012 = vrot.slane %v336, 5
      %v2013 = vsel %vm1960, %v2011, %v2012
      %v2014 = vrot.slane %v2012, 4
      %v2015 = vrot.slane %v380, 5
      %v2016 = vsel %vm1960, %v2014, %v2015
      %s2017 = scalar_lea.vmem %s1, 576
      %v2018 = vld [vmem:[%s2017] sm:$0xff]
      %v2019 = vld [vmem:[%s2017 + $0x8] sm:$0xff]
      %v2020 = vld [vmem:[%s2017 + $0x10] sm:$0xff]
      %v2021 = vld [vmem:[%s2017 + $0x18] sm:$0xff]
      %v2022 = vld [vmem:[%s2017 + $0x20] sm:$0xff]
      %v2023 = vld [vmem:[%s2017 + $0x28] sm:$0xff]
      %v2024 = vld [vmem:[%s2017 + $0x30] sm:$0xff]
      %v2025 = vld [vmem:[%s2017 + $0x38] sm:$0xff]
      %v2026 = vld [vmem:[%s2017 + $0x40] sm:$0xff]
      %v2027 = vld [vmem:[%s2017 + $0x48] sm:$0xff]
      %v2028 = vld [vmem:[%s2017 + $0x50] sm:$0xff]
      %v2029 = vld [vmem:[%s2017 + $0x58] sm:$0xff]
      %v2030 = vld [vmem:[%s2017 + $0x60] sm:$0xff]
      %v2031 = vld [vmem:[%s2017 + $0x68] sm:$0xff]
      %v2032 = vld [vmem:[%s2017 + $0x70] sm:$0xff]
      %v2033 = vld [vmem:[%s2017 + $0x78] sm:$0xff]
      %v2034 = vld [vmem:[%s2017 + $0x80] sm:$0xff]
      %v2035 = vld [vmem:[%s2017 + $0x88] sm:$0xff]
      %v2036 = vld [vmem:[%s2017 + $0x90] sm:$0xff]
      %v2037 = vld [vmem:[%s2017 + $0x98] sm:$0xff]
      %v2038 = vld [vmem:[%s2017 + $0xa0] sm:$0xff]
      %v2039 = vld [vmem:[%s2017 + $0xa8] sm:$0xff]
      %v2040 = vld [vmem:[%s2017 + $0xb0] sm:$0xff]
      %v2041 = vld [vmem:[%s2017 + $0xb8] sm:$0xff]
      %v2042 = vld [vmem:[%s2017 + $0xc0] sm:$0xff]
      %v2043 = vld [vmem:[%s2017 + $0xc8] sm:$0xff]
      %v2044 = vld [vmem:[%s2017 + $0xd0] sm:$0xff]
      %v2045 = vld [vmem:[%s2017 + $0xd8] sm:$0xff]
      %v2046 = vld [vmem:[%s2017 + $0xe0] sm:$0xff]
      %v2047 = vld [vmem:[%s2017 + $0xe8] sm:$0xff]
      %v2048 = vld [vmem:[%s2017 + $0xf0] sm:$0xff]
      %v2049 = vld [vmem:[%s2017 + $0xf8] sm:$0xff]
      %v2050 = vld [vmem:[%s2017 + $0x100] sm:$0xff]
      %v2051 = vld [vmem:[%s2017 + $0x108] sm:$0xff]
      %v2052 = vld [vmem:[%s2017 + $0x110] sm:$0xff]
      %v2053 = vld [vmem:[%s2017 + $0x118] sm:$0xff]
      %v2054 = vunpack.c.l.b16 %v1964
      %v2055 = vunpack.c.h.b16 %v1964
      %v2056 = vunpack.c.l.b16 %v1967
      %v2057 = vunpack.c.h.b16 %v1967
      %v2058 = vunpack.c.l.b16 %v1971
      %v2059 = vunpack.c.h.b16 %v1971
      %v2060 = vunpack.c.l.b16 %v1974
      %v2061 = vunpack.c.h.b16 %v1974
      %v2062 = vunpack.c.l.b16 %v1978
      %v2063 = vunpack.c.h.b16 %v1978
      %v2064 = vunpack.c.l.b16 %v1981
      %v2065 = vunpack.c.h.b16 %v1981
      %v2066 = vunpack.c.l.b16 %v1985
      %v2067 = vunpack.c.h.b16 %v1985
      %v2068 = vunpack.c.l.b16 %v1988
      %v2069 = vunpack.c.h.b16 %v1988
      %v2070 = vunpack.c.l.b16 %v1992
      %v2071 = vunpack.c.h.b16 %v1992
      %v2072 = vunpack.c.l.b16 %v1995
      %v2073 = vunpack.c.h.b16 %v1995
      %v2074 = vunpack.c.l.b16 %v1999
      %v2075 = vunpack.c.h.b16 %v1999
      %v2076 = vunpack.c.l.b16 %v2002
      %v2077 = vunpack.c.h.b16 %v2002
      %v2078 = vunpack.c.l.b16 %v2006
      %v2079 = vunpack.c.h.b16 %v2006
      %v2080 = vunpack.c.l.b16 %v2009
      %v2081 = vunpack.c.h.b16 %v2009
      %v2082 = vunpack.c.l.b16 %v2013
      %v2083 = vunpack.c.h.b16 %v2013
      %v2084 = vunpack.c.l.b16 %v2016
      %v2085 = vunpack.c.h.b16 %v2016
      %v2086 = vpack.c.b16 %v2056, %v2054
      %v2087 = vpack.c.b16 %v2057, %v2055
      %v2088 = vpack.c.b16 %v2060, %v2058
      %v2089 = vpack.c.b16 %v2061, %v2059
      %v2090 = vpack.c.b16 %v2064, %v2062
      %v2091 = vpack.c.b16 %v2065, %v2063
      %v2092 = vpack.c.b16 %v2068, %v2066
      %v2093 = vpack.c.b16 %v2069, %v2067
      %v2094 = vpack.c.b16 %v2072, %v2070
      %v2095 = vpack.c.b16 %v2073, %v2071
      %v2096 = vpack.c.b16 %v2076, %v2074
      %v2097 = vpack.c.b16 %v2077, %v2075
      %v2098 = vpack.c.b16 %v2080, %v2078
      %v2099 = vpack.c.b16 %v2081, %v2079
      %v2100 = vpack.c.b16 %v2084, %v2082
      %v2101 = vpack.c.b16 %v2085, %v2083
      %v2146 = vunpack.c.l.b16 %v2018
      %v2147 = vunpack.c.h.b16 %v2018
      %v2148 = vunpack.c.l.b16 %v2019
      %v2149 = vunpack.c.h.b16 %v2019
      %v2150 = vunpack.c.l.b16 %v2020
      %v2151 = vunpack.c.h.b16 %v2020
      %v2152 = vunpack.c.l.b16 %v2021
      %v2153 = vunpack.c.h.b16 %v2021
      %v2154 = vunpack.c.l.b16 %v2022
      %v2155 = vunpack.c.h.b16 %v2022
      %v2156 = vunpack.c.l.b16 %v2023
      %v2157 = vunpack.c.h.b16 %v2023
      %v2158 = vunpack.c.l.b16 %v2024
      %v2159 = vunpack.c.h.b16 %v2024
      %v2160 = vunpack.c.l.b16 %v2025
      %v2161 = vunpack.c.h.b16 %v2025
      %v2162 = vunpack.c.l.b16 %v2026
      %v2163 = vunpack.c.h.b16 %v2026
      %v2164 = vunpack.c.l.b16 %v2027
      %v2165 = vunpack.c.h.b16 %v2027
      %v2166 = vunpack.c.l.b16 %v2028
      %v2167 = vunpack.c.h.b16 %v2028
      %v2168 = vunpack.c.l.b16 %v2029
      %v2169 = vunpack.c.h.b16 %v2029
      %v2170 = vunpack.c.l.b16 %v2030
      %v2171 = vunpack.c.h.b16 %v2030
      %v2172 = vunpack.c.l.b16 %v2031
      %v2173 = vunpack.c.h.b16 %v2031
      %v2174 = vunpack.c.l.b16 %v2032
      %v2175 = vunpack.c.h.b16 %v2032
      %v2176 = vunpack.c.l.b16 %v2033
      %v2177 = vunpack.c.h.b16 %v2033
      %v2178 = vunpack.c.l.b16 %v2034
      %v2179 = vunpack.c.h.b16 %v2034
      %v2180 = vunpack.c.l.b16 %v2035
      %v2181 = vunpack.c.h.b16 %v2035
      %v2182 = vunpack.c.l.b16 %v2036
      %v2183 = vunpack.c.h.b16 %v2036
      %v2184 = vunpack.c.l.b16 %v2037
      %v2185 = vunpack.c.h.b16 %v2037
      %v2186 = vunpack.c.l.b16 %v2038
      %v2187 = vunpack.c.h.b16 %v2038
      %v2188 = vunpack.c.l.b16 %v2039
      %v2189 = vunpack.c.h.b16 %v2039
      %v2190 = vunpack.c.l.b16 %v2040
      %v2191 = vunpack.c.h.b16 %v2040
      %v2192 = vunpack.c.l.b16 %v2041
      %v2193 = vunpack.c.h.b16 %v2041
      %v2194 = vunpack.c.l.b16 %v2042
      %v2195 = vunpack.c.h.b16 %v2042
      %v2196 = vunpack.c.l.b16 %v2043
      %v2197 = vunpack.c.h.b16 %v2043
      %v2198 = vunpack.c.l.b16 %v2044
      %v2199 = vunpack.c.h.b16 %v2044
      %v2200 = vunpack.c.l.b16 %v2045
      %v2201 = vunpack.c.h.b16 %v2045
      %v2202 = vunpack.c.l.b16 %v2046
      %v2203 = vunpack.c.h.b16 %v2046
      %v2204 = vunpack.c.l.b16 %v2047
      %v2205 = vunpack.c.h.b16 %v2047
      %v2206 = vunpack.c.l.b16 %v2048
      %v2207 = vunpack.c.h.b16 %v2048
      %v2208 = vunpack.c.l.b16 %v2049
      %v2209 = vunpack.c.h.b16 %v2049
      %v2210 = vunpack.c.l.b16 %v2050
      %v2211 = vunpack.c.h.b16 %v2050
      %v2212 = vunpack.c.l.b16 %v2051
      %v2213 = vunpack.c.h.b16 %v2051
      %v2214 = vunpack.c.l.b16 %v2052
      %v2215 = vunpack.c.h.b16 %v2052
      %v2216 = vunpack.c.l.b16 %v2053
      %v2217 = vunpack.c.h.b16 %v2053
      %v2218 = vpack.c.b16 %v2150, %v2146
      %v2219 = vpack.c.b16 %v2151, %v2147
      %v2220 = vpack.c.b16 %v2152, %v2148
      %v2221 = vpack.c.b16 %v2153, %v2149
      %v2222 = vpack.c.b16 %v2158, %v2154
      %v2223 = vpack.c.b16 %v2159, %v2155
      %v2224 = vpack.c.b16 %v2160, %v2156
      %v2225 = vpack.c.b16 %v2161, %v2157
      %v2226 = vpack.c.b16 %v2166, %v2162
      %v2227 = vpack.c.b16 %v2167, %v2163
      %v2228 = vpack.c.b16 %v2168, %v2164
      %v2229 = vpack.c.b16 %v2169, %v2165
      %v2230 = vpack.c.b16 %v2174, %v2170
      %v2231 = vpack.c.b16 %v2175, %v2171
      %v2232 = vpack.c.b16 %v2176, %v2172
      %v2233 = vpack.c.b16 %v2177, %v2173
      %v2234 = vpack.c.b16 %v2182, %v2178
      %v2235 = vpack.c.b16 %v2183, %v2179
      %v2236 = vpack.c.b16 %v2184, %v2180
      %v2237 = vpack.c.b16 %v2185, %v2181
      %v2238 = vpack.c.b16 %v2190, %v2186
      %v2239 = vpack.c.b16 %v2191, %v2187
      %v2240 = vpack.c.b16 %v2192, %v2188
      %v2241 = vpack.c.b16 %v2193, %v2189
      %v2242 = vpack.c.b16 %v2198, %v2194
      %v2243 = vpack.c.b16 %v2199, %v2195
      %v2244 = vpack.c.b16 %v2200, %v2196
      %v2245 = vpack.c.b16 %v2201, %v2197
      %v2246 = vpack.c.b16 %v2206, %v2202
      %v2247 = vpack.c.b16 %v2207, %v2203
      %v2248 = vpack.c.b16 %v2208, %v2204
      %v2249 = vpack.c.b16 %v2209, %v2205
      %v2250 = vpack.c.b16 %v2214, %v2210
      %v2251 = vpack.c.b16 %v2215, %v2211
      %v2252 = vpack.c.b16 %v2216, %v2212
      %v2253 = vpack.c.b16 %v2217, %v2213
      %v2291 = vsel %vm849, %v2087, 0
      %v2294 = vsel %vm849, %v2089, 0
      %v2297 = vsel %vm849, %v2091, 0
      %v2300 = vsel %vm849, %v2093, 0
      %v2303 = vsel %vm849, %v2095, 0
      %v2306 = vsel %vm849, %v2097, 0
      %v2309 = vsel %vm849, %v2099, 0
      %v2312 = vsel %vm849, %v2101, 0
      %2314 = vmatpush.bf16.msra.mxu0 %v2246
      %2315 = vmatpush.bf16.msra.mxu0 %v2242
      %2316 = vmatpush.bf16.msra.mxu0 %v2238
      %2317 = vmatpush.bf16.msra.mxu0 %v2234
      %2318 = vmatpush.bf16.msra.mxu0 %v2230
      %2319 = vmatpush.bf16.msra.mxu0 %v2226
      %2320 = vmatpush.bf16.msra.mxu0 %v2222
      %2321 = vmatpush.bf16.msra.mxu0 %v2218
      %2322 = vmatmul.bf16.gmra.mxu0 %v2086
      %v2323 = vpop.f32.mrf.mxu0
      %v2324 = vadd.f32 0.0, %v2323
      %v2325 = vpop.f32.mrf.mxu0
      %v2326 = vadd.f32 0.0, %v2325
      %2327 = vmatmul.bf16.gmra.mxu0 %v2088
      %v2328 = vpop.f32.mrf.mxu0
      %v2329 = vadd.f32 0.0, %v2328
      %v2330 = vpop.f32.mrf.mxu0
      %v2331 = vadd.f32 0.0, %v2330
      %2332 = vmatmul.bf16.gmra.mxu0 %v2090
      %v2333 = vpop.f32.mrf.mxu0
      %v2334 = vadd.f32 0.0, %v2333
      %v2335 = vpop.f32.mrf.mxu0
      %v2336 = vadd.f32 0.0, %v2335
      %2337 = vmatmul.bf16.gmra.mxu0 %v2092
      %v2338 = vpop.f32.mrf.mxu0
      %v2339 = vadd.f32 0.0, %v2338
      %v2340 = vpop.f32.mrf.mxu0
      %v2341 = vadd.f32 0.0, %v2340
      %2342 = vmatmul.bf16.gmra.mxu0 %v2094
      %v2343 = vpop.f32.mrf.mxu0
      %v2344 = vadd.f32 0.0, %v2343
      %v2345 = vpop.f32.mrf.mxu0
      %v2346 = vadd.f32 0.0, %v2345
      %2347 = vmatmul.bf16.gmra.mxu0 %v2096
      %v2348 = vpop.f32.mrf.mxu0
      %v2349 = vadd.f32 0.0, %v2348
      %v2350 = vpop.f32.mrf.mxu0
      %v2351 = vadd.f32 0.0, %v2350
      %2352 = vmatmul.bf16.gmra.mxu0 %v2098
      %v2353 = vpop.f32.mrf.mxu0
      %v2354 = vadd.f32 0.0, %v2353
      %v2355 = vpop.f32.mrf.mxu0
      %v2356 = vadd.f32 0.0, %v2355
      %2357 = vmatmul.bf16.gmra.mxu0 %v2100
      %v2358 = vpop.f32.mrf.mxu0
      %v2359 = vadd.f32 0.0, %v2358
      %v2360 = vpop.f32.mrf.mxu0
      %v2361 = vadd.f32 0.0, %v2360
      %2362 = vdwg.mxu0
      %2363 = vmatpush.bf16.msra.mxu0 0
      %2364 = vmatpush.bf16.msra.mxu0 0
      %2365 = vmatpush.bf16.msra.mxu0 0
      %2366 = vmatpush.bf16.msra.mxu0 0
      %2367 = vmatpush.bf16.msra.mxu0 0
      %2368 = vmatpush.bf16.msra.mxu0 0
      %2369 = vmatpush.bf16.msra.mxu0 0
      %2370 = vmatpush.bf16.msra.mxu0 %v2250
      %2371 = vmatmul.bf16.gmra.mxu0 %v2291
      %v2372 = vpop.f32.mrf.mxu0
      %v2373 = vadd.f32 %v2324, %v2372
      %v2374 = vpop.f32.mrf.mxu0
      %v2375 = vadd.f32 %v2326, %v2374
      %2376 = vmatmul.bf16.gmra.mxu0 %v2294
      %v2377 = vpop.f32.mrf.mxu0
      %v2378 = vadd.f32 %v2329, %v2377
      %v2379 = vpop.f32.mrf.mxu0
      %v2380 = vadd.f32 %v2331, %v2379
      %2381 = vmatmul.bf16.gmra.mxu0 %v2297
      %v2382 = vpop.f32.mrf.mxu0
      %v2383 = vadd.f32 %v2334, %v2382
      %v2384 = vpop.f32.mrf.mxu0
      %v2385 = vadd.f32 %v2336, %v2384
      %2386 = vmatmul.bf16.gmra.mxu0 %v2300
      %v2387 = vpop.f32.mrf.mxu0
      %v2388 = vadd.f32 %v2339, %v2387
      %v2389 = vpop.f32.mrf.mxu0
      %v2390 = vadd.f32 %v2341, %v2389
      %2391 = vmatmul.bf16.gmra.mxu0 %v2303
      %v2392 = vpop.f32.mrf.mxu0
      %v2393 = vadd.f32 %v2344, %v2392
      %v2394 = vpop.f32.mrf.mxu0
      %v2395 = vadd.f32 %v2346, %v2394
      %2396 = vmatmul.bf16.gmra.mxu0 %v2306
      %v2397 = vpop.f32.mrf.mxu0
      %v2398 = vadd.f32 %v2349, %v2397
      %v2399 = vpop.f32.mrf.mxu0
      %v2400 = vadd.f32 %v2351, %v2399
      %2401 = vmatmul.bf16.gmra.mxu0 %v2309
      %v2402 = vpop.f32.mrf.mxu0
      %v2403 = vadd.f32 %v2354, %v2402
      %v2404 = vpop.f32.mrf.mxu0
      %v2405 = vadd.f32 %v2356, %v2404
      %2406 = vmatmul.bf16.gmra.mxu0 %v2312
      %v2407 = vpop.f32.mrf.mxu0
      %v2408 = vadd.f32 %v2359, %v2407
      %v2409 = vpop.f32.mrf.mxu0
      %v2410 = vadd.f32 %v2361, %v2409
      %2411 = vdwg.mxu0
      %2412 = vmatpush.bf16.msra.mxu0 %v2247
      %2413 = vmatpush.bf16.msra.mxu0 %v2243
      %2414 = vmatpush.bf16.msra.mxu0 %v2239
      %2415 = vmatpush.bf16.msra.mxu0 %v2235
      %2416 = vmatpush.bf16.msra.mxu0 %v2231
      %2417 = vmatpush.bf16.msra.mxu0 %v2227
      %2418 = vmatpush.bf16.msra.mxu0 %v2223
      %2419 = vmatpush.bf16.msra.mxu0 %v2219
      %2420 = vmatmul.bf16.gmra.mxu0 %v2086
      %v2421 = vpop.f32.mrf.mxu0
      %v2422 = vadd.f32 0.0, %v2421
      %v2423 = vpop.f32.mrf.mxu0
      %v2424 = vadd.f32 0.0, %v2423
      %2425 = vmatmul.bf16.gmra.mxu0 %v2088
      %v2426 = vpop.f32.mrf.mxu0
      %v2427 = vadd.f32 0.0, %v2426
      %v2428 = vpop.f32.mrf.mxu0
      %v2429 = vadd.f32 0.0, %v2428
      %2430 = vmatmul.bf16.gmra.mxu0 %v2090
      %v2431 = vpop.f32.mrf.mxu0
      %v2432 = vadd.f32 0.0, %v2431
      %v2433 = vpop.f32.mrf.mxu0
      %v2434 = vadd.f32 0.0, %v2433
      %2435 = vmatmul.bf16.gmra.mxu0 %v2092
      %v2436 = vpop.f32.mrf.mxu0
      %v2437 = vadd.f32 0.0, %v2436
      %v2438 = vpop.f32.mrf.mxu0
      %v2439 = vadd.f32 0.0, %v2438
      %2440 = vmatmul.bf16.gmra.mxu0 %v2094
      %v2441 = vpop.f32.mrf.mxu0
      %v2442 = vadd.f32 0.0, %v2441
      %v2443 = vpop.f32.mrf.mxu0
      %v2444 = vadd.f32 0.0, %v2443
      %2445 = vmatmul.bf16.gmra.mxu0 %v2096
      %v2446 = vpop.f32.mrf.mxu0
      %v2447 = vadd.f32 0.0, %v2446
      %v2448 = vpop.f32.mrf.mxu0
      %v2449 = vadd.f32 0.0, %v2448
      %2450 = vmatmul.bf16.gmra.mxu0 %v2098
      %v2451 = vpop.f32.mrf.mxu0
      %v2452 = vadd.f32 0.0, %v2451
      %v2453 = vpop.f32.mrf.mxu0
      %v2454 = vadd.f32 0.0, %v2453
      %2455 = vmatmul.bf16.gmra.mxu0 %v2100
      %v2456 = vpop.f32.mrf.mxu0
      %v2457 = vadd.f32 0.0, %v2456
      %v2458 = vpop.f32.mrf.mxu0
      %v2459 = vadd.f32 0.0, %v2458
      %2460 = vdwg.mxu0
      %2461 = vmatpush.bf16.msra.mxu0 0
      %2462 = vmatpush.bf16.msra.mxu0 0
      %2463 = vmatpush.bf16.msra.mxu0 0
      %2464 = vmatpush.bf16.msra.mxu0 0
      %2465 = vmatpush.bf16.msra.mxu0 0
      %2466 = vmatpush.bf16.msra.mxu0 0
      %2467 = vmatpush.bf16.msra.mxu0 0
      %2468 = vmatpush.bf16.msra.mxu0 %v2251
      %2469 = vmatmul.bf16.gmra.mxu0 %v2291
      %v2470 = vpop.f32.mrf.mxu0
      %v2471 = vadd.f32 %v2422, %v2470
      %v2472 = vpop.f32.mrf.mxu0
      %v2473 = vadd.f32 %v2424, %v2472
      %2474 = vmatmul.bf16.gmra.mxu0 %v2294
      %v2475 = vpop.f32.mrf.mxu0
      %v2476 = vadd.f32 %v2427, %v2475
      %v2477 = vpop.f32.mrf.mxu0
      %v2478 = vadd.f32 %v2429, %v2477
      %2479 = vmatmul.bf16.gmra.mxu0 %v2297
      %v2480 = vpop.f32.mrf.mxu0
      %v2481 = vadd.f32 %v2432, %v2480
      %v2482 = vpop.f32.mrf.mxu0
      %v2483 = vadd.f32 %v2434, %v2482
      %2484 = vmatmul.bf16.gmra.mxu0 %v2300
      %v2485 = vpop.f32.mrf.mxu0
      %v2486 = vadd.f32 %v2437, %v2485
      %v2487 = vpop.f32.mrf.mxu0
      %v2488 = vadd.f32 %v2439, %v2487
      %2489 = vmatmul.bf16.gmra.mxu0 %v2303
      %v2490 = vpop.f32.mrf.mxu0
      %v2491 = vadd.f32 %v2442, %v2490
      %v2492 = vpop.f32.mrf.mxu0
      %v2493 = vadd.f32 %v2444, %v2492
      %2494 = vmatmul.bf16.gmra.mxu0 %v2306
      %v2495 = vpop.f32.mrf.mxu0
      %v2496 = vadd.f32 %v2447, %v2495
      %v2497 = vpop.f32.mrf.mxu0
      %v2498 = vadd.f32 %v2449, %v2497
      %2499 = vmatmul.bf16.gmra.mxu0 %v2309
      %v2500 = vpop.f32.mrf.mxu0
      %v2501 = vadd.f32 %v2452, %v2500
      %v2502 = vpop.f32.mrf.mxu0
      %v2503 = vadd.f32 %v2454, %v2502
      %2504 = vmatmul.bf16.gmra.mxu0 %v2312
      %v2505 = vpop.f32.mrf.mxu0
      %v2506 = vadd.f32 %v2457, %v2505
      %v2507 = vpop.f32.mrf.mxu0
      %v2508 = vadd.f32 %v2459, %v2507
      %2509 = vdwg.mxu0
      %2510 = vmatpush.bf16.msra.mxu0 %v2248
      %2511 = vmatpush.bf16.msra.mxu0 %v2244
      %2512 = vmatpush.bf16.msra.mxu0 %v2240
      %2513 = vmatpush.bf16.msra.mxu0 %v2236
      %2514 = vmatpush.bf16.msra.mxu0 %v2232
      %2515 = vmatpush.bf16.msra.mxu0 %v2228
      %2516 = vmatpush.bf16.msra.mxu0 %v2224
      %2517 = vmatpush.bf16.msra.mxu0 %v2220
      %2518 = vmatmul.bf16.gmra.mxu0 %v2086
      %v2519 = vpop.f32.mrf.mxu0
      %v2520 = vadd.f32 0.0, %v2519
      %v2521 = vpop.f32.mrf.mxu0
      %v2522 = vadd.f32 0.0, %v2521
      %2523 = vmatmul.bf16.gmra.mxu0 %v2088
      %v2524 = vpop.f32.mrf.mxu0
      %v2525 = vadd.f32 0.0, %v2524
      %v2526 = vpop.f32.mrf.mxu0
      %v2527 = vadd.f32 0.0, %v2526
      %2528 = vmatmul.bf16.gmra.mxu0 %v2090
      %v2529 = vpop.f32.mrf.mxu0
      %v2530 = vadd.f32 0.0, %v2529
      %v2531 = vpop.f32.mrf.mxu0
      %v2532 = vadd.f32 0.0, %v2531
      %2533 = vmatmul.bf16.gmra.mxu0 %v2092
      %v2534 = vpop.f32.mrf.mxu0
      %v2535 = vadd.f32 0.0, %v2534
      %v2536 = vpop.f32.mrf.mxu0
      %v2537 = vadd.f32 0.0, %v2536
      %2538 = vmatmul.bf16.gmra.mxu0 %v2094
      %v2539 = vpop.f32.mrf.mxu0
      %v2540 = vadd.f32 0.0, %v2539
      %v2541 = vpop.f32.mrf.mxu0
      %v2542 = vadd.f32 0.0, %v2541
      %2543 = vmatmul.bf16.gmra.mxu0 %v2096
      %v2544 = vpop.f32.mrf.mxu0
      %v2545 = vadd.f32 0.0, %v2544
      %v2546 = vpop.f32.mrf.mxu0
      %v2547 = vadd.f32 0.0, %v2546
      %2548 = vmatmul.bf16.gmra.mxu0 %v2098
      %v2549 = vpop.f32.mrf.mxu0
      %v2550 = vadd.f32 0.0, %v2549
      %v2551 = vpop.f32.mrf.mxu0
      %v2552 = vadd.f32 0.0, %v2551
      %2553 = vmatmul.bf16.gmra.mxu0 %v2100
      %v2554 = vpop.f32.mrf.mxu0
      %v2555 = vadd.f32 0.0, %v2554
      %v2556 = vpop.f32.mrf.mxu0
      %v2557 = vadd.f32 0.0, %v2556
      %2558 = vdwg.mxu0
      %2559 = vmatpush.bf16.msra.mxu0 0
      %2560 = vmatpush.bf16.msra.mxu0 0
      %2561 = vmatpush.bf16.msra.mxu0 0
      %2562 = vmatpush.bf16.msra.mxu0 0
      %2563 = vmatpush.bf16.msra.mxu0 0
      %2564 = vmatpush.bf16.msra.mxu0 0
      %2565 = vmatpush.bf16.msra.mxu0 0
      %2566 = vmatpush.bf16.msra.mxu0 %v2252
      %2567 = vmatmul.bf16.gmra.mxu0 %v2291
      %v2568 = vpop.f32.mrf.mxu0
      %v2569 = vadd.f32 %v2520, %v2568
      %v2570 = vpop.f32.mrf.mxu0
      %v2571 = vadd.f32 %v2522, %v2570
      %2572 = vmatmul.bf16.gmra.mxu0 %v2294
      %v2573 = vpop.f32.mrf.mxu0
      %v2574 = vadd.f32 %v2525, %v2573
      %v2575 = vpop.f32.mrf.mxu0
      %v2576 = vadd.f32 %v2527, %v2575
      %2577 = vmatmul.bf16.gmra.mxu0 %v2297
      %v2578 = vpop.f32.mrf.mxu0
      %v2579 = vadd.f32 %v2530, %v2578
      %v2580 = vpop.f32.mrf.mxu0
      %v2581 = vadd.f32 %v2532, %v2580
      %2582 = vmatmul.bf16.gmra.mxu0 %v2300
      %v2583 = vpop.f32.mrf.mxu0
      %v2584 = vadd.f32 %v2535, %v2583
      %v2585 = vpop.f32.mrf.mxu0
      %v2586 = vadd.f32 %v2537, %v2585
      %2587 = vmatmul.bf16.gmra.mxu0 %v2303
      %v2588 = vpop.f32.mrf.mxu0
      %v2589 = vadd.f32 %v2540, %v2588
      %v2590 = vpop.f32.mrf.mxu0
      %v2591 = vadd.f32 %v2542, %v2590
      %2592 = vmatmul.bf16.gmra.mxu0 %v2306
      %v2593 = vpop.f32.mrf.mxu0
      %v2594 = vadd.f32 %v2545, %v2593
      %v2595 = vpop.f32.mrf.mxu0
      %v2596 = vadd.f32 %v2547, %v2595
      %2597 = vmatmul.bf16.gmra.mxu0 %v2309
      %v2598 = vpop.f32.mrf.mxu0
      %v2599 = vadd.f32 %v2550, %v2598
      %v2600 = vpop.f32.mrf.mxu0
      %v2601 = vadd.f32 %v2552, %v2600
      %2602 = vmatmul.bf16.gmra.mxu0 %v2312
      %v2603 = vpop.f32.mrf.mxu0
      %v2604 = vadd.f32 %v2555, %v2603
      %v2605 = vpop.f32.mrf.mxu0
      %v2606 = vadd.f32 %v2557, %v2605
      %2607 = vdwg.mxu0
      %2608 = vmatpush.bf16.msra.mxu0 %v2249
      %2609 = vmatpush.bf16.msra.mxu0 %v2245
      %2610 = vmatpush.bf16.msra.mxu0 %v2241
      %2611 = vmatpush.bf16.msra.mxu0 %v2237
      %2612 = vmatpush.bf16.msra.mxu0 %v2233
      %2613 = vmatpush.bf16.msra.mxu0 %v2229
      %2614 = vmatpush.bf16.msra.mxu0 %v2225
      %2615 = vmatpush.bf16.msra.mxu0 %v2221
      %2616 = vmatmul.bf16.gmra.mxu0 %v2086
      %v2617 = vpop.f32.mrf.mxu0
      %v2618 = vadd.f32 0.0, %v2617
      %v2619 = vpop.f32.mrf.mxu0
      %v2620 = vadd.f32 0.0, %v2619
      %2621 = vmatmul.bf16.gmra.mxu0 %v2088
      %v2622 = vpop.f32.mrf.mxu0
      %v2623 = vadd.f32 0.0, %v2622
      %v2624 = vpop.f32.mrf.mxu0
      %v2625 = vadd.f32 0.0, %v2624
      %2626 = vmatmul.bf16.gmra.mxu0 %v2090
      %v2627 = vpop.f32.mrf.mxu0
      %v2628 = vadd.f32 0.0, %v2627
      %v2629 = vpop.f32.mrf.mxu0
      %v2630 = vadd.f32 0.0, %v2629
      %2631 = vmatmul.bf16.gmra.mxu0 %v2092
      %v2632 = vpop.f32.mrf.mxu0
      %v2633 = vadd.f32 0.0, %v2632
      %v2634 = vpop.f32.mrf.mxu0
      %v2635 = vadd.f32 0.0, %v2634
      %2636 = vmatmul.bf16.gmra.mxu0 %v2094
      %v2637 = vpop.f32.mrf.mxu0
      %v2638 = vadd.f32 0.0, %v2637
      %v2639 = vpop.f32.mrf.mxu0
      %v2640 = vadd.f32 0.0, %v2639
      %2641 = vmatmul.bf16.gmra.mxu0 %v2096
      %v2642 = vpop.f32.mrf.mxu0
      %v2643 = vadd.f32 0.0, %v2642
      %v2644 = vpop.f32.mrf.mxu0
      %v2645 = vadd.f32 0.0, %v2644
      %2646 = vmatmul.bf16.gmra.mxu0 %v2098
      %v2647 = vpop.f32.mrf.mxu0
      %v2648 = vadd.f32 0.0, %v2647
      %v2649 = vpop.f32.mrf.mxu0
      %v2650 = vadd.f32 0.0, %v2649
      %2651 = vmatmul.bf16.gmra.mxu0 %v2100
      %v2652 = vpop.f32.mrf.mxu0
      %v2653 = vadd.f32 0.0, %v2652
      %v2654 = vpop.f32.mrf.mxu0
      %v2655 = vadd.f32 0.0, %v2654
      %2656 = vdwg.mxu0
      %2657 = vmatpush.bf16.msra.mxu0 0
      %2658 = vmatpush.bf16.msra.mxu0 0
      %2659 = vmatpush.bf16.msra.mxu0 0
      %2660 = vmatpush.bf16.msra.mxu0 0
      %2661 = vmatpush.bf16.msra.mxu0 0
      %2662 = vmatpush.bf16.msra.mxu0 0
      %2663 = vmatpush.bf16.msra.mxu0 0
      %2664 = vmatpush.bf16.msra.mxu0 %v2253
      %2665 = vmatmul.bf16.gmra.mxu0 %v2291
      %v2666 = vpop.f32.mrf.mxu0
      %v2667 = vadd.f32 %v2618, %v2666
      %v2668 = vpop.f32.mrf.mxu0
      %v2669 = vadd.f32 %v2620, %v2668
      %2670 = vmatmul.bf16.gmra.mxu0 %v2294
      %v2671 = vpop.f32.mrf.mxu0
      %v2672 = vadd.f32 %v2623, %v2671
      %v2673 = vpop.f32.mrf.mxu0
      %v2674 = vadd.f32 %v2625, %v2673
      %2675 = vmatmul.bf16.gmra.mxu0 %v2297
      %v2676 = vpop.f32.mrf.mxu0
      %v2677 = vadd.f32 %v2628, %v2676
      %v2678 = vpop.f32.mrf.mxu0
      %v2679 = vadd.f32 %v2630, %v2678
      %2680 = vmatmul.bf16.gmra.mxu0 %v2300
      %v2681 = vpop.f32.mrf.mxu0
      %v2682 = vadd.f32 %v2633, %v2681
      %v2683 = vpop.f32.mrf.mxu0
      %v2684 = vadd.f32 %v2635, %v2683
      %2685 = vmatmul.bf16.gmra.mxu0 %v2303
      %v2686 = vpop.f32.mrf.mxu0
      %v2687 = vadd.f32 %v2638, %v2686
      %v2688 = vpop.f32.mrf.mxu0
      %v2689 = vadd.f32 %v2640, %v2688
      %2690 = vmatmul.bf16.gmra.mxu0 %v2306
      %v2691 = vpop.f32.mrf.mxu0
      %v2692 = vadd.f32 %v2643, %v2691
      %v2693 = vpop.f32.mrf.mxu0
      %v2694 = vadd.f32 %v2645, %v2693
      %2695 = vmatmul.bf16.gmra.mxu0 %v2309
      %v2696 = vpop.f32.mrf.mxu0
      %v2697 = vadd.f32 %v2648, %v2696
      %v2698 = vpop.f32.mrf.mxu0
      %v2699 = vadd.f32 %v2650, %v2698
      %2700 = vmatmul.bf16.gmra.mxu0 %v2312
      %v2701 = vpop.f32.mrf.mxu0
      %v2702 = vadd.f32 %v2653, %v2701
      %v2703 = vpop.f32.mrf.mxu0
      %v2704 = vadd.f32 %v2655, %v2703
      %2705 = vdwg.mxu0
      %v2706 = vadd.f32 %v1601, %v2373
      %v2707 = vadd.f32 %v1699, %v2471
      %v2708 = vadd.f32 %v1797, %v2569
      %v2709 = vadd.f32 %v1895, %v2667
      %v2710 = vadd.f32 %v1603, %v2375
      %v2711 = vadd.f32 %v1701, %v2473
      %v2712 = vadd.f32 %v1799, %v2571
      %v2713 = vadd.f32 %v1897, %v2669
      %v2714 = vadd.f32 %v1606, %v2378
      %v2715 = vadd.f32 %v1704, %v2476
      %v2716 = vadd.f32 %v1802, %v2574
      %v2717 = vadd.f32 %v1900, %v2672
      %v2718 = vadd.f32 %v1608, %v2380
      %v2719 = vadd.f32 %v1706, %v2478
      %v2720 = vadd.f32 %v1804, %v2576
      %v2721 = vadd.f32 %v1902, %v2674
      %v2722 = vadd.f32 %v1611, %v2383
      %v2723 = vadd.f32 %v1709, %v2481
      %v2724 = vadd.f32 %v1807, %v2579
      %v2725 = vadd.f32 %v1905, %v2677
      %v2726 = vadd.f32 %v1613, %v2385
      %v2727 = vadd.f32 %v1711, %v2483
      %v2728 = vadd.f32 %v1809, %v2581
      %v2729 = vadd.f32 %v1907, %v2679
      %v2730 = vadd.f32 %v1616, %v2388
      %v2731 = vadd.f32 %v1714, %v2486
      %v2732 = vadd.f32 %v1812, %v2584
      %v2733 = vadd.f32 %v1910, %v2682
      %v2734 = vadd.f32 %v1618, %v2390
      %v2735 = vadd.f32 %v1716, %v2488
      %v2736 = vadd.f32 %v1814, %v2586
      %v2737 = vadd.f32 %v1912, %v2684
      %v2738 = vadd.f32 %v1621, %v2393
      %v2739 = vadd.f32 %v1719, %v2491
      %v2740 = vadd.f32 %v1817, %v2589
      %v2741 = vadd.f32 %v1915, %v2687
      %v2742 = vadd.f32 %v1623, %v2395
      %v2743 = vadd.f32 %v1721, %v2493
      %v2744 = vadd.f32 %v1819, %v2591
      %v2745 = vadd.f32 %v1917, %v2689
      %v2746 = vadd.f32 %v1626, %v2398
      %v2747 = vadd.f32 %v1724, %v2496
      %v2748 = vadd.f32 %v1822, %v2594
      %v2749 = vadd.f32 %v1920, %v2692
      %v2750 = vadd.f32 %v1628, %v2400
      %v2751 = vadd.f32 %v1726, %v2498
      %v2752 = vadd.f32 %v1824, %v2596
      %v2753 = vadd.f32 %v1922, %v2694
      %v2754 = vadd.f32 %v1631, %v2403
      %v2755 = vadd.f32 %v1729, %v2501
      %v2756 = vadd.f32 %v1827, %v2599
      %v2757 = vadd.f32 %v1925, %v2697
      %v2758 = vadd.f32 %v1633, %v2405
      %v2759 = vadd.f32 %v1731, %v2503
      %v2760 = vadd.f32 %v1829, %v2601
      %v2761 = vadd.f32 %v1927, %v2699
      %v2762 = vadd.f32 %v1636, %v2408
      %v2763 = vadd.f32 %v1734, %v2506
      %v2764 = vadd.f32 %v1832, %v2604
      %v2765 = vadd.f32 %v1930, %v2702
      %v2766 = vadd.f32 %v1638, %v2410
      %v2767 = vadd.f32 %v1736, %v2508
      %v2768 = vadd.f32 %v1834, %v2606
      %v2769 = vadd.f32 %v1932, %v2704
      %v2770 = vld [vmem:[%s2] sm:$0xf]
      %v2772 = vperm.slane %v2770, 0
      %v2773 = vperm.slane %v2770, 1
      %v2774 = vperm.slane %v2770, 2
      %v2775 = vperm.slane %v2770, 3
      %v2780 = vadd.f32 %v2706, %v2772
      %v2781 = vadd.f32 %v2707, %v2773
      %v2782 = vadd.f32 %v2708, %v2774
      %v2783 = vadd.f32 %v2709, %v2775
      %v2784 = vadd.f32 %v2710, %v2772
      %v2785 = vadd.f32 %v2711, %v2773
      %v2786 = vadd.f32 %v2712, %v2774
      %v2787 = vadd.f32 %v2713, %v2775
      %v2788 = vadd.f32 %v2714, %v2772
      %v2789 = vadd.f32 %v2715, %v2773
      %v2790 = vadd.f32 %v2716, %v2774
      %v2791 = vadd.f32 %v2717, %v2775
      %v2792 = vadd.f32 %v2718, %v2772
      %v2793 = vadd.f32 %v2719, %v2773
      %v2794 = vadd.f32 %v2720, %v2774
      %v2795 = vadd.f32 %v2721, %v2775
      %v2796 = vadd.f32 %v2722, %v2772
      %v2797 = vadd.f32 %v2723, %v2773
      %v2798 = vadd.f32 %v2724, %v2774
      %v2799 = vadd.f32 %v2725, %v2775
      %v2800 = vadd.f32 %v2726, %v2772
      %v2801 = vadd.f32 %v2727, %v2773
      %v2802 = vadd.f32 %v2728, %v2774
      %v2803 = vadd.f32 %v2729, %v2775
      %v2804 = vadd.f32 %v2730, %v2772
      %v2805 = vadd.f32 %v2731, %v2773
      %v2806 = vadd.f32 %v2732, %v2774
      %v2807 = vadd.f32 %v2733, %v2775
      %v2808 = vadd.f32 %v2734, %v2772
      %v2809 = vadd.f32 %v2735, %v2773
      %v2810 = vadd.f32 %v2736, %v2774
      %v2811 = vadd.f32 %v2737, %v2775
      %v2812 = vadd.f32 %v2738, %v2772
      %v2813 = vadd.f32 %v2739, %v2773
      %v2814 = vadd.f32 %v2740, %v2774
      %v2815 = vadd.f32 %v2741, %v2775
      %v2816 = vadd.f32 %v2742, %v2772
      %v2817 = vadd.f32 %v2743, %v2773
      %v2818 = vadd.f32 %v2744, %v2774
      %v2819 = vadd.f32 %v2745, %v2775
      %v2820 = vadd.f32 %v2746, %v2772
      %v2821 = vadd.f32 %v2747, %v2773
      %v2822 = vadd.f32 %v2748, %v2774
      %v2823 = vadd.f32 %v2749, %v2775
      %v2824 = vadd.f32 %v2750, %v2772
      %v2825 = vadd.f32 %v2751, %v2773
      %v2826 = vadd.f32 %v2752, %v2774
      %v2827 = vadd.f32 %v2753, %v2775
      %v2828 = vadd.f32 %v2754, %v2772
      %v2829 = vadd.f32 %v2755, %v2773
      %v2830 = vadd.f32 %v2756, %v2774
      %v2831 = vadd.f32 %v2757, %v2775
      %v2832 = vadd.f32 %v2758, %v2772
      %v2833 = vadd.f32 %v2759, %v2773
      %v2834 = vadd.f32 %v2760, %v2774
      %v2835 = vadd.f32 %v2761, %v2775
      %v2836 = vadd.f32 %v2762, %v2772
      %v2837 = vadd.f32 %v2763, %v2773
      %v2838 = vadd.f32 %v2764, %v2774
      %v2839 = vadd.f32 %v2765, %v2775
      %v2840 = vadd.f32 %v2766, %v2772
      %v2841 = vadd.f32 %v2767, %v2773
      %v2842 = vadd.f32 %v2768, %v2774
      %v2843 = vadd.f32 %v2769, %v2775
      %v2844 = vmax.f32 %v2780, 0.0
      %v2845 = vmax.f32 %v2781, 0.0
      %v2846 = vmax.f32 %v2782, 0.0
      %v2847 = vmax.f32 %v2783, 0.0
      %v2848 = vmax.f32 %v2784, 0.0
      %v2849 = vmax.f32 %v2785, 0.0
      %v2850 = vmax.f32 %v2786, 0.0
      %v2851 = vmax.f32 %v2787, 0.0
      %v2852 = vmax.f32 %v2788, 0.0
      %v2853 = vmax.f32 %v2789, 0.0
      %v2854 = vmax.f32 %v2790, 0.0
      %v2855 = vmax.f32 %v2791, 0.0
      %v2856 = vmax.f32 %v2792, 0.0
      %v2857 = vmax.f32 %v2793, 0.0
      %v2858 = vmax.f32 %v2794, 0.0
      %v2859 = vmax.f32 %v2795, 0.0
      %v2860 = vmax.f32 %v2796, 0.0
      %v2861 = vmax.f32 %v2797, 0.0
      %v2862 = vmax.f32 %v2798, 0.0
      %v2863 = vmax.f32 %v2799, 0.0
      %v2864 = vmax.f32 %v2800, 0.0
      %v2865 = vmax.f32 %v2801, 0.0
      %v2866 = vmax.f32 %v2802, 0.0
      %v2867 = vmax.f32 %v2803, 0.0
      %v2868 = vmax.f32 %v2804, 0.0
      %v2869 = vmax.f32 %v2805, 0.0
      %v2870 = vmax.f32 %v2806, 0.0
      %v2871 = vmax.f32 %v2807, 0.0
      %v2872 = vmax.f32 %v2808, 0.0
      %v2873 = vmax.f32 %v2809, 0.0
      %v2874 = vmax.f32 %v2810, 0.0
      %v2875 = vmax.f32 %v2811, 0.0
      %v2876 = vmax.f32 %v2812, 0.0
      %v2877 = vmax.f32 %v2813, 0.0
      %v2878 = vmax.f32 %v2814, 0.0
      %v2879 = vmax.f32 %v2815, 0.0
      %v2880 = vmax.f32 %v2816, 0.0
      %v2881 = vmax.f32 %v2817, 0.0
      %v2882 = vmax.f32 %v2818, 0.0
      %v2883 = vmax.f32 %v2819, 0.0
      %v2884 = vmax.f32 %v2820, 0.0
      %v2885 = vmax.f32 %v2821, 0.0
      %v2886 = vmax.f32 %v2822, 0.0
      %v2887 = vmax.f32 %v2823, 0.0
      %v2888 = vmax.f32 %v2824, 0.0
      %v2889 = vmax.f32 %v2825, 0.0
      %v2890 = vmax.f32 %v2826, 0.0
      %v2891 = vmax.f32 %v2827, 0.0
      %v2892 = vmax.f32 %v2828, 0.0
      %v2893 = vmax.f32 %v2829, 0.0
      %v2894 = vmax.f32 %v2830, 0.0
      %v2895 = vmax.f32 %v2831, 0.0
      %v2896 = vmax.f32 %v2832, 0.0
      %v2897 = vmax.f32 %v2833, 0.0
      %v2898 = vmax.f32 %v2834, 0.0
      %v2899 = vmax.f32 %v2835, 0.0
      %v2900 = vmax.f32 %v2836, 0.0
      %v2901 = vmax.f32 %v2837, 0.0
      %v2902 = vmax.f32 %v2838, 0.0
      %v2903 = vmax.f32 %v2839, 0.0
      %v2904 = vmax.f32 %v2840, 0.0
      %v2905 = vmax.f32 %v2841, 0.0
      %v2906 = vmax.f32 %v2842, 0.0
      %v2907 = vmax.f32 %v2843, 0.0
      %v2908 = vpack.c.bf16 %v2848, %v2844
      %v2909 = vpack.c.bf16 %v2849, %v2845
      %v2910 = vpack.c.bf16 %v2850, %v2846
      %v2911 = vpack.c.bf16 %v2851, %v2847
      %v2912 = vpack.c.bf16 %v2856, %v2852
      %v2913 = vpack.c.bf16 %v2857, %v2853
      %v2914 = vpack.c.bf16 %v2858, %v2854
      %v2915 = vpack.c.bf16 %v2859, %v2855
      %v2916 = vpack.c.bf16 %v2864, %v2860
      %v2917 = vpack.c.bf16 %v2865, %v2861
      %v2918 = vpack.c.bf16 %v2866, %v2862
      %v2919 = vpack.c.bf16 %v2867, %v2863
      %v2920 = vpack.c.bf16 %v2872, %v2868
      %v2921 = vpack.c.bf16 %v2873, %v2869
      %v2922 = vpack.c.bf16 %v2874, %v2870
      %v2923 = vpack.c.bf16 %v2875, %v2871
      %v2924 = vpack.c.bf16 %v2880, %v2876
      %v2925 = vpack.c.bf16 %v2881, %v2877
      %v2926 = vpack.c.bf16 %v2882, %v2878
      %v2927 = vpack.c.bf16 %v2883, %v2879
      %v2928 = vpack.c.bf16 %v2888, %v2884
      %v2929 = vpack.c.bf16 %v2889, %v2885
      %v2930 = vpack.c.bf16 %v2890, %v2886
      %v2931 = vpack.c.bf16 %v2891, %v2887
      %v2932 = vpack.c.bf16 %v2896, %v2892
      %v2933 = vpack.c.bf16 %v2897, %v2893
      %v2934 = vpack.c.bf16 %v2898, %v2894
      %v2935 = vpack.c.bf16 %v2899, %v2895
      %v2936 = vpack.c.bf16 %v2904, %v2900
      %v2937 = vpack.c.bf16 %v2905, %v2901
      %v2938 = vpack.c.bf16 %v2906, %v2902
      %v2939 = vpack.c.bf16 %v2907, %v2903
      %v2940 = vld [vmem:[%s3] sm:$0xf]
      %v2941 = vld [vmem:[%s3 + $0x4] sm:$0xf]
      %v2942 = vld [vmem:[%s3 + $0x8] sm:$0xf]
      %v2943 = vld [vmem:[%s3 + $0xc] sm:$0xf]
      %v2944 = vld [vmem:[%s3 + $0x10] sm:$0xf]
      %v2945 = vld [vmem:[%s3 + $0x14] sm:$0xf]
      %v2946 = vld [vmem:[%s3 + $0x18] sm:$0xf]
      %v2947 = vld [vmem:[%s3 + $0x1c] sm:$0xf]
      %v2948 = vld [vmem:[%s3 + $0x20] sm:$0xf]
      %v2949 = vld [vmem:[%s3 + $0x24] sm:$0xf]
      %v2950 = vld [vmem:[%s3 + $0x28] sm:$0xf]
      %v2951 = vld [vmem:[%s3 + $0x2c] sm:$0xf]
      %v2952 = vld [vmem:[%s3 + $0x30] sm:$0xf]
      %v2953 = vld [vmem:[%s3 + $0x34] sm:$0xf]
      %v2954 = vld [vmem:[%s3 + $0x38] sm:$0xf]
      %v2955 = vld [vmem:[%s3 + $0x3c] sm:$0xf]
      %v2956 = vld [vmem:[%s3 + $0x40] sm:$0xf]
      %v2957 = vld [vmem:[%s3 + $0x44] sm:$0xf]
      %v2958 = vld [vmem:[%s3 + $0x48] sm:$0xf]
      %v2959 = vld [vmem:[%s3 + $0x4c] sm:$0xf]
      %v2960 = vld [vmem:[%s3 + $0x50] sm:$0xf]
      %v2961 = vld [vmem:[%s3 + $0x54] sm:$0xf]
      %v2962 = vld [vmem:[%s3 + $0x58] sm:$0xf]
      %v2963 = vld [vmem:[%s3 + $0x5c] sm:$0xf]
      %v2964 = vld [vmem:[%s3 + $0x60] sm:$0xf]
      %v2965 = vld [vmem:[%s3 + $0x64] sm:$0xf]
      %v2966 = vld [vmem:[%s3 + $0x68] sm:$0xf]
      %v2967 = vld [vmem:[%s3 + $0x6c] sm:$0xf]
      %v2968 = vld [vmem:[%s3 + $0x70] sm:$0xf]
      %v2969 = vld [vmem:[%s3 + $0x74] sm:$0xf]
      %v2970 = vld [vmem:[%s3 + $0x78] sm:$0xf]
      %v2971 = vld [vmem:[%s3 + $0x7c] sm:$0xf]
      %v2972 = vld [vmem:[%s3 + $0x80] sm:$0xf]
      %v2973 = vld [vmem:[%s3 + $0x84] sm:$0xf]
      %v2974 = vld [vmem:[%s3 + $0x88] sm:$0xf]
      %v2975 = vld [vmem:[%s3 + $0x8c] sm:$0xf]
      %v2976 = vld [vmem:[%s3 + $0x90] sm:$0xf]
      %v2977 = vld [vmem:[%s3 + $0x94] sm:$0xf]
      %v2978 = vld [vmem:[%s3 + $0x98] sm:$0xf]
      %v2979 = vld [vmem:[%s3 + $0x9c] sm:$0xf]
      %v2980 = vld [vmem:[%s3 + $0xa0] sm:$0xf]
      %v2981 = vld [vmem:[%s3 + $0xa4] sm:$0xf]
      %v2982 = vld [vmem:[%s3 + $0xa8] sm:$0xf]
      %v2983 = vld [vmem:[%s3 + $0xac] sm:$0xf]
      %v2984 = vld [vmem:[%s3 + $0xb0] sm:$0xf]
      %v2985 = vld [vmem:[%s3 + $0xb4] sm:$0xf]
      %v2986 = vld [vmem:[%s3 + $0xb8] sm:$0xf]
      %v2987 = vld [vmem:[%s3 + $0xbc] sm:$0xf]
      %v2988 = vld [vmem:[%s3 + $0xc0] sm:$0xf]
      %v2989 = vld [vmem:[%s3 + $0xc4] sm:$0xf]
      %v2990 = vld [vmem:[%s3 + $0xc8] sm:$0xf]
      %v2991 = vld [vmem:[%s3 + $0xcc] sm:$0xf]
      %v2992 = vld [vmem:[%s3 + $0xd0] sm:$0xf]
      %v2993 = vld [vmem:[%s3 + $0xd4] sm:$0xf]
      %v2994 = vld [vmem:[%s3 + $0xd8] sm:$0xf]
      %v2995 = vld [vmem:[%s3 + $0xdc] sm:$0xf]
      %v2996 = vld [vmem:[%s3 + $0xe0] sm:$0xf]
      %v2997 = vld [vmem:[%s3 + $0xe4] sm:$0xf]
      %v2998 = vld [vmem:[%s3 + $0xe8] sm:$0xf]
      %v2999 = vld [vmem:[%s3 + $0xec] sm:$0xf]
      %v3000 = vld [vmem:[%s3 + $0xf0] sm:$0xf]
      %v3001 = vld [vmem:[%s3 + $0xf4] sm:$0xf]
      %v3002 = vld [vmem:[%s3 + $0xf8] sm:$0xf]
      %v3003 = vld [vmem:[%s3 + $0xfc] sm:$0xf]
      %v3068 = vunpack.c.l.b16 %v2940
      %v3069 = vunpack.c.l.b16 %v2941
      %v3070 = vunpack.c.l.b16 %v2942
      %v3071 = vunpack.c.l.b16 %v2943
      %v3072 = vunpack.c.l.b16 %v2944
      %v3073 = vunpack.c.l.b16 %v2945
      %v3074 = vunpack.c.l.b16 %v2946
      %v3075 = vunpack.c.l.b16 %v2947
      %v3076 = vunpack.c.l.b16 %v2948
      %v3077 = vunpack.c.l.b16 %v2949
      %v3078 = vunpack.c.l.b16 %v2950
      %v3079 = vunpack.c.l.b16 %v2951
      %v3080 = vunpack.c.l.b16 %v2952
      %v3081 = vunpack.c.l.b16 %v2953
      %v3082 = vunpack.c.l.b16 %v2954
      %v3083 = vunpack.c.l.b16 %v2955
      %v3084 = vunpack.c.l.b16 %v2956
      %v3085 = vunpack.c.l.b16 %v2957
      %v3086 = vunpack.c.l.b16 %v2958
      %v3087 = vunpack.c.l.b16 %v2959
      %v3088 = vunpack.c.l.b16 %v2960
      %v3089 = vunpack.c.l.b16 %v2961
      %v3090 = vunpack.c.l.b16 %v2962
      %v3091 = vunpack.c.l.b16 %v2963
      %v3092 = vunpack.c.l.b16 %v2964
      %v3093 = vunpack.c.l.b16 %v2965
      %v3094 = vunpack.c.l.b16 %v2966
      %v3095 = vunpack.c.l.b16 %v2967
      %v3096 = vunpack.c.l.b16 %v2968
      %v3097 = vunpack.c.l.b16 %v2969
      %v3098 = vunpack.c.l.b16 %v2970
      %v3099 = vunpack.c.l.b16 %v2971
      %v3100 = vunpack.c.l.b16 %v2972
      %v3101 = vunpack.c.l.b16 %v2973
      %v3102 = vunpack.c.l.b16 %v2974
      %v3103 = vunpack.c.l.b16 %v2975
      %v3104 = vunpack.c.l.b16 %v2976
      %v3105 = vunpack.c.l.b16 %v2977
      %v3106 = vunpack.c.l.b16 %v2978
      %v3107 = vunpack.c.l.b16 %v2979
      %v3108 = vunpack.c.l.b16 %v2980
      %v3109 = vunpack.c.l.b16 %v2981
      %v3110 = vunpack.c.l.b16 %v2982
      %v3111 = vunpack.c.l.b16 %v2983
      %v3112 = vunpack.c.l.b16 %v2984
      %v3113 = vunpack.c.l.b16 %v2985
      %v3114 = vunpack.c.l.b16 %v2986
      %v3115 = vunpack.c.l.b16 %v2987
      %v3116 = vunpack.c.l.b16 %v2988
      %v3117 = vunpack.c.l.b16 %v2989
      %v3118 = vunpack.c.l.b16 %v2990
      %v3119 = vunpack.c.l.b16 %v2991
      %v3120 = vunpack.c.l.b16 %v2992
      %v3121 = vunpack.c.l.b16 %v2993
      %v3122 = vunpack.c.l.b16 %v2994
      %v3123 = vunpack.c.l.b16 %v2995
      %v3124 = vunpack.c.l.b16 %v2996
      %v3125 = vunpack.c.l.b16 %v2997
      %v3126 = vunpack.c.l.b16 %v2998
      %v3127 = vunpack.c.l.b16 %v2999
      %v3128 = vunpack.c.l.b16 %v3000
      %v3129 = vunpack.c.l.b16 %v3001
      %v3130 = vunpack.c.l.b16 %v3002
      %v3131 = vunpack.c.l.b16 %v3003
      %v3132 = vpack.c.b16 %v3069, %v3068
      %v3133 = vpack.c.b16 %v3071, %v3070
      %v3134 = vpack.c.b16 %v3073, %v3072
      %v3135 = vpack.c.b16 %v3075, %v3074
      %v3136 = vpack.c.b16 %v3077, %v3076
      %v3137 = vpack.c.b16 %v3079, %v3078
      %v3138 = vpack.c.b16 %v3081, %v3080
      %v3139 = vpack.c.b16 %v3083, %v3082
      %v3140 = vpack.c.b16 %v3085, %v3084
      %v3141 = vpack.c.b16 %v3087, %v3086
      %v3142 = vpack.c.b16 %v3089, %v3088
      %v3143 = vpack.c.b16 %v3091, %v3090
      %v3144 = vpack.c.b16 %v3093, %v3092
      %v3145 = vpack.c.b16 %v3095, %v3094
      %v3146 = vpack.c.b16 %v3097, %v3096
      %v3147 = vpack.c.b16 %v3099, %v3098
      %v3148 = vpack.c.b16 %v3101, %v3100
      %v3149 = vpack.c.b16 %v3103, %v3102
      %v3150 = vpack.c.b16 %v3105, %v3104
      %v3151 = vpack.c.b16 %v3107, %v3106
      %v3152 = vpack.c.b16 %v3109, %v3108
      %v3153 = vpack.c.b16 %v3111, %v3110
      %v3154 = vpack.c.b16 %v3113, %v3112
      %v3155 = vpack.c.b16 %v3115, %v3114
      %v3156 = vpack.c.b16 %v3117, %v3116
      %v3157 = vpack.c.b16 %v3119, %v3118
      %v3158 = vpack.c.b16 %v3121, %v3120
      %v3159 = vpack.c.b16 %v3123, %v3122
      %v3160 = vpack.c.b16 %v3125, %v3124
      %v3161 = vpack.c.b16 %v3127, %v3126
      %v3162 = vpack.c.b16 %v3129, %v3128
      %v3163 = vpack.c.b16 %v3131, %v3130
      %3196 = vmatpush.bf16.msra.mxu0 %v3139
      %3197 = vmatpush.bf16.msra.mxu0 %v3138
      %3198 = vmatpush.bf16.msra.mxu0 %v3137
      %3199 = vmatpush.bf16.msra.mxu0 %v3136
      %3200 = vmatpush.bf16.msra.mxu0 %v3135
      %3201 = vmatpush.bf16.msra.mxu0 %v3134
      %3202 = vmatpush.bf16.msra.mxu0 %v3133
      %3203 = vmatpush.bf16.msra.mxu0 %v3132
      %3204 = vmatmul.bf16.gmra.mxu0 %v2908
      %v3205 = vpop.f32.mrf.mxu0
      %v3206 = vadd.f32 0.0, %v3205
      %v3207 = vpop.f32.mrf.mxu0
      %v3208 = vadd.f32 0.0, %v3207
      %3209 = vmatmul.bf16.gmra.mxu0 %v2912
      %v3210 = vpop.f32.mrf.mxu0
      %v3211 = vadd.f32 0.0, %v3210
      %v3212 = vpop.f32.mrf.mxu0
      %v3213 = vadd.f32 0.0, %v3212
      %3214 = vmatmul.bf16.gmra.mxu0 %v2916
      %v3215 = vpop.f32.mrf.mxu0
      %v3216 = vadd.f32 0.0, %v3215
      %v3217 = vpop.f32.mrf.mxu0
      %v3218 = vadd.f32 0.0, %v3217
      %3219 = vmatmul.bf16.gmra.mxu0 %v2920
      %v3220 = vpop.f32.mrf.mxu0
      %v3221 = vadd.f32 0.0, %v3220
      %v3222 = vpop.f32.mrf.mxu0
      %v3223 = vadd.f32 0.0, %v3222
      %3224 = vmatmul.bf16.gmra.mxu0 %v2924
      %v3225 = vpop.f32.mrf.mxu0
      %v3226 = vadd.f32 0.0, %v3225
      %v3227 = vpop.f32.mrf.mxu0
      %v3228 = vadd.f32 0.0, %v3227
      %3229 = vmatmul.bf16.gmra.mxu0 %v2928
      %v3230 = vpop.f32.mrf.mxu0
      %v3231 = vadd.f32 0.0, %v3230
      %v3232 = vpop.f32.mrf.mxu0
      %v3233 = vadd.f32 0.0, %v3232
      %3234 = vmatmul.bf16.gmra.mxu0 %v2932
      %v3235 = vpop.f32.mrf.mxu0
      %v3236 = vadd.f32 0.0, %v3235
      %v3237 = vpop.f32.mrf.mxu0
      %v3238 = vadd.f32 0.0, %v3237
      %3239 = vmatmul.bf16.gmra.mxu0 %v2936
      %v3240 = vpop.f32.mrf.mxu0
      %v3241 = vadd.f32 0.0, %v3240
      %v3242 = vpop.f32.mrf.mxu0
      %v3243 = vadd.f32 0.0, %v3242
      %3244 = vdwg.mxu0
      %3245 = vmatpush.bf16.msra.mxu0 %v3147
      %3246 = vmatpush.bf16.msra.mxu0 %v3146
      %3247 = vmatpush.bf16.msra.mxu0 %v3145
      %3248 = vmatpush.bf16.msra.mxu0 %v3144
      %3249 = vmatpush.bf16.msra.mxu0 %v3143
      %3250 = vmatpush.bf16.msra.mxu0 %v3142
      %3251 = vmatpush.bf16.msra.mxu0 %v3141
      %3252 = vmatpush.bf16.msra.mxu0 %v3140
      %3253 = vmatmul.bf16.gmra.mxu0 %v2909
      %v3254 = vpop.f32.mrf.mxu0
      %v3255 = vadd.f32 %v3206, %v3254
      %v3256 = vpop.f32.mrf.mxu0
      %v3257 = vadd.f32 %v3208, %v3256
      %3258 = vmatmul.bf16.gmra.mxu0 %v2913
      %v3259 = vpop.f32.mrf.mxu0
      %v3260 = vadd.f32 %v3211, %v3259
      %v3261 = vpop.f32.mrf.mxu0
      %v3262 = vadd.f32 %v3213, %v3261
      %3263 = vmatmul.bf16.gmra.mxu0 %v2917
      %v3264 = vpop.f32.mrf.mxu0
      %v3265 = vadd.f32 %v3216, %v3264
      %v3266 = vpop.f32.mrf.mxu0
      %v3267 = vadd.f32 %v3218, %v3266
      %3268 = vmatmul.bf16.gmra.mxu0 %v2921
      %v3269 = vpop.f32.mrf.mxu0
      %v3270 = vadd.f32 %v3221, %v3269
      %v3271 = vpop.f32.mrf.mxu0
      %v3272 = vadd.f32 %v3223, %v3271
      %3273 = vmatmul.bf16.gmra.mxu0 %v2925
      %v3274 = vpop.f32.mrf.mxu0
      %v3275 = vadd.f32 %v3226, %v3274
      %v3276 = vpop.f32.mrf.mxu0
      %v3277 = vadd.f32 %v3228, %v3276
      %3278 = vmatmul.bf16.gmra.mxu0 %v2929
      %v3279 = vpop.f32.mrf.mxu0
      %v3280 = vadd.f32 %v3231, %v3279
      %v3281 = vpop.f32.mrf.mxu0
      %v3282 = vadd.f32 %v3233, %v3281
      %3283 = vmatmul.bf16.gmra.mxu0 %v2933
      %v3284 = vpop.f32.mrf.mxu0
      %v3285 = vadd.f32 %v3236, %v3284
      %v3286 = vpop.f32.mrf.mxu0
      %v3287 = vadd.f32 %v3238, %v3286
      %3288 = vmatmul.bf16.gmra.mxu0 %v2937
      %v3289 = vpop.f32.mrf.mxu0
      %v3290 = vadd.f32 %v3241, %v3289
      %v3291 = vpop.f32.mrf.mxu0
      %v3292 = vadd.f32 %v3243, %v3291
      %3293 = vdwg.mxu0
      %3294 = vmatpush.bf16.msra.mxu0 %v3155
      %3295 = vmatpush.bf16.msra.mxu0 %v3154
      %3296 = vmatpush.bf16.msra.mxu0 %v3153
      %3297 = vmatpush.bf16.msra.mxu0 %v3152
      %3298 = vmatpush.bf16.msra.mxu0 %v3151
      %3299 = vmatpush.bf16.msra.mxu0 %v3150
      %3300 = vmatpush.bf16.msra.mxu0 %v3149
      %3301 = vmatpush.bf16.msra.mxu0 %v3148
      %3302 = vmatmul.bf16.gmra.mxu0 %v2910
      %v3303 = vpop.f32.mrf.mxu0
      %v3304 = vadd.f32 %v3255, %v3303
      %v3305 = vpop.f32.mrf.mxu0
      %v3306 = vadd.f32 %v3257, %v3305
      %3307 = vmatmul.bf16.gmra.mxu0 %v2914
      %v3308 = vpop.f32.mrf.mxu0
      %v3309 = vadd.f32 %v3260, %v3308
      %v3310 = vpop.f32.mrf.mxu0
      %v3311 = vadd.f32 %v3262, %v3310
      %3312 = vmatmul.bf16.gmra.mxu0 %v2918
      %v3313 = vpop.f32.mrf.mxu0
      %v3314 = vadd.f32 %v3265, %v3313
      %v3315 = vpop.f32.mrf.mxu0
      %v3316 = vadd.f32 %v3267, %v3315
      %3317 = vmatmul.bf16.gmra.mxu0 %v2922
      %v3318 = vpop.f32.mrf.mxu0
      %v3319 = vadd.f32 %v3270, %v3318
      %v3320 = vpop.f32.mrf.mxu0
      %v3321 = vadd.f32 %v3272, %v3320
      %3322 = vmatmul.bf16.gmra.mxu0 %v2926
      %v3323 = vpop.f32.mrf.mxu0
      %v3324 = vadd.f32 %v3275, %v3323
      %v3325 = vpop.f32.mrf.mxu0
      %v3326 = vadd.f32 %v3277, %v3325
      %3327 = vmatmul.bf16.gmra.mxu0 %v2930
      %v3328 = vpop.f32.mrf.mxu0
      %v3329 = vadd.f32 %v3280, %v3328
      %v3330 = vpop.f32.mrf.mxu0
      %v3331 = vadd.f32 %v3282, %v3330
      %3332 = vmatmul.bf16.gmra.mxu0 %v2934
      %v3333 = vpop.f32.mrf.mxu0
      %v3334 = vadd.f32 %v3285, %v3333
      %v3335 = vpop.f32.mrf.mxu0
      %v3336 = vadd.f32 %v3287, %v3335
      %3337 = vmatmul.bf16.gmra.mxu0 %v2938
      %v3338 = vpop.f32.mrf.mxu0
      %v3339 = vadd.f32 %v3290, %v3338
      %v3340 = vpop.f32.mrf.mxu0
      %v3341 = vadd.f32 %v3292, %v3340
      %3342 = vdwg.mxu0
      %3343 = vmatpush.bf16.msra.mxu0 %v3163
      %3344 = vmatpush.bf16.msra.mxu0 %v3162
      %3345 = vmatpush.bf16.msra.mxu0 %v3161
      %3346 = vmatpush.bf16.msra.mxu0 %v3160
      %3347 = vmatpush.bf16.msra.mxu0 %v3159
      %3348 = vmatpush.bf16.msra.mxu0 %v3158
      %3349 = vmatpush.bf16.msra.mxu0 %v3157
      %3350 = vmatpush.bf16.msra.mxu0 %v3156
      %3351 = vmatmul.bf16.gmra.mxu0 %v2911
      %v3352 = vpop.f32.mrf.mxu0
      %v3353 = vadd.f32 %v3304, %v3352
      %v3354 = vpop.f32.mrf.mxu0
      %v3355 = vadd.f32 %v3306, %v3354
      %3356 = vmatmul.bf16.gmra.mxu0 %v2915
      %v3357 = vpop.f32.mrf.mxu0
      %v3358 = vadd.f32 %v3309, %v3357
      %v3359 = vpop.f32.mrf.mxu0
      %v3360 = vadd.f32 %v3311, %v3359
      %3361 = vmatmul.bf16.gmra.mxu0 %v2919
      %v3362 = vpop.f32.mrf.mxu0
      %v3363 = vadd.f32 %v3314, %v3362
      %v3364 = vpop.f32.mrf.mxu0
      %v3365 = vadd.f32 %v3316, %v3364
      %3366 = vmatmul.bf16.gmra.mxu0 %v2923
      %v3367 = vpop.f32.mrf.mxu0
      %v3368 = vadd.f32 %v3319, %v3367
      %v3369 = vpop.f32.mrf.mxu0
      %v3370 = vadd.f32 %v3321, %v3369
      %3371 = vmatmul.bf16.gmra.mxu0 %v2927
      %v3372 = vpop.f32.mrf.mxu0
      %v3373 = vadd.f32 %v3324, %v3372
      %v3374 = vpop.f32.mrf.mxu0
      %v3375 = vadd.f32 %v3326, %v3374
      %3376 = vmatmul.bf16.gmra.mxu0 %v2931
      %v3377 = vpop.f32.mrf.mxu0
      %v3378 = vadd.f32 %v3329, %v3377
      %v3379 = vpop.f32.mrf.mxu0
      %v3380 = vadd.f32 %v3331, %v3379
      %3381 = vmatmul.bf16.gmra.mxu0 %v2935
      %v3382 = vpop.f32.mrf.mxu0
      %v3383 = vadd.f32 %v3334, %v3382
      %v3384 = vpop.f32.mrf.mxu0
      %v3385 = vadd.f32 %v3336, %v3384
      %3386 = vmatmul.bf16.gmra.mxu0 %v2939
      %v3387 = vpop.f32.mrf.mxu0
      %v3388 = vadd.f32 %v3339, %v3387
      %v3389 = vpop.f32.mrf.mxu0
      %v3390 = vadd.f32 %v3341, %v3389
      %3391 = vdwg.mxu0
      %v3392 = vadd.f32 %v3353, %v3355
      %v3393 = vrot.slane %v3392, 4
      %v3394 = vadd.f32 %v3392, %v3393
      %v3395 = vrot.slane %v3394, 2
      %v3396 = vadd.f32 %v3394, %v3395
      %v3397 = vrot.slane %v3396, 1
      %v3398 = vadd.f32 %v3396, %v3397
      %v3399 = vadd.f32 %v3358, %v3360
      %v3400 = vrot.slane %v3399, 4
      %v3401 = vadd.f32 %v3399, %v3400
      %v3402 = vrot.slane %v3401, 2
      %v3403 = vadd.f32 %v3401, %v3402
      %v3404 = vrot.slane %v3403, 1
      %v3405 = vadd.f32 %v3403, %v3404
      %v3406 = vadd.f32 %v3363, %v3365
      %v3407 = vrot.slane %v3406, 4
      %v3408 = vadd.f32 %v3406, %v3407
      %v3409 = vrot.slane %v3408, 2
      %v3410 = vadd.f32 %v3408, %v3409
      %v3411 = vrot.slane %v3410, 1
      %v3412 = vadd.f32 %v3410, %v3411
      %v3413 = vadd.f32 %v3368, %v3370
      %v3414 = vrot.slane %v3413, 4
      %v3415 = vadd.f32 %v3413, %v3414
      %v3416 = vrot.slane %v3415, 2
      %v3417 = vadd.f32 %v3415, %v3416
      %v3418 = vrot.slane %v3417, 1
      %v3419 = vadd.f32 %v3417, %v3418
      %v3420 = vadd.f32 %v3373, %v3375
      %v3421 = vrot.slane %v3420, 4
      %v3422 = vadd.f32 %v3420, %v3421
      %v3423 = vrot.slane %v3422, 2
      %v3424 = vadd.f32 %v3422, %v3423
      %v3425 = vrot.slane %v3424, 1
      %v3426 = vadd.f32 %v3424, %v3425
      %v3427 = vadd.f32 %v3378, %v3380
      %v3428 = vrot.slane %v3427, 4
      %v3429 = vadd.f32 %v3427, %v3428
      %v3430 = vrot.slane %v3429, 2
      %v3431 = vadd.f32 %v3429, %v3430
      %v3432 = vrot.slane %v3431, 1
      %v3433 = vadd.f32 %v3431, %v3432
      %v3434 = vadd.f32 %v3383, %v3385
      %v3435 = vrot.slane %v3434, 4
      %v3436 = vadd.f32 %v3434, %v3435
      %v3437 = vrot.slane %v3436, 2
      %v3438 = vadd.f32 %v3436, %v3437
      %v3439 = vrot.slane %v3438, 1
      %v3440 = vadd.f32 %v3438, %v3439
      %v3441 = vadd.f32 %v3388, %v3390
      %v3442 = vrot.slane %v3441, 4
      %v3443 = vadd.f32 %v3441, %v3442
      %v3444 = vrot.slane %v3443, 2
      %v3445 = vadd.f32 %v3443, %v3444
      %v3446 = vrot.slane %v3445, 1
      %v3447 = vadd.f32 %v3445, %v3446
      %v3448 = vld [vmem:[%s4] sm:$0x1]
      %v3450 = vperm.slane %v3448, 0
      %v3452 = vadd.f32 %v3398, %v3450
      %v3453 = vadd.f32 %v3405, %v3450
      %v3454 = vadd.f32 %v3412, %v3450
      %v3455 = vadd.f32 %v3419, %v3450
      %v3456 = vadd.f32 %v3426, %v3450
      %v3457 = vadd.f32 %v3433, %v3450
      %v3458 = vadd.f32 %v3440, %v3450
      %v3459 = vadd.f32 %v3447, %v3450
      %v3460 = vmax.f32 %v3452, 0.0
      %v3461 = vmax.f32 %v3453, 0.0
      %v3462 = vmax.f32 %v3454, 0.0
      %v3463 = vmax.f32 %v3455, 0.0
      %v3464 = vmax.f32 %v3456, 0.0
      %v3465 = vmax.f32 %v3457, 0.0
      %v3466 = vmax.f32 %v3458, 0.0
      %v3467 = vmax.f32 %v3459, 0.0
      %v3468 = vpack.c.bf16 %v3460, %v3460
      %v3469 = vpack.c.bf16 %v3461, %v3461
      %v3470 = vpack.c.bf16 %v3462, %v3462
      %v3471 = vpack.c.bf16 %v3463, %v3463
      %v3472 = vpack.c.bf16 %v3464, %v3464
      %v3473 = vpack.c.bf16 %v3465, %v3465
      %v3474 = vpack.c.bf16 %v3466, %v3466
      %v3475 = vpack.c.bf16 %v3467, %v3467
      %v3476 = vld [vmem:[%s5] sm:$0xf]
      %v3477 = vld [vmem:[%s5 + $0x4] sm:$0xf]
      %v3478 = vld [vmem:[%s5 + $0x8] sm:$0xf]
      %v3479 = vld [vmem:[%s5 + $0xc] sm:$0xf]
      %v3480 = vld [vmem:[%s5 + $0x10] sm:$0xf]
      %v3481 = vld [vmem:[%s5 + $0x14] sm:$0xf]
      %v3482 = vld [vmem:[%s5 + $0x18] sm:$0xf]
      %v3483 = vld [vmem:[%s5 + $0x1c] sm:$0xf]
      %v3484 = vld [vmem:[%s5 + $0x20] sm:$0xf]
      %v3485 = vld [vmem:[%s5 + $0x24] sm:$0xf]
      %v3486 = vld [vmem:[%s5 + $0x28] sm:$0xf]
      %v3487 = vld [vmem:[%s5 + $0x2c] sm:$0xf]
      %v3488 = vld [vmem:[%s5 + $0x30] sm:$0xf]
      %v3489 = vld [vmem:[%s5 + $0x34] sm:$0xf]
      %v3490 = vld [vmem:[%s5 + $0x38] sm:$0xf]
      %v3491 = vld [vmem:[%s5 + $0x3c] sm:$0xf]
      %v3492 = vld [vmem:[%s6] sm:$0x1]
      %v3494 = vperm.slane %v3492, 0
      %v3504 = vunpack.c.l.b16 %v3468
      %v3505 = vunpack.c.l.b16 %v3469
      %v3506 = vunpack.c.l.b16 %v3470
      %v3507 = vunpack.c.l.b16 %v3471
      %v3508 = vunpack.c.l.b16 %v3472
      %v3509 = vunpack.c.l.b16 %v3473
      %v3510 = vunpack.c.l.b16 %v3474
      %v3511 = vunpack.c.l.b16 %v3475
      %v3512 = vrot.slane %v3505, 7
      %vm3513 = vcmask 1041409
      %v3514 = vsel %vm3513, %v3512, %v3504
      %v3515 = vrot.slane %v3506, 6
      %vm3516 = vcmask 1042434
      %v3517 = vsel %vm3516, %v3515, %v3514
      %v3518 = vrot.slane %v3507, 5
      %vm3519 = vcmask 1043459
      %v3520 = vsel %vm3519, %v3518, %v3517
      %v3521 = vrot.slane %v3508, 4
      %vm3522 = vcmask 1044484
      %v3523 = vsel %vm3522, %v3521, %v3520
      %v3524 = vrot.slane %v3509, 3
      %vm3525 = vcmask 1045509
      %v3526 = vsel %vm3525, %v3524, %v3523
      %v3527 = vrot.slane %v3510, 2
      %vm3528 = vcmask 1046534
      %v3529 = vsel %vm3528, %v3527, %v3526
      %v3530 = vrot.slane %v3511, 1
      %vm3531 = vcmask 1047559
      %v3532 = vsel %vm3531, %v3530, %v3529
      %v3533 = vpack.c.b16 %v3532, %v3532
      %v3551 = vunpack.c.l.b16 %v3476
      %v3552 = vunpack.c.l.b16 %v3477
      %v3553 = vunpack.c.l.b16 %v3478
      %v3554 = vunpack.c.l.b16 %v3479
      %v3555 = vunpack.c.l.b16 %v3480
      %v3556 = vunpack.c.l.b16 %v3481
      %v3557 = vunpack.c.l.b16 %v3482
      %v3558 = vunpack.c.l.b16 %v3483
      %v3559 = vunpack.c.l.b16 %v3484
      %v3560 = vunpack.c.l.b16 %v3485
      %v3561 = vunpack.c.l.b16 %v3486
      %v3562 = vunpack.c.l.b16 %v3487
      %v3563 = vunpack.c.l.b16 %v3488
      %v3564 = vunpack.c.l.b16 %v3489
      %v3565 = vunpack.c.l.b16 %v3490
      %v3566 = vunpack.c.l.b16 %v3491
      %v3567 = vpack.c.b16 %v3552, %v3551
      %v3568 = vpack.c.b16 %v3554, %v3553
      %v3569 = vpack.c.b16 %v3556, %v3555
      %v3570 = vpack.c.b16 %v3558, %v3557
      %v3571 = vpack.c.b16 %v3560, %v3559
      %v3572 = vpack.c.b16 %v3562, %v3561
      %v3573 = vpack.c.b16 %v3564, %v3563
      %v3574 = vpack.c.b16 %v3566, %v3565
      %3583 = vmatpush.bf16.msra.mxu0 %v3574
      %3584 = vmatpush.bf16.msra.mxu0 %v3573
      %3585 = vmatpush.bf16.msra.mxu0 %v3572
      %3586 = vmatpush.bf16.msra.mxu0 %v3571
      %3587 = vmatpush.bf16.msra.mxu0 %v3570
      %3588 = vmatpush.bf16.msra.mxu0 %v3569
      %3589 = vmatpush.bf16.msra.mxu0 %v3568
      %3590 = vmatpush.bf16.msra.mxu0 %v3567
      %3591 = vmatmul.bf16.gmra.mxu0 %v3533
      %v3592 = vpop.f32.mrf.mxu0
      %v3593 = vadd.f32 %v3494, %v3592
      %v3594 = vpop.f32.mrf.mxu0
      %3595 = vdwg.mxu0
      %3596 = vst [vmem:[%s315] sm:$0xff] %v3593
      %v3605 = vrot.slane %v3461, 7
      %v3606 = vsel %vm3513, %v3605, %v3460
      %v3607 = vrot.slane %v3462, 6
      %v3608 = vsel %vm3516, %v3607, %v3606
      %v3609 = vrot.slane %v3463, 5
      %v3610 = vsel %vm3519, %v3609, %v3608
      %v3611 = vrot.slane %v3464, 4
      %v3612 = vsel %vm3522, %v3611, %v3610
      %v3613 = vrot.slane %v3465, 3
      %v3614 = vsel %vm3525, %v3613, %v3612
      %v3615 = vrot.slane %v3466, 2
      %v3616 = vsel %vm3528, %v3615, %v3614
      %v3617 = vrot.slane %v3467, 1
      %v3618 = vsel %vm3531, %v3617, %v3616
      %3620 = vst [vmem:[%s319] sm:$0xff] %v3618
      %p3621 = scmp.lt.s32.totalorder %s20, 1
      %s3622 = scalar_select %p3621, %s20, 1
      %s3623 = smul.addr %s3622, 8
      %s3624 = scalar_lea.vmem %s7, %s3623
      %p3625 = scmp.lt.s32.totalorder %s20, 1
      %s3626 = scalar_select %p3625, %s20, 1
      %s3627 = smul.addr %s3626, 8
      %s3628 = scalar_lea.vmem %s8, %s3627
      // Predicated region
      $region49: #{simple_net_forward.1} parent=47 // pred_check
        %p3629 = pneg %p190
      $region50: #{simple_net_forward.1} parent=47 // pred_check_branch
        %3631 = sbr.rel (%p3629) target = $region52
      $region51: #{simple_net_forward.1} parent=47 // pred_region
        _
      $region52: #{simple_net_forward.1} parent=47 // pred_fallthru
        _
      // Predicated region
      $region53: #{simple_net_forward.1} parent=47 // pred_check
        %p3632 = pneg %p216
      $region54: #{simple_net_forward.1} parent=47 // pred_check_branch
        %3634 = sbr.rel (%p3632) target = $region56
      $region55: #{simple_net_forward.1} parent=47 // pred_region
        _
      $region56: #{simple_net_forward.1} parent=47 // pred_fallthru
        _
    $region48: #{simple_net_forward.1} parent=5 // pred_fallthru
      _
    %p3635 = scmp.le.s32.totalorder 2, %s15
    // Predicated region
    $region57: #{simple_net_forward.1} parent=5 // pred_check
      %p3636 = pneg %p3635
    $region58: #{simple_net_forward.1} parent=5 // pred_check_branch
      %3638 = sbr.rel (%p3636) target = $region60
    $region59: #{simple_net_forward.1} parent=5 // pred_region
      %s3639 = ssub.s32 %s15, 2
      // Predicated region
      $region61: #{simple_net_forward.1} parent=59 // pred_check
        %p3640 = pneg %p196
      $region62: #{simple_net_forward.1} parent=59 // pred_check_branch
        %3642 = sbr.rel (%p3640) target = $region64
      $region63: #{simple_net_forward.1} parent=59 // pred_region
        %p3643 = scmp.lt.s32.totalorder %s21, 1
        %s3644 = scalar_select %p3643, %s21, 1
        %s3645 = smul.addr %s3644, 8
        %s3646 = scalar_lea.vmem %s7, %s3645
      $region64: #{simple_net_forward.1} parent=59 // pred_fallthru
        _
      // Predicated region
      $region65: #{simple_net_forward.1} parent=59 // pred_check
        %p3647 = pneg %p222
      $region66: #{simple_net_forward.1} parent=59 // pred_check_branch
        %3649 = sbr.rel (%p3647) target = $region68
      $region67: #{simple_net_forward.1} parent=59 // pred_region
        %p3650 = scmp.lt.s32.totalorder %s21, 1
        %s3651 = scalar_select %p3650, %s21, 1
        %s3652 = smul.addr %s3651, 8
        %s3653 = scalar_lea.vmem %s8, %s3652
      $region68: #{simple_net_forward.1} parent=59 // pred_fallthru
        _
    $region60: #{simple_net_forward.1} parent=5 // pred_fallthru
      _
  $region6: #{simple_net_forward.1} parent=0 // loop_footer
    %s19 = sadd.s32 1, %s15
  $region7: #{simple_net_forward.1} parent=0 // loop_footer_branch
    %14 = sbr.rel target = $region3
  $region8: #{simple_net_forward.1} parent=0 // loop_exit
    _

</llo_original>
